<compile_context>
chip_gen: v7x
topology: tpu7x:2x2x1
jax: 0.10.0
libtpu: 0.0.40
codegen_flags: <defaults>
</compile_context>

<pallas_src>
import numpy as np
import jax
import jax.numpy as jnp
from jax import lax
from jax.experimental import pallas as pl
from jax.experimental.pallas import tpu as pltpu

H_IN, W_IN = 20, 10
KH, KW, PAD = 6, 3, 1
CHANNELS = [4, 16, 16, 16, 16]
HS = [20, 17, 14, 11, 8]          # H after each conv layer (H -> H - 3)
LANE = 128


def _roundup(n, m=LANE):
    return ((n + m - 1) // m) * m


# ----------------------------- Pallas kernel --------------------------------
def actor_kernel(x_ref, u_ref,
                 b1_ref, c1_ref, b2_ref, c2_ref, b3_ref, c3_ref, b4_ref, c4_ref,
                 wlin_ref, blin_ref, gsum_ref, gtri_ref, eye_ref,
                 act_ref, probs_ref):
    f32, bf16 = jnp.float32, jnp.bfloat16

    def conv_relu(h, bcat_ref, bias_ref):
        # h: (10, CHpad) f32, real data in the low lanes, zeros in the pad lanes.
        n = h.shape[1]
        z = jnp.zeros((1, n), f32)
        down = jnp.concatenate([z, h[:W_IN - 1, :]], axis=0)     # row w <- h[w-1]
        up = jnp.concatenate([h[1:, :], z], axis=0)              # row w <- h[w+1]
        wide = jnp.concatenate([down, h, up], axis=1).astype(bf16)   # (10, 3*CHpad)
        y = jnp.dot(wide, bcat_ref[...], preferred_element_type=f32)
        return jnp.maximum(y + bias_ref[...], 0.0)

    h = x_ref[...]                          # (10, 128)
    h = conv_relu(h, b1_ref, c1_ref)        # (10, 384)
    h = conv_relu(h, b2_ref, c2_ref)        # (10, 256)
    h = conv_relu(h, b3_ref, c3_ref)        # (10, 256)
    h = conv_relu(h, b4_ref, c4_ref)        # (10, 128)

    # Linear 1280 -> 12: lane-concat flatten (index = w*128 + c*8 + hh) + 1 matmul
    flat = jnp.concatenate([h[w:w + 1, :] for w in range(W_IN)], axis=1)   # (1, 1280)
    logits = jnp.dot(flat.astype(bf16), wlin_ref[...],
                     preferred_element_type=f32) + blin_ref[...]           # (1, 12)

    # Per-group softmax (groups of 4) + inverse-CDF categorical sample.
    # (12,12) group-masked broadcast: per-group max for robustness, exp on EUP,
    # masked lane/sublane reductions on XLU — no MXU matmuls in this tail.
    grp = gsum_ref[...]                                        # 1.0 iff same group
    a = jnp.where(grp > 0.0, logits, -1e30)                    # a[i, j] = logits[j]
    gmax = jnp.max(a, axis=-1, keepdims=True)                  # per-group max (12,1)
    e = jnp.exp(a - gmax)                                      # off-group -> 0
    gs = jnp.sum(e, axis=-1, keepdims=True)                    # per-group sum (12,1)
    inv = pl.reciprocal(gs, approx=True)
    p = jnp.sum(e * eye_ref[...], axis=-1, keepdims=True) * inv     # (12,1) softmax probs
    probs_ref[...] = p
    cdf = jnp.sum(e * gtri_ref[...], axis=-1, keepdims=True) * inv  # within-group cumsum
    ind = (cdf <= u_ref[...]).astype(f32)                      # (12,1)
    counts = jnp.sum(grp * ind, axis=0, keepdims=True)         # (1,12) count, replicated/group
    act_ref[...] = jnp.minimum(counts, 3.0).astype(jnp.int32)
    # TODO(synk): torch Categorical.sample() returns int64; int32 is used here.


# -------------------------- parameter / glue setup (host, ONE TIME) ----------
def build_bcat(w, h_in, h_out, ch_in_pad, ch_out_pad):
    """Concatenated conv operator: rows kw*ch_in_pad + ci*h_in + hi, cols co*h_out + ho."""
    w = np.asarray(w, np.float32)
    c_out, c_in, kh_sz, kw_sz = w.shape
    bcat = np.zeros((kw_sz * ch_in_pad, ch_out_pad), np.float32)
    for kw in range(kw_sz):
        for kh in range(kh_sz):
            for ho in range(h_out):
                hi = ho + kh - PAD
                if 0 <= hi < h_in:
                    rows = kw * ch_in_pad + hi + h_in * np.arange(c_in)
                    cols = ho + h_out * np.arange(c_out)
                    bcat[rows[:, None], cols[None, :]] = w[:, :, kh, kw].T
    return bcat


def build_wlin(wl):
    # flat index w*128 + c*8 + hh must hit WL[j, c*80 + hh*10 + w]
    wl4 = np.asarray(wl, np.float32).reshape(12, 16, 8, 10)      # (j, c, hh, w)
    return np.transpose(wl4, (3, 1, 2, 0)).reshape(1280, 12)


def build_group_masks():
    gsum = np.zeros((12, 12), np.float32)
    gtri = np.zeros((12, 12), np.float32)
    for i in range(12):
        for j in range(12):
            if i // 4 == j // 4:
                gsum[i, j] = 1.0
                if j % 4 <= i % 4:
                    gtri[i, j] = 1.0
    return gsum, gtri, np.eye(12, dtype=np.float32)


def build_actor_constants(params):
    """Fold conv/linear weights into MXU-ready operator matrices; call once, reuse."""
    consts = []
    for li, (w, b) in enumerate(params["convs"]):
        h_in, h_out = HS[li], HS[li + 1]
        c_in, c_out = CHANNELS[li], CHANNELS[li + 1]
        ch_in_pad, ch_out_pad = _roundup(c_in * h_in), _roundup(c_out * h_out)
        bcat = build_bcat(w, h_in, h_out, ch_in_pad, ch_out_pad)
        bias = np.zeros((1, ch_out_pad), np.float32)
        bias[0, :c_out * h_out] = np.repeat(np.asarray(b, np.float32), h_out)
        consts += [jnp.asarray(bcat, jnp.bfloat16), jnp.asarray(bias)]
    wl, bl = params["linear"]
    consts += [jnp.asarray(build_wlin(wl), jnp.bfloat16),
               jnp.asarray(np.asarray(bl, np.float32)[None, :])]
    gsum, gtri, eye = build_group_masks()
    consts += [jnp.asarray(gsum), jnp.asarray(gtri), jnp.asarray(eye)]
    return tuple(jax.device_put(c) for c in consts)


# ------------------------------ jitted wrapper -------------------------------
_VMEM = pl.BlockSpec(memory_space=pltpu.MemorySpace.VMEM)

_ACTOR_CALL = pl.pallas_call(
    actor_kernel,
    out_shape=(jax.ShapeDtypeStruct((1, 12), jnp.int32),
               jax.ShapeDtypeStruct((12, 1), jnp.float32)),
    in_specs=[_VMEM] * 15,
    out_specs=(_VMEM, _VMEM),
)


@jax.jit
def actor_forward(x_nchw, sample_key, consts):
    # (1,4,20,10) NCHW -> transposed (W, C*H) = (10, 80), lane-padded to (10, 128)
    ch0 = CHANNELS[0] * HS[0]
    x0t = jnp.transpose(x_nchw.reshape(ch0, W_IN))
    x0t = jnp.pad(x0t, ((0, 0), (0, _roundup(ch0) - ch0)))
    u = jax.random.uniform(sample_key, (3,), jnp.float32)
    u_col = jnp.repeat(u, 4)[:, None]                 # one uniform per group (12, 1)

    acts_full, p_col = _ACTOR_CALL(x0t, u_col, *consts)
    actions = acts_full[:, ::4]                       # (1, 3)
    probs = p_col.reshape(1, 3, 4)
    return actions, probs


# ----------------------------- pure-JAX reference ----------------------------
def reference_probs(x, params):
    h = x
    for (w, b) in params["convs"]:
        h = lax.conv_general_dilated(h, w, (1, 1), ((PAD, PAD), (PAD, PAD)),
                                     dimension_numbers=("NCHW", "OIHW", "NCHW"))
        h = jnp.maximum(h + b[None, :, None, None], 0.0)
    wl, bl = params["linear"]
    flat = h.reshape(1, 1, 1280)
    logits = (flat @ wl.T + bl).reshape(1, 3, 4)
    return jax.nn.softmax(logits, axis=-1)


if __name__ == "__main__":
    key = jax.random.PRNGKey(0)
    k_in, k_sample, *k_params = jax.random.split(key, 12)

    def init_conv(k, c_out, c_in):
        kw_, kb_ = jax.random.split(k)
        fan_in = c_in * KH * KW
        w = jax.random.normal(kw_, (c_out, c_in, KH, KW), jnp.float32) / np.sqrt(fan_in)
        b = 0.01 * jax.random.normal(kb_, (c_out,), jnp.float32)
        return w, b

    convs = [init_conv(k_params[i], CHANNELS[i + 1], CHANNELS[i]) for i in range(4)]
    kwl, kbl = jax.random.split(k_params[4])
    wl = jax.random.normal(kwl, (12, 1280), jnp.float32) / np.sqrt(1280.0)
    bl = 0.01 * jax.random.normal(kbl, (12,), jnp.float32)
    params = {"convs": convs, "linear": (wl, bl)}

    # Shapes implied by the module: Linear(1280) <=> 16 * 8 * 10 => H=20, W=10
    x = jax.random.normal(k_in, (1, CHANNELS[0], H_IN, W_IN), jnp.float32)

    consts = build_actor_constants(params)            # built once, reused every call
    actions, probs = actor_forward(x, k_sample, consts)
    actions = jax.block_until_ready(actions)
    probs = jax.block_until_ready(probs)

    ref = reference_probs(x, params)
    np.testing.assert_allclose(np.asarray(probs), np.asarray(ref), atol=5e-2, rtol=0)
    assert actions.shape == (1, 3) and actions.dtype == jnp.int32
    assert bool(jnp.all((actions >= 0) & (actions <= 3)))
    print("KERNEL_OK")
</pallas_src>

<mosaic_0001>
module attributes {stable_mosaic.version = 11 : i64} {
  func.func @actor_kernel(%arg0: memref<10x128xf32, #tpu.memory_space<vmem>>, %arg1: memref<12x1xf32, #tpu.memory_space<vmem>>, %arg2: memref<384x384xbf16, #tpu.memory_space<vmem>>, %arg3: memref<1x384xf32, #tpu.memory_space<vmem>>, %arg4: memref<1152x256xbf16, #tpu.memory_space<vmem>>, %arg5: memref<1x256xf32, #tpu.memory_space<vmem>>, %arg6: memref<768x256xbf16, #tpu.memory_space<vmem>>, %arg7: memref<1x256xf32, #tpu.memory_space<vmem>>, %arg8: memref<768x128xbf16, #tpu.memory_space<vmem>>, %arg9: memref<1x128xf32, #tpu.memory_space<vmem>>, %arg10: memref<1280x12xbf16, #tpu.memory_space<vmem>>, %arg11: memref<1x12xf32, #tpu.memory_space<vmem>>, %arg12: memref<12x12xf32, #tpu.memory_space<vmem>>, %arg13: memref<12x12xf32, #tpu.memory_space<vmem>>, %arg14: memref<12x12xf32, #tpu.memory_space<vmem>>, %arg15: memref<1x12xi32, #tpu.memory_space<vmem>>, %arg16: memref<12x1xf32, #tpu.memory_space<vmem>>) attributes {dimension_semantics = [], scalar_prefetch = 0 : i64, scratch_operands = 0 : i64, tpu.core_type = #tpu.core_type<tc>} {
    %c0 = arith.constant 0 : index
    %c0_0 = arith.constant 0 : index
    %0 = vector.load %arg0[%c0, %c0_0] : memref<10x128xf32, #tpu.memory_space<vmem>>, vector<10x128xf32>
    %cst = arith.constant 0.000000e+00 : f32
    %1 = vector.broadcast %cst : f32 to vector<1x128xf32>
    %2 = vector.extract_strided_slice %0 {offsets = [0, 0], sizes = [9, 128], strides = [1, 1]} : vector<10x128xf32> to vector<9x128xf32>
    %3 = tpu.concatenate %1, %2 in 0 : vector<1x128xf32>, vector<9x128xf32> -> vector<10x128xf32>
    %4 = vector.extract_strided_slice %0 {offsets = [1, 0], sizes = [9, 128], strides = [1, 1]} : vector<10x128xf32> to vector<9x128xf32>
    %5 = tpu.concatenate %4, %1 in 0 : vector<9x128xf32>, vector<1x128xf32> -> vector<10x128xf32>
    %6 = tpu.concatenate %3, %0, %5 in 1 : vector<10x128xf32>, vector<10x128xf32>, vector<10x128xf32> -> vector<10x384xf32>
    %7 = arith.truncf %6 : vector<10x384xf32> to vector<10x384xbf16>
    %c0_1 = arith.constant 0 : index
    %c0_2 = arith.constant 0 : index
    %8 = vector.load %arg2[%c0_1, %c0_2] : memref<384x384xbf16, #tpu.memory_space<vmem>>, vector<384x384xbf16>
    %cst_3 = arith.constant dense<0.000000e+00> : vector<10x384xf32>
    %9 = tpu.matmul %7, %8, %cst_3 {dimension_numbers = #tpu.dot_dimension_numbers<[1], [0], [0], [1], [0, 0, 1, 1], [], []>} : vector<10x384xbf16>, vector<384x384xbf16>, vector<10x384xf32> -> vector<10x384xf32>
    %c0_4 = arith.constant 0 : index
    %c0_5 = arith.constant 0 : index
    %10 = vector.load %arg3[%c0_4, %c0_5] : memref<1x384xf32, #tpu.memory_space<vmem>>, vector<1x384xf32>
    %11 = vector.broadcast %10 : vector<1x384xf32> to vector<10x384xf32>
    %12 = arith.addf %9, %11 : vector<10x384xf32>
    %cst_6 = arith.constant 0.000000e+00 : f32
    %13 = vector.broadcast %cst_6 : f32 to vector<10x384xf32>
    %14 = arith.maximumf %12, %13 : vector<10x384xf32>
    %cst_7 = arith.constant 0.000000e+00 : f32
    %15 = vector.broadcast %cst_7 : f32 to vector<1x384xf32>
    %16 = vector.extract_strided_slice %14 {offsets = [0, 0], sizes = [9, 384], strides = [1, 1]} : vector<10x384xf32> to vector<9x384xf32>
    %17 = tpu.concatenate %15, %16 in 0 : vector<1x384xf32>, vector<9x384xf32> -> vector<10x384xf32>
    %18 = vector.extract_strided_slice %14 {offsets = [1, 0], sizes = [9, 384], strides = [1, 1]} : vector<10x384xf32> to vector<9x384xf32>
    %19 = tpu.concatenate %18, %15 in 0 : vector<9x384xf32>, vector<1x384xf32> -> vector<10x384xf32>
    %20 = tpu.concatenate %17, %14, %19 in 1 : vector<10x384xf32>, vector<10x384xf32>, vector<10x384xf32> -> vector<10x1152xf32>
    %21 = arith.truncf %20 : vector<10x1152xf32> to vector<10x1152xbf16>
    %c0_8 = arith.constant 0 : index
    %c0_9 = arith.constant 0 : index
    %22 = vector.load %arg4[%c0_8, %c0_9] : memref<1152x256xbf16, #tpu.memory_space<vmem>>, vector<1152x256xbf16>
    %cst_10 = arith.constant dense<0.000000e+00> : vector<10x256xf32>
    %23 = tpu.matmul %21, %22, %cst_10 {dimension_numbers = #tpu.dot_dimension_numbers<[1], [0], [0], [1], [0, 0, 1, 1], [], []>} : vector<10x1152xbf16>, vector<1152x256xbf16>, vector<10x256xf32> -> vector<10x256xf32>
    %c0_11 = arith.constant 0 : index
    %c0_12 = arith.constant 0 : index
    %24 = vector.load %arg5[%c0_11, %c0_12] : memref<1x256xf32, #tpu.memory_space<vmem>>, vector<1x256xf32>
    %25 = vector.broadcast %24 : vector<1x256xf32> to vector<10x256xf32>
    %26 = arith.addf %23, %25 : vector<10x256xf32>
    %cst_13 = arith.constant 0.000000e+00 : f32
    %27 = vector.broadcast %cst_13 : f32 to vector<10x256xf32>
    %28 = arith.maximumf %26, %27 : vector<10x256xf32>
    %cst_14 = arith.constant 0.000000e+00 : f32
    %29 = vector.broadcast %cst_14 : f32 to vector<1x256xf32>
    %30 = vector.extract_strided_slice %28 {offsets = [0, 0], sizes = [9, 256], strides = [1, 1]} : vector<10x256xf32> to vector<9x256xf32>
    %31 = tpu.concatenate %29, %30 in 0 : vector<1x256xf32>, vector<9x256xf32> -> vector<10x256xf32>
    %32 = vector.extract_strided_slice %28 {offsets = [1, 0], sizes = [9, 256], strides = [1, 1]} : vector<10x256xf32> to vector<9x256xf32>
    %33 = tpu.concatenate %32, %29 in 0 : vector<9x256xf32>, vector<1x256xf32> -> vector<10x256xf32>
    %34 = tpu.concatenate %31, %28, %33 in 1 : vector<10x256xf32>, vector<10x256xf32>, vector<10x256xf32> -> vector<10x768xf32>
    %35 = arith.truncf %34 : vector<10x768xf32> to vector<10x768xbf16>
    %c0_15 = arith.constant 0 : index
    %c0_16 = arith.constant 0 : index
    %36 = vector.load %arg6[%c0_15, %c0_16] : memref<768x256xbf16, #tpu.memory_space<vmem>>, vector<768x256xbf16>
    %cst_17 = arith.constant dense<0.000000e+00> : vector<10x256xf32>
    %37 = tpu.matmul %35, %36, %cst_17 {dimension_numbers = #tpu.dot_dimension_numbers<[1], [0], [0], [1], [0, 0, 1, 1], [], []>} : vector<10x768xbf16>, vector<768x256xbf16>, vector<10x256xf32> -> vector<10x256xf32>
    %c0_18 = arith.constant 0 : index
    %c0_19 = arith.constant 0 : index
    %38 = vector.load %arg7[%c0_18, %c0_19] : memref<1x256xf32, #tpu.memory_space<vmem>>, vector<1x256xf32>
    %39 = vector.broadcast %38 : vector<1x256xf32> to vector<10x256xf32>
    %40 = arith.addf %37, %39 : vector<10x256xf32>
    %cst_20 = arith.constant 0.000000e+00 : f32
    %41 = vector.broadcast %cst_20 : f32 to vector<10x256xf32>
    %42 = arith.maximumf %40, %41 : vector<10x256xf32>
    %cst_21 = arith.constant 0.000000e+00 : f32
    %43 = vector.broadcast %cst_21 : f32 to vector<1x256xf32>
    %44 = vector.extract_strided_slice %42 {offsets = [0, 0], sizes = [9, 256], strides = [1, 1]} : vector<10x256xf32> to vector<9x256xf32>
    %45 = tpu.concatenate %43, %44 in 0 : vector<1x256xf32>, vector<9x256xf32> -> vector<10x256xf32>
    %46 = vector.extract_strided_slice %42 {offsets = [1, 0], sizes = [9, 256], strides = [1, 1]} : vector<10x256xf32> to vector<9x256xf32>
    %47 = tpu.concatenate %46, %43 in 0 : vector<9x256xf32>, vector<1x256xf32> -> vector<10x256xf32>
    %48 = tpu.concatenate %45, %42, %47 in 1 : vector<10x256xf32>, vector<10x256xf32>, vector<10x256xf32> -> vector<10x768xf32>
    %49 = arith.truncf %48 : vector<10x768xf32> to vector<10x768xbf16>
    %c0_22 = arith.constant 0 : index
    %c0_23 = arith.constant 0 : index
    %50 = vector.load %arg8[%c0_22, %c0_23] : memref<768x128xbf16, #tpu.memory_space<vmem>>, vector<768x128xbf16>
    %cst_24 = arith.constant dense<0.000000e+00> : vector<10x128xf32>
    %51 = tpu.matmul %49, %50, %cst_24 {dimension_numbers = #tpu.dot_dimension_numbers<[1], [0], [0], [1], [0, 0, 1, 1], [], []>} : vector<10x768xbf16>, vector<768x128xbf16>, vector<10x128xf32> -> vector<10x128xf32>
    %c0_25 = arith.constant 0 : index
    %c0_26 = arith.constant 0 : index
    %52 = vector.load %arg9[%c0_25, %c0_26] : memref<1x128xf32, #tpu.memory_space<vmem>>, vector<1x128xf32>
    %53 = vector.broadcast %52 : vector<1x128xf32> to vector<10x128xf32>
    %54 = arith.addf %51, %53 : vector<10x128xf32>
    %cst_27 = arith.constant 0.000000e+00 : f32
    %55 = vector.broadcast %cst_27 : f32 to vector<10x128xf32>
    %56 = arith.maximumf %54, %55 : vector<10x128xf32>
    %57 = vector.extract_strided_slice %56 {offsets = [0, 0], sizes = [1, 128], strides = [1, 1]} : vector<10x128xf32> to vector<1x128xf32>
    %58 = vector.extract_strided_slice %56 {offsets = [1, 0], sizes = [1, 128], strides = [1, 1]} : vector<10x128xf32> to vector<1x128xf32>
    %59 = vector.extract_strided_slice %56 {offsets = [2, 0], sizes = [1, 128], strides = [1, 1]} : vector<10x128xf32> to vector<1x128xf32>
    %60 = vector.extract_strided_slice %56 {offsets = [3, 0], sizes = [1, 128], strides = [1, 1]} : vector<10x128xf32> to vector<1x128xf32>
    %61 = vector.extract_strided_slice %56 {offsets = [4, 0], sizes = [1, 128], strides = [1, 1]} : vector<10x128xf32> to vector<1x128xf32>
    %62 = vector.extract_strided_slice %56 {offsets = [5, 0], sizes = [1, 128], strides = [1, 1]} : vector<10x128xf32> to vector<1x128xf32>
    %63 = vector.extract_strided_slice %56 {offsets = [6, 0], sizes = [1, 128], strides = [1, 1]} : vector<10x128xf32> to vector<1x128xf32>
    %64 = vector.extract_strided_slice %56 {offsets = [7, 0], sizes = [1, 128], strides = [1, 1]} : vector<10x128xf32> to vector<1x128xf32>
    %65 = vector.extract_strided_slice %56 {offsets = [8, 0], sizes = [1, 128], strides = [1, 1]} : vector<10x128xf32> to vector<1x128xf32>
    %66 = vector.extract_strided_slice %56 {offsets = [9, 0], sizes = [1, 128], strides = [1, 1]} : vector<10x128xf32> to vector<1x128xf32>
    %67 = tpu.concatenate %57, %58, %59, %60, %61, %62, %63, %64, %65, %66 in 1 : vector<1x128xf32>, vector<1x128xf32>, vector<1x128xf32>, vector<1x128xf32>, vector<1x128xf32>, vector<1x128xf32>, vector<1x128xf32>, vector<1x128xf32>, vector<1x128xf32>, vector<1x128xf32> -> vector<1x1280xf32>
    %68 = arith.truncf %67 : vector<1x1280xf32> to vector<1x1280xbf16>
    %c0_28 = arith.constant 0 : index
    %c0_29 = arith.constant 0 : index
    %69 = vector.load %arg10[%c0_28, %c0_29] : memref<1280x12xbf16, #tpu.memory_space<vmem>>, vector<1280x12xbf16>
    %cst_30 = arith.constant dense<0.000000e+00> : vector<1x12xf32>
    %70 = tpu.matmul %68, %69, %cst_30 {dimension_numbers = #tpu.dot_dimension_numbers<[1], [0], [0], [1], [0, 0, 1, 1], [], []>} : vector<1x1280xbf16>, vector<1280x12xbf16>, vector<1x12xf32> -> vector<1x12xf32>
    %c0_31 = arith.constant 0 : index
    %c0_32 = arith.constant 0 : index
    %71 = vector.load %arg11[%c0_31, %c0_32] : memref<1x12xf32, #tpu.memory_space<vmem>>, vector<1x12xf32>
    %72 = arith.addf %70, %71 : vector<1x12xf32>
    %c0_33 = arith.constant 0 : index
    %c0_34 = arith.constant 0 : index
    %73 = vector.load %arg12[%c0_33, %c0_34] : memref<12x12xf32, #tpu.memory_space<vmem>>, vector<12x12xf32>
    %cst_35 = arith.constant 0.000000e+00 : f32
    %74 = vector.broadcast %cst_35 : f32 to vector<12x12xf32>
    %75 = arith.cmpf ogt, %73, %74 : vector<12x12xf32>
    %cst_36 = arith.constant -1.000000e+30 : f32
    %76 = vector.shape_cast %72 : vector<1x12xf32> to vector<1x12xf32>
    %77 = vector.broadcast %76 : vector<1x12xf32> to vector<12x12xf32>
    %78 = vector.broadcast %cst_36 : f32 to vector<12x12xf32>
    %79 = arith.select %75, %77, %78 : vector<12x12xi1>, vector<12x12xf32>
    %cst_37 = arith.constant dense<0xFF800000> : vector<12xf32>
    %80 = vector.multi_reduction <maximumf>, %79, %cst_37 [1] : vector<12x12xf32> to vector<12xf32>
    %81 = vector.shape_cast %80 : vector<12xf32> to vector<12x1xf32>
    %82 = vector.broadcast %81 : vector<12x1xf32> to vector<12x12xf32>
    %83 = arith.subf %79, %82 : vector<12x12xf32>
    %84 = math.exp %83 : vector<12x12xf32>
    %cst_38 = arith.constant dense<0.000000e+00> : vector<12xf32>
    %85 = vector.multi_reduction <add>, %84, %cst_38 [1] : vector<12x12xf32> to vector<12xf32>
    %86 = vector.shape_cast %85 : vector<12xf32> to vector<12x1xf32>
    %87 = tpu.reciprocal %86 {approx = true} : vector<12x1xf32> -> vector<12x1xf32>
    %c0_39 = arith.constant 0 : index
    %c0_40 = arith.constant 0 : index
    %88 = vector.load %arg14[%c0_39, %c0_40] : memref<12x12xf32, #tpu.memory_space<vmem>>, vector<12x12xf32>
    %89 = arith.mulf %84, %88 : vector<12x12xf32>
    %cst_41 = arith.constant dense<0.000000e+00> : vector<12xf32>
    %90 = vector.multi_reduction <add>, %89, %cst_41 [1] : vector<12x12xf32> to vector<12xf32>
    %91 = vector.shape_cast %90 : vector<12xf32> to vector<12x1xf32>
    %92 = arith.mulf %91, %87 : vector<12x1xf32>
    %c0_42 = arith.constant 0 : index
    %c0_43 = arith.constant 0 : index
    %93 = vector.load %arg16[%c0_42, %c0_43] : memref<12x1xf32, #tpu.memory_space<vmem>>, vector<12x1xf32>
    tpu.vector_store %arg16[%c0_42, %c0_43], %92 {strides = array<i32>} : memref<12x1xf32, #tpu.memory_space<vmem>>, vector<12x1xf32>,
    %c0_44 = arith.constant 0 : index
    %c0_45 = arith.constant 0 : index
    %94 = vector.load %arg13[%c0_44, %c0_45] : memref<12x12xf32, #tpu.memory_space<vmem>>, vector<12x12xf32>
    %95 = arith.mulf %84, %94 : vector<12x12xf32>
    %cst_46 = arith.constant dense<0.000000e+00> : vector<12xf32>
    %96 = vector.multi_reduction <add>, %95, %cst_46 [1] : vector<12x12xf32> to vector<12xf32>
    %97 = vector.shape_cast %96 : vector<12xf32> to vector<12x1xf32>
    %98 = arith.mulf %97, %87 : vector<12x1xf32>
    %c0_47 = arith.constant 0 : index
    %c0_48 = arith.constant 0 : index
    %99 = vector.load %arg1[%c0_47, %c0_48] : memref<12x1xf32, #tpu.memory_space<vmem>>, vector<12x1xf32>
    %100 = arith.cmpf ole, %98, %99 : vector<12x1xf32>
    %101 = arith.extui %100 : vector<12x1xi1> to vector<12x1xi32>
    %102 = arith.sitofp %101 : vector<12x1xi32> to vector<12x1xf32>
    %103 = vector.broadcast %102 : vector<12x1xf32> to vector<12x12xf32>
    %104 = arith.mulf %73, %103 : vector<12x12xf32>
    %cst_49 = arith.constant dense<0.000000e+00> : vector<12xf32>
    %105 = vector.multi_reduction <add>, %104, %cst_49 [0] : vector<12x12xf32> to vector<12xf32>
    %106 = vector.shape_cast %105 : vector<12xf32> to vector<1x12xf32>
    %cst_50 = arith.constant 3.000000e+00 : f32
    %107 = vector.broadcast %cst_50 : f32 to vector<1x12xf32>
    %108 = arith.minimumf %106, %107 : vector<1x12xf32>
    %109 = arith.fptosi %108 : vector<1x12xf32> to vector<1x12xi32>
    %c0_51 = arith.constant 0 : index
    %c0_52 = arith.constant 0 : index
    %110 = vector.load %arg15[%c0_51, %c0_52] : memref<1x12xi32, #tpu.memory_space<vmem>>, vector<1x12xi32>
    tpu.vector_store %arg15[%c0_51, %c0_52], %109 {strides = array<i32>} : memref<1x12xi32, #tpu.memory_space<vmem>>, vector<1x12xi32>,
    return
  }
}

</mosaic_0001>

<llo_original>
// kernel: actor_forward.1
$region0: #{actor_forward.1}
  #allocation0 [shape = 'u32[]', space=smem, size = 0x4, offset = 0x4, fixed_abs, tag = 'smem constant byte address 0x4 - core index']
  #allocation1 [shape = 'u32[144,128]{1,0:T(1,128)}', space=vmem, size = 0x12000, scoped, tag = 'internal scratch']
  %s0 = inlined_call_operand.vmem [shape: f32[10,128], index: 0, kind: input, shape index: {}]
  %s1 = inlined_call_operand.vmem [shape: f32[12,1], index: 1, kind: input, shape index: {}]
  %s2 = inlined_call_operand.hbm [shape: bf16[384,384], index: 2, kind: input, shape index: {}]
  %s3 = inlined_call_operand.vmem [shape: f32[1,384], index: 3, kind: input, shape index: {}]
  %s4 = inlined_call_operand.hbm [shape: bf16[1152,256], index: 4, kind: input, shape index: {}]
  %s5 = inlined_call_operand.vmem [shape: f32[1,256], index: 5, kind: input, shape index: {}]
  %s6 = inlined_call_operand.vmem [shape: bf16[768,256], index: 6, kind: input, shape index: {}]
  %s7 = inlined_call_operand.hbm [shape: f32[1,256], index: 7, kind: input, shape index: {}]
  %s8 = inlined_call_operand.hbm [shape: bf16[768,128], index: 8, kind: input, shape index: {}]
  %s9 = inlined_call_operand.vmem [shape: f32[1,128], index: 9, kind: input, shape index: {}]
  %s10 = inlined_call_operand.vmem [shape: bf16[1280,12], index: 10, kind: input, shape index: {}]
  %s11 = inlined_call_operand.hbm [shape: f32[1,12], index: 11, kind: input, shape index: {}]
  %s12 = inlined_call_operand.vmem [shape: f32[12,12], index: 12, kind: input, shape index: {}]
  %s13 = inlined_call_operand.vmem [shape: f32[12,12], index: 13, kind: input, shape index: {}]
  %s14 = inlined_call_operand.vmem [shape: f32[12,12], index: 14, kind: input, shape index: {}]
  %s15 = inlined_call_operand.vmem [shape: s32[1,12], index: 15, kind: output, shape index: {0}]
  %s16 = inlined_call_operand.vmem [shape: f32[12,1], index: 16, kind: output, shape index: {1}]
  %17 = xla_tuple %s15, %s16
  %s18 = sld [smem:[#allocation0]]
  $region98: #{actor_forward.1} parent=0
    _
  %s20 = ssub.s32 1, %s18
  %s21 = scalar_select 0, %s20, %s18
  $region1: #{actor_forward.1} parent=0
    #allocation2 [shape = 'u8[294912]{0}', space=vmem, size = 0x48000, scoped, tag = 'input window, operand 2, single buffered']
    #allocation3 [shape = 's32[1]{0}', space=sflag, size = 0x4, scoped, tag = 'scoped memory for actor_forward.1']
    #allocation4 [shape = 'u8[589824]{0}', space=vmem, size = 0x90000, scoped, tag = 'input window, operand 4, single buffered']
    #allocation5 [shape = 's32[1]{0}', space=sflag, size = 0x4, scoped, tag = 'scoped memory for actor_forward.1']
    #allocation6 [shape = 'u8[1024]{0}', space=vmem, size = 0x400, scoped, tag = 'input window, operand 7, single buffered']
    #allocation7 [shape = 'u8[196608]{0}', space=vmem, size = 0x30000, scoped, tag = 'input window, operand 8, single buffered']
    #allocation8 [shape = 's32[1]{0}', space=sflag, size = 0x4, scoped, tag = 'scoped memory for actor_forward.1']
    #allocation9 [shape = 'u8[512]{0}', space=vmem, size = 0x400, scoped, tag = 'input window, operand 11, single buffered']
    %22 = vsyncpa [#allocation3], 0
    %23 = vsyncpa [#allocation5], 0
    %24 = vsyncpa [#allocation8], 0
    // Predicated region
    $region2: #{actor_forward.1} parent=1 // pred_check
      _
    $region3: #{actor_forward.1} parent=1 // pred_check_branch
      %26 = sbr.rel (0) target = $region5
    $region4: #{actor_forward.1} parent=1 // pred_region
      _
    $region5: #{actor_forward.1} parent=1 // pred_fallthru
      _
    // Predicated region
    $region6: #{actor_forward.1} parent=1 // pred_check
      _
    $region7: #{actor_forward.1} parent=1 // pred_check_branch
      %28 = sbr.rel (0) target = $region9
    $region8: #{actor_forward.1} parent=1 // pred_region
      _
    $region9: #{actor_forward.1} parent=1 // pred_fallthru
      _
    // Predicated region
    $region10: #{actor_forward.1} parent=1 // pred_check
      _
    $region11: #{actor_forward.1} parent=1 // pred_check_branch
      %30 = sbr.rel (0) target = $region13
    $region12: #{actor_forward.1} parent=1 // pred_region
      %s32 = ssub.s32 9216, 9216
      %33 = vsyncadd [#allocation3], %s32
      %s34 = sshll.u32 [#allocation2], 4
      %s35 = int_to_ptr.vmem [resolvable:$true] %s34
      %40 = dma.hbm_to_vmem [thread:$0]  %s2, 9216, %s35, [#allocation3], 192, 192, 12
    $region13: #{actor_forward.1} parent=1 // pred_fallthru
      _
    // Predicated region
    $region14: #{actor_forward.1} parent=1 // pred_check
      _
    $region15: #{actor_forward.1} parent=1 // pred_check_branch
      %42 = sbr.rel (0) target = $region17
    $region16: #{actor_forward.1} parent=1 // pred_region
      _
    $region17: #{actor_forward.1} parent=1 // pred_fallthru
      _
    // Predicated region
    $region18: #{actor_forward.1} parent=1 // pred_check
      _
    $region19: #{actor_forward.1} parent=1 // pred_check_branch
      %44 = sbr.rel (0) target = $region21
    $region20: #{actor_forward.1} parent=1 // pred_region
      %s46 = ssub.s32 18432, 18432
      %47 = vsyncadd [#allocation5], %s46
      %s48 = sshll.u32 [#allocation4], 4
      %s49 = int_to_ptr.vmem [resolvable:$true] %s48
      %54 = dma.hbm_to_vmem [thread:$0]  %s4, 18432, %s49, [#allocation5], 128, 128, 8
    $region21: #{actor_forward.1} parent=1 // pred_fallthru
      _
    // Predicated region
    $region22: #{actor_forward.1} parent=1 // pred_check
      _
    $region23: #{actor_forward.1} parent=1 // pred_check_branch
      %56 = sbr.rel (0) target = $region25
    $region24: #{actor_forward.1} parent=1 // pred_region
      _
    $region25: #{actor_forward.1} parent=1 // pred_fallthru
      _
    // Predicated region
    $region26: #{actor_forward.1} parent=1 // pred_check
      _
    $region27: #{actor_forward.1} parent=1 // pred_check_branch
      %58 = sbr.rel (0) target = $region29
    $region28: #{actor_forward.1} parent=1 // pred_region
      _
    $region29: #{actor_forward.1} parent=1 // pred_fallthru
      _
    // Predicated region
    $region30: #{actor_forward.1} parent=1 // pred_check
      _
    $region31: #{actor_forward.1} parent=1 // pred_check_branch
      %60 = sbr.rel (0) target = $region33
    $region32: #{actor_forward.1} parent=1 // pred_region
      %s62 = ssub.s32 32, 32
      %63 = vsyncadd [#allocation5], %s62
      %s65 = sshll.u32 [#allocation6], 4
      %s66 = int_to_ptr.vmem [resolvable:$true] %s65
      %68 = dma.hbm_to_vmem [thread:$0]  %s7, 32, %s66, [#allocation5]
    $region33: #{actor_forward.1} parent=1 // pred_fallthru
      _
    // Predicated region
    $region34: #{actor_forward.1} parent=1 // pred_check
      _
    $region35: #{actor_forward.1} parent=1 // pred_check_branch
      %70 = sbr.rel (0) target = $region37
    $region36: #{actor_forward.1} parent=1 // pred_region
      %s72 = ssub.s32 6144, 6144
      %73 = vsyncadd [#allocation8], %s72
      %s74 = sshll.u32 [#allocation7], 4
      %s75 = int_to_ptr.vmem [resolvable:$true] %s74
      %80 = dma.hbm_to_vmem [thread:$0]  %s8, 6144, %s75, [#allocation8], 64, 64, 4
    $region37: #{actor_forward.1} parent=1 // pred_fallthru
      _
    // Predicated region
    $region38: #{actor_forward.1} parent=1 // pred_check
      _
    $region39: #{actor_forward.1} parent=1 // pred_check_branch
      %82 = sbr.rel (0) target = $region41
    $region40: #{actor_forward.1} parent=1 // pred_region
      _
    $region41: #{actor_forward.1} parent=1 // pred_fallthru
      _
    // Predicated region
    $region42: #{actor_forward.1} parent=1 // pred_check
      _
    $region43: #{actor_forward.1} parent=1 // pred_check_branch
      %84 = sbr.rel (0) target = $region45
    $region44: #{actor_forward.1} parent=1 // pred_region
      _
    $region45: #{actor_forward.1} parent=1 // pred_fallthru
      _
    // Predicated region
    $region46: #{actor_forward.1} parent=1 // pred_check
      _
    $region47: #{actor_forward.1} parent=1 // pred_check_branch
      %86 = sbr.rel (0) target = $region49
    $region48: #{actor_forward.1} parent=1 // pred_region
      %s88 = ssub.s32 16, 16
      %89 = vsyncadd [#allocation8], %s88
      %s91 = sshll.u32 [#allocation9], 4
      %s92 = int_to_ptr.vmem [resolvable:$true] %s91
      %94 = dma.hbm_to_vmem [thread:$0]  %s11, 16, %s92, [#allocation8]
    $region49: #{actor_forward.1} parent=1 // pred_fallthru
      _
    // Predicated region
    $region50: #{actor_forward.1} parent=1 // pred_check
      _
    $region51: #{actor_forward.1} parent=1 // pred_check_branch
      %96 = sbr.rel (0) target = $region53
    $region52: #{actor_forward.1} parent=1 // pred_region
      _
    $region53: #{actor_forward.1} parent=1 // pred_fallthru
      _
    // Predicated region
    $region54: #{actor_forward.1} parent=1 // pred_check
      _
    $region55: #{actor_forward.1} parent=1 // pred_check_branch
      %98 = sbr.rel (0) target = $region57
    $region56: #{actor_forward.1} parent=1 // pred_region
      _
    $region57: #{actor_forward.1} parent=1 // pred_fallthru
      _
    // Predicated region
    $region58: #{actor_forward.1} parent=1 // pred_check
      _
    $region59: #{actor_forward.1} parent=1 // pred_check_branch
      %100 = sbr.rel (0) target = $region61
    $region60: #{actor_forward.1} parent=1 // pred_region
      _
    $region61: #{actor_forward.1} parent=1 // pred_fallthru
      _
    // Predicated region
    $region62: #{actor_forward.1} parent=1 // pred_check
      _
    $region63: #{actor_forward.1} parent=1 // pred_check_branch
      %102 = sbr.rel (0) target = $region65
    $region64: #{actor_forward.1} parent=1 // pred_region
      %103 = dma.done [#allocation3], 9216
    $region65: #{actor_forward.1} parent=1 // pred_fallthru
      _
    // Predicated region
    $region66: #{actor_forward.1} parent=1 // pred_check
      _
    $region67: #{actor_forward.1} parent=1 // pred_check_branch
      %105 = sbr.rel (0) target = $region69
    $region68: #{actor_forward.1} parent=1 // pred_region
      %106 = dma.done [#allocation5], 18432
    $region69: #{actor_forward.1} parent=1 // pred_fallthru
      _
    // Predicated region
    $region70: #{actor_forward.1} parent=1 // pred_check
      _
    $region71: #{actor_forward.1} parent=1 // pred_check_branch
      %108 = sbr.rel (0) target = $region73
    $region72: #{actor_forward.1} parent=1 // pred_region
      %109 = dma.done [#allocation5], 32
    $region73: #{actor_forward.1} parent=1 // pred_fallthru
      _
    // Predicated region
    $region74: #{actor_forward.1} parent=1 // pred_check
      _
    $region75: #{actor_forward.1} parent=1 // pred_check_branch
      %111 = sbr.rel (0) target = $region77
    $region76: #{actor_forward.1} parent=1 // pred_region
      %112 = dma.done [#allocation8], 6144
    $region77: #{actor_forward.1} parent=1 // pred_fallthru
      _
    // Predicated region
    $region78: #{actor_forward.1} parent=1 // pred_check
      _
    $region79: #{actor_forward.1} parent=1 // pred_check_branch
      %114 = sbr.rel (0) target = $region81
    $region80: #{actor_forward.1} parent=1 // pred_region
      %115 = dma.done [#allocation8], 16
    $region81: #{actor_forward.1} parent=1 // pred_fallthru
      _
    %v117 = vld [vmem:[%s0] sm:$0xff]
    %v118 = vld [vmem:[%s0 + $0x8] sm:$0x3]
    %vm121 = vcmask 1040384
    %v122 = vrot.slane %v117, 7
    %v123 = vrot.slane %v118, 7
    %v124 = vsel %vm121, %v122, %v123
    %v127 = vsel %vm121, 0.0, %v122
    %vm128 = vcmask 1046528
    %v129 = vrot.slane %v117, 1
    %v130 = vrot.slane %v118, 1
    %v131 = vsel %vm128, %v129, %v130
    %v134 = vsel %vm121, %v130, 0.0
    %v135 = vpack.c.bf16 %v124, %v127
    %v136 = vpack.c.bf16 %v118, %v117
    %v137 = vpack.c.bf16 %v134, %v131
    %v138 = vld [vmem:[#allocation2] sm:$0xff]
    %v139 = vld [vmem:[#allocation2 + $0x8] sm:$0xf]
    %v140 = vld [vmem:[#allocation2 + $0xc] sm:$0xff]
    %v141 = vld [vmem:[#allocation2 + $0x14] sm:$0xf]
    %v142 = vld [vmem:[#allocation2 + $0x18] sm:$0xff]
    %v143 = vld [vmem:[#allocation2 + $0x20] sm:$0xf]
    %v144 = vld [vmem:[#allocation2 + $0x24] sm:$0xff]
    %v145 = vld [vmem:[#allocation2 + $0x2c] sm:$0xf]
    %v146 = vld [vmem:[#allocation2 + $0x30] sm:$0xff]
    %v147 = vld [vmem:[#allocation2 + $0x38] sm:$0xf]
    %v148 = vld [vmem:[#allocation2 + $0x3c] sm:$0xff]
    %v149 = vld [vmem:[#allocation2 + $0x44] sm:$0xf]
    %v150 = vld [vmem:[#allocation2 + $0x48] sm:$0xff]
    %v151 = vld [vmem:[#allocation2 + $0x50] sm:$0xf]
    %v152 = vld [vmem:[#allocation2 + $0x54] sm:$0xff]
    %v153 = vld [vmem:[#allocation2 + $0x5c] sm:$0xf]
    %v154 = vld [vmem:[#allocation2 + $0x60] sm:$0xff]
    %v155 = vld [vmem:[#allocation2 + $0x68] sm:$0xf]
    %v156 = vld [vmem:[#allocation2 + $0x6c] sm:$0xff]
    %v157 = vld [vmem:[#allocation2 + $0x74] sm:$0xf]
    %v158 = vld [vmem:[#allocation2 + $0x78] sm:$0xff]
    %v159 = vld [vmem:[#allocation2 + $0x80] sm:$0xf]
    %v160 = vld [vmem:[#allocation2 + $0x84] sm:$0xff]
    %v161 = vld [vmem:[#allocation2 + $0x8c] sm:$0xf]
    %v162 = vld [vmem:[#allocation2 + $0x90] sm:$0xff]
    %v163 = vld [vmem:[#allocation2 + $0x98] sm:$0xf]
    %v164 = vld [vmem:[#allocation2 + $0x9c] sm:$0xff]
    %v165 = vld [vmem:[#allocation2 + $0xa4] sm:$0xf]
    %v166 = vld [vmem:[#allocation2 + $0xa8] sm:$0xff]
    %v167 = vld [vmem:[#allocation2 + $0xb0] sm:$0xf]
    %v168 = vld [vmem:[#allocation2 + $0xb4] sm:$0xff]
    %v169 = vld [vmem:[#allocation2 + $0xbc] sm:$0xf]
    %v170 = vld [vmem:[#allocation2 + $0xc0] sm:$0xff]
    %v171 = vld [vmem:[#allocation2 + $0xc8] sm:$0xf]
    %v172 = vld [vmem:[#allocation2 + $0xcc] sm:$0xff]
    %v173 = vld [vmem:[#allocation2 + $0xd4] sm:$0xf]
    %v174 = vld [vmem:[#allocation2 + $0xd8] sm:$0xff]
    %v175 = vld [vmem:[#allocation2 + $0xe0] sm:$0xf]
    %v176 = vld [vmem:[#allocation2 + $0xe4] sm:$0xff]
    %v177 = vld [vmem:[#allocation2 + $0xec] sm:$0xf]
    %v178 = vld [vmem:[#allocation2 + $0xf0] sm:$0xff]
    %v179 = vld [vmem:[#allocation2 + $0xf8] sm:$0xf]
    %v180 = vld [vmem:[#allocation2 + $0xfc] sm:$0xff]
    %v181 = vld [vmem:[#allocation2 + $0x104] sm:$0xf]
    %v182 = vld [vmem:[#allocation2 + $0x108] sm:$0xff]
    %v183 = vld [vmem:[#allocation2 + $0x110] sm:$0xf]
    %v184 = vld [vmem:[#allocation2 + $0x114] sm:$0xff]
    %v185 = vld [vmem:[#allocation2 + $0x11c] sm:$0xf]
    %v186 = vld [vmem:[#allocation2 + $0x120] sm:$0xff]
    %v187 = vld [vmem:[#allocation2 + $0x128] sm:$0xf]
    %v188 = vld [vmem:[#allocation2 + $0x12c] sm:$0xff]
    %v189 = vld [vmem:[#allocation2 + $0x134] sm:$0xf]
    %v190 = vld [vmem:[#allocation2 + $0x138] sm:$0xff]
    %v191 = vld [vmem:[#allocation2 + $0x140] sm:$0xf]
    %v192 = vld [vmem:[#allocation2 + $0x144] sm:$0xff]
    %v193 = vld [vmem:[#allocation2 + $0x14c] sm:$0xf]
    %v194 = vld [vmem:[#allocation2 + $0x150] sm:$0xff]
    %v195 = vld [vmem:[#allocation2 + $0x158] sm:$0xf]
    %v196 = vld [vmem:[#allocation2 + $0x15c] sm:$0xff]
    %v197 = vld [vmem:[#allocation2 + $0x164] sm:$0xf]
    %v198 = vld [vmem:[#allocation2 + $0x168] sm:$0xff]
    %v199 = vld [vmem:[#allocation2 + $0x170] sm:$0xf]
    %v200 = vld [vmem:[#allocation2 + $0x174] sm:$0xff]
    %v201 = vld [vmem:[#allocation2 + $0x17c] sm:$0xf]
    %v202 = vld [vmem:[#allocation2 + $0x180] sm:$0xff]
    %v203 = vld [vmem:[#allocation2 + $0x188] sm:$0xf]
    %v204 = vld [vmem:[#allocation2 + $0x18c] sm:$0xff]
    %v205 = vld [vmem:[#allocation2 + $0x194] sm:$0xf]
    %v206 = vld [vmem:[#allocation2 + $0x198] sm:$0xff]
    %v207 = vld [vmem:[#allocation2 + $0x1a0] sm:$0xf]
    %v208 = vld [vmem:[#allocation2 + $0x1a4] sm:$0xff]
    %v209 = vld [vmem:[#allocation2 + $0x1ac] sm:$0xf]
    %v210 = vld [vmem:[#allocation2 + $0x1b0] sm:$0xff]
    %v211 = vld [vmem:[#allocation2 + $0x1b8] sm:$0xf]
    %v212 = vld [vmem:[#allocation2 + $0x1bc] sm:$0xff]
    %v213 = vld [vmem:[#allocation2 + $0x1c4] sm:$0xf]
    %v214 = vld [vmem:[#allocation2 + $0x1c8] sm:$0xff]
    %v215 = vld [vmem:[#allocation2 + $0x1d0] sm:$0xf]
    %v216 = vld [vmem:[#allocation2 + $0x1d4] sm:$0xff]
    %v217 = vld [vmem:[#allocation2 + $0x1dc] sm:$0xf]
    %v218 = vld [vmem:[#allocation2 + $0x1e0] sm:$0xff]
    %v219 = vld [vmem:[#allocation2 + $0x1e8] sm:$0xf]
    %v220 = vld [vmem:[#allocation2 + $0x1ec] sm:$0xff]
    %v221 = vld [vmem:[#allocation2 + $0x1f4] sm:$0xf]
    %v222 = vld [vmem:[#allocation2 + $0x1f8] sm:$0xff]
    %v223 = vld [vmem:[#allocation2 + $0x200] sm:$0xf]
    %v224 = vld [vmem:[#allocation2 + $0x204] sm:$0xff]
    %v225 = vld [vmem:[#allocation2 + $0x20c] sm:$0xf]
    %v226 = vld [vmem:[#allocation2 + $0x210] sm:$0xff]
    %v227 = vld [vmem:[#allocation2 + $0x218] sm:$0xf]
    %v228 = vld [vmem:[#allocation2 + $0x21c] sm:$0xff]
    %v229 = vld [vmem:[#allocation2 + $0x224] sm:$0xf]
    %v230 = vld [vmem:[#allocation2 + $0x228] sm:$0xff]
    %v231 = vld [vmem:[#allocation2 + $0x230] sm:$0xf]
    %v232 = vld [vmem:[#allocation2 + $0x234] sm:$0xff]
    %v233 = vld [vmem:[#allocation2 + $0x23c] sm:$0xf]
    %v234 = vld [vmem:[%s3] sm:$0x7]
    %v236 = vlaneseq
    %v237 = vshrl.u32 %v236, 7
    %v238 = vsub.s32 0, %v237
    %v239 = vrot.slane %v234, %v238
    %v240 = vlaneseq
    %v241 = vshrl.u32 %v240, 7
    %v242 = vsub.s32 1, %v241
    %v243 = vrot.slane %v234, %v242
    %v244 = vlaneseq
    %v245 = vshrl.u32 %v244, 7
    %v246 = vsub.s32 2, %v245
    %v247 = vrot.slane %v234, %v246
    %v347 = vunpack.c.l.b16 %v138
    %v348 = vunpack.c.h.b16 %v138
    %v349 = vunpack.c.l.b16 %v139
    %v350 = vunpack.c.l.b16 %v140
    %v351 = vunpack.c.h.b16 %v140
    %v352 = vunpack.c.l.b16 %v141
    %v353 = vunpack.c.l.b16 %v142
    %v354 = vunpack.c.h.b16 %v142
    %v355 = vunpack.c.l.b16 %v143
    %v356 = vunpack.c.l.b16 %v144
    %v357 = vunpack.c.h.b16 %v144
    %v358 = vunpack.c.l.b16 %v145
    %v359 = vunpack.c.l.b16 %v146
    %v360 = vunpack.c.h.b16 %v146
    %v361 = vunpack.c.l.b16 %v147
    %v362 = vunpack.c.l.b16 %v148
    %v363 = vunpack.c.h.b16 %v148
    %v364 = vunpack.c.l.b16 %v149
    %v365 = vunpack.c.l.b16 %v150
    %v366 = vunpack.c.h.b16 %v150
    %v367 = vunpack.c.l.b16 %v151
    %v368 = vunpack.c.l.b16 %v152
    %v369 = vunpack.c.h.b16 %v152
    %v370 = vunpack.c.l.b16 %v153
    %v371 = vunpack.c.l.b16 %v154
    %v372 = vunpack.c.h.b16 %v154
    %v373 = vunpack.c.l.b16 %v155
    %v374 = vunpack.c.l.b16 %v156
    %v375 = vunpack.c.h.b16 %v156
    %v376 = vunpack.c.l.b16 %v157
    %v377 = vunpack.c.l.b16 %v158
    %v378 = vunpack.c.h.b16 %v158
    %v379 = vunpack.c.l.b16 %v159
    %v380 = vunpack.c.l.b16 %v160
    %v381 = vunpack.c.h.b16 %v160
    %v382 = vunpack.c.l.b16 %v161
    %v383 = vunpack.c.l.b16 %v162
    %v384 = vunpack.c.h.b16 %v162
    %v385 = vunpack.c.l.b16 %v163
    %v386 = vunpack.c.l.b16 %v164
    %v387 = vunpack.c.h.b16 %v164
    %v388 = vunpack.c.l.b16 %v165
    %v389 = vunpack.c.l.b16 %v166
    %v390 = vunpack.c.h.b16 %v166
    %v391 = vunpack.c.l.b16 %v167
    %v392 = vunpack.c.l.b16 %v168
    %v393 = vunpack.c.h.b16 %v168
    %v394 = vunpack.c.l.b16 %v169
    %v395 = vunpack.c.l.b16 %v170
    %v396 = vunpack.c.h.b16 %v170
    %v397 = vunpack.c.l.b16 %v171
    %v398 = vunpack.c.l.b16 %v172
    %v399 = vunpack.c.h.b16 %v172
    %v400 = vunpack.c.l.b16 %v173
    %v401 = vunpack.c.l.b16 %v174
    %v402 = vunpack.c.h.b16 %v174
    %v403 = vunpack.c.l.b16 %v175
    %v404 = vunpack.c.l.b16 %v176
    %v405 = vunpack.c.h.b16 %v176
    %v406 = vunpack.c.l.b16 %v177
    %v407 = vunpack.c.l.b16 %v178
    %v408 = vunpack.c.h.b16 %v178
    %v409 = vunpack.c.l.b16 %v179
    %v410 = vunpack.c.l.b16 %v180
    %v411 = vunpack.c.h.b16 %v180
    %v412 = vunpack.c.l.b16 %v181
    %v413 = vunpack.c.l.b16 %v182
    %v414 = vunpack.c.h.b16 %v182
    %v415 = vunpack.c.l.b16 %v183
    %v416 = vunpack.c.l.b16 %v184
    %v417 = vunpack.c.h.b16 %v184
    %v418 = vunpack.c.l.b16 %v185
    %v419 = vunpack.c.l.b16 %v186
    %v420 = vunpack.c.h.b16 %v186
    %v421 = vunpack.c.l.b16 %v187
    %v422 = vunpack.c.l.b16 %v188
    %v423 = vunpack.c.h.b16 %v188
    %v424 = vunpack.c.l.b16 %v189
    %v425 = vunpack.c.l.b16 %v190
    %v426 = vunpack.c.h.b16 %v190
    %v427 = vunpack.c.l.b16 %v191
    %v428 = vunpack.c.l.b16 %v192
    %v429 = vunpack.c.h.b16 %v192
    %v430 = vunpack.c.l.b16 %v193
    %v431 = vunpack.c.l.b16 %v194
    %v432 = vunpack.c.h.b16 %v194
    %v433 = vunpack.c.l.b16 %v195
    %v434 = vunpack.c.l.b16 %v196
    %v435 = vunpack.c.h.b16 %v196
    %v436 = vunpack.c.l.b16 %v197
    %v437 = vunpack.c.l.b16 %v198
    %v438 = vunpack.c.h.b16 %v198
    %v439 = vunpack.c.l.b16 %v199
    %v440 = vunpack.c.l.b16 %v200
    %v441 = vunpack.c.h.b16 %v200
    %v442 = vunpack.c.l.b16 %v201
    %v443 = vunpack.c.l.b16 %v202
    %v444 = vunpack.c.h.b16 %v202
    %v445 = vunpack.c.l.b16 %v203
    %v446 = vunpack.c.l.b16 %v204
    %v447 = vunpack.c.h.b16 %v204
    %v448 = vunpack.c.l.b16 %v205
    %v449 = vunpack.c.l.b16 %v206
    %v450 = vunpack.c.h.b16 %v206
    %v451 = vunpack.c.l.b16 %v207
    %v452 = vunpack.c.l.b16 %v208
    %v453 = vunpack.c.h.b16 %v208
    %v454 = vunpack.c.l.b16 %v209
    %v455 = vunpack.c.l.b16 %v210
    %v456 = vunpack.c.h.b16 %v210
    %v457 = vunpack.c.l.b16 %v211
    %v458 = vunpack.c.l.b16 %v212
    %v459 = vunpack.c.h.b16 %v212
    %v460 = vunpack.c.l.b16 %v213
    %v461 = vunpack.c.l.b16 %v214
    %v462 = vunpack.c.h.b16 %v214
    %v463 = vunpack.c.l.b16 %v215
    %v464 = vunpack.c.l.b16 %v216
    %v465 = vunpack.c.h.b16 %v216
    %v466 = vunpack.c.l.b16 %v217
    %v467 = vunpack.c.l.b16 %v218
    %v468 = vunpack.c.h.b16 %v218
    %v469 = vunpack.c.l.b16 %v219
    %v470 = vunpack.c.l.b16 %v220
    %v471 = vunpack.c.h.b16 %v220
    %v472 = vunpack.c.l.b16 %v221
    %v473 = vunpack.c.l.b16 %v222
    %v474 = vunpack.c.h.b16 %v222
    %v475 = vunpack.c.l.b16 %v223
    %v476 = vunpack.c.l.b16 %v224
    %v477 = vunpack.c.h.b16 %v224
    %v478 = vunpack.c.l.b16 %v225
    %v479 = vunpack.c.l.b16 %v226
    %v480 = vunpack.c.h.b16 %v226
    %v481 = vunpack.c.l.b16 %v227
    %v482 = vunpack.c.l.b16 %v228
    %v483 = vunpack.c.h.b16 %v228
    %v484 = vunpack.c.l.b16 %v229
    %v485 = vunpack.c.l.b16 %v230
    %v486 = vunpack.c.h.b16 %v230
    %v487 = vunpack.c.l.b16 %v231
    %v488 = vunpack.c.l.b16 %v232
    %v489 = vunpack.c.h.b16 %v232
    %v490 = vunpack.c.l.b16 %v233
    %v491 = vpack.c.b16 %v350, %v347
    %v492 = vpack.c.b16 %v351, %v348
    %v493 = vpack.c.b16 %v352, %v349
    %v494 = vpack.c.b16 %v356, %v353
    %v495 = vpack.c.b16 %v357, %v354
    %v496 = vpack.c.b16 %v358, %v355
    %v497 = vpack.c.b16 %v362, %v359
    %v498 = vpack.c.b16 %v363, %v360
    %v499 = vpack.c.b16 %v364, %v361
    %v500 = vpack.c.b16 %v368, %v365
    %v501 = vpack.c.b16 %v369, %v366
    %v502 = vpack.c.b16 %v370, %v367
    %v503 = vpack.c.b16 %v374, %v371
    %v504 = vpack.c.b16 %v375, %v372
    %v505 = vpack.c.b16 %v376, %v373
    %v506 = vpack.c.b16 %v380, %v377
    %v507 = vpack.c.b16 %v381, %v378
    %v508 = vpack.c.b16 %v382, %v379
    %v509 = vpack.c.b16 %v386, %v383
    %v510 = vpack.c.b16 %v387, %v384
    %v511 = vpack.c.b16 %v388, %v385
    %v512 = vpack.c.b16 %v392, %v389
    %v513 = vpack.c.b16 %v393, %v390
    %v514 = vpack.c.b16 %v394, %v391
    %v515 = vpack.c.b16 %v398, %v395
    %v516 = vpack.c.b16 %v399, %v396
    %v517 = vpack.c.b16 %v400, %v397
    %v518 = vpack.c.b16 %v404, %v401
    %v519 = vpack.c.b16 %v405, %v402
    %v520 = vpack.c.b16 %v406, %v403
    %v521 = vpack.c.b16 %v410, %v407
    %v522 = vpack.c.b16 %v411, %v408
    %v523 = vpack.c.b16 %v412, %v409
    %v524 = vpack.c.b16 %v416, %v413
    %v525 = vpack.c.b16 %v417, %v414
    %v526 = vpack.c.b16 %v418, %v415
    %v527 = vpack.c.b16 %v422, %v419
    %v528 = vpack.c.b16 %v423, %v420
    %v529 = vpack.c.b16 %v424, %v421
    %v530 = vpack.c.b16 %v428, %v425
    %v531 = vpack.c.b16 %v429, %v426
    %v532 = vpack.c.b16 %v430, %v427
    %v533 = vpack.c.b16 %v434, %v431
    %v534 = vpack.c.b16 %v435, %v432
    %v535 = vpack.c.b16 %v436, %v433
    %v536 = vpack.c.b16 %v440, %v437
    %v537 = vpack.c.b16 %v441, %v438
    %v538 = vpack.c.b16 %v442, %v439
    %v539 = vpack.c.b16 %v446, %v443
    %v540 = vpack.c.b16 %v447, %v444
    %v541 = vpack.c.b16 %v448, %v445
    %v542 = vpack.c.b16 %v452, %v449
    %v543 = vpack.c.b16 %v453, %v450
    %v544 = vpack.c.b16 %v454, %v451
    %v545 = vpack.c.b16 %v458, %v455
    %v546 = vpack.c.b16 %v459, %v456
    %v547 = vpack.c.b16 %v460, %v457
    %v548 = vpack.c.b16 %v464, %v461
    %v549 = vpack.c.b16 %v465, %v462
    %v550 = vpack.c.b16 %v466, %v463
    %v551 = vpack.c.b16 %v470, %v467
    %v552 = vpack.c.b16 %v471, %v468
    %v553 = vpack.c.b16 %v472, %v469
    %v554 = vpack.c.b16 %v476, %v473
    %v555 = vpack.c.b16 %v477, %v474
    %v556 = vpack.c.b16 %v478, %v475
    %v557 = vpack.c.b16 %v482, %v479
    %v558 = vpack.c.b16 %v483, %v480
    %v559 = vpack.c.b16 %v484, %v481
    %v560 = vpack.c.b16 %v488, %v485
    %v561 = vpack.c.b16 %v489, %v486
    %v562 = vpack.c.b16 %v490, %v487
    %635 = vmatprep.subr.bf16.mxu0 %v492
    %636 = vmatpush1.bf16.msra.mxu0 %v491
    %637 = vmatprep.subr.bf16.mxu0 %v495
    %638 = vmatpush1.bf16.msra.mxu0 %v494
    %639 = vmatprep.subr.bf16.mxu0 %v498
    %640 = vmatpush1.bf16.msra.mxu0 %v497
    %641 = vmatprep.subr.bf16.mxu0 %v501
    %642 = vmatpush1.bf16.msra.mxu0 %v500
    %643 = vmatprep.subr.bf16.mxu0 %v504
    %644 = vmatpush1.bf16.msra.mxu0 %v503
    %645 = vmatprep.subr.bf16.mxu0 %v507
    %646 = vmatpush1.bf16.msra.mxu0 %v506
    %647 = vmatprep.subr.bf16.mxu0 %v510
    %648 = vmatpush1.bf16.msra.mxu0 %v509
    %649 = vmatprep.subr.bf16.mxu0 %v513
    %650 = vmatpush1.bf16.msra.mxu0 %v512
    %651 = vmatprep.subr.bf16.mxu0 %v516
    %652 = vmatpush1.bf16.msra.mxu0 %v515
    %653 = vmatprep.subr.bf16.mxu0 %v519
    %654 = vmatpush1.bf16.msra.mxu0 %v518
    %655 = vmatprep.subr.bf16.mxu0 %v522
    %656 = vmatpush1.bf16.msra.mxu0 %v521
    %657 = vmatprep.subr.bf16.mxu0 %v525
    %658 = vmatpush1.bf16.msra.mxu0 %v524
    %659 = vmatprep.subr.bf16.mxu0 %v528
    %660 = vmatpush1.bf16.msra.mxu0 %v527
    %661 = vmatprep.subr.bf16.mxu0 %v531
    %662 = vmatpush1.bf16.msra.mxu0 %v530
    %663 = vmatprep.subr.bf16.mxu0 %v534
    %664 = vmatpush1.bf16.msra.mxu0 %v533
    %665 = vmatprep.subr.bf16.mxu0 %v537
    %666 = vmatpush1.bf16.msra.mxu0 %v536
    %667 = vmatprep.mubr.bf16.mxu0 %v136
    %668 = vmatmul.mubr.bf16.gmra.mrb[0].mxu0 %v135
    %v669 = vpop.f32.mrb[0].mxu0
    %v670 = vadd.f32 %v239, %v669
    %v671 = vpop.f32.mrb[0].mxu0
    %v672 = vadd.f32 %v243, %v671
    %v673 = vpop.f32.mrb[0].mxu0
    %v674 = vadd.f32 %v239, %v673
    %v675 = vpop.f32.mrb[0].mxu0
    %v676 = vadd.f32 %v243, %v675
    %677 = vdwg.mxu0
    %678 = vmatprep.subr.bf16.mxu0 %v540
    %679 = vmatpush1.bf16.msra.mxu0 %v539
    %680 = vmatprep.subr.bf16.mxu0 %v543
    %681 = vmatpush1.bf16.msra.mxu0 %v542
    %682 = vmatprep.subr.bf16.mxu0 %v546
    %683 = vmatpush1.bf16.msra.mxu0 %v545
    %684 = vmatprep.subr.bf16.mxu0 %v549
    %685 = vmatpush1.bf16.msra.mxu0 %v548
    %686 = vmatprep.subr.bf16.mxu0 %v552
    %687 = vmatpush1.bf16.msra.mxu0 %v551
    %688 = vmatprep.subr.bf16.mxu0 %v555
    %689 = vmatpush1.bf16.msra.mxu0 %v554
    %690 = vmatprep.subr.bf16.mxu0 %v558
    %691 = vmatpush1.bf16.msra.mxu0 %v557
    %692 = vmatprep.subr.bf16.mxu0 %v561
    %693 = vmatpush1.bf16.msra.mxu0 %v560
    %694 = vmatprep.subr.bf16.mxu0 0
    %695 = vmatpush1.bf16.msra.mxu0 0
    %696 = vmatprep.subr.bf16.mxu0 0
    %697 = vmatpush1.bf16.msra.mxu0 0
    %698 = vmatprep.subr.bf16.mxu0 0
    %699 = vmatpush1.bf16.msra.mxu0 0
    %700 = vmatprep.subr.bf16.mxu0 0
    %701 = vmatpush1.bf16.msra.mxu0 0
    %702 = vmatprep.subr.bf16.mxu0 0
    %703 = vmatpush1.bf16.msra.mxu0 0
    %704 = vmatprep.subr.bf16.mxu0 0
    %705 = vmatpush1.bf16.msra.mxu0 0
    %706 = vmatprep.subr.bf16.mxu0 0
    %707 = vmatpush1.bf16.msra.mxu0 0
    %708 = vmatprep.subr.bf16.mxu0 0
    %709 = vmatpush1.bf16.msra.mxu0 0
    %710 = vmatprep.mubr.bf16.mxu0 0
    %711 = vmatmul.mubr.bf16.gmra.mrb[0].mxu0 %v137
    %v712 = vpop.f32.mrb[0].mxu0
    %v713 = vadd.f32 %v670, %v712
    %v714 = vpop.f32.mrb[0].mxu0
    %v715 = vadd.f32 %v672, %v714
    %v716 = vpop.f32.mrb[0].mxu0
    %v717 = vadd.f32 %v674, %v716
    %v718 = vpop.f32.mrb[0].mxu0
    %v719 = vadd.f32 %v676, %v718
    %720 = vdwg.mxu0
    %721 = vmatprep.subr.bf16.mxu0 0
    %722 = vmatpush1.bf16.msra.mxu0 %v493
    %723 = vmatprep.subr.bf16.mxu0 0
    %724 = vmatpush1.bf16.msra.mxu0 %v496
    %725 = vmatprep.subr.bf16.mxu0 0
    %726 = vmatpush1.bf16.msra.mxu0 %v499
    %727 = vmatprep.subr.bf16.mxu0 0
    %728 = vmatpush1.bf16.msra.mxu0 %v502
    %729 = vmatprep.subr.bf16.mxu0 0
    %730 = vmatpush1.bf16.msra.mxu0 %v505
    %731 = vmatprep.subr.bf16.mxu0 0
    %732 = vmatpush1.bf16.msra.mxu0 %v508
    %733 = vmatprep.subr.bf16.mxu0 0
    %734 = vmatpush1.bf16.msra.mxu0 %v511
    %735 = vmatprep.subr.bf16.mxu0 0
    %736 = vmatpush1.bf16.msra.mxu0 %v514
    %737 = vmatprep.subr.bf16.mxu0 0
    %738 = vmatpush1.bf16.msra.mxu0 %v517
    %739 = vmatprep.subr.bf16.mxu0 0
    %740 = vmatpush1.bf16.msra.mxu0 %v520
    %741 = vmatprep.subr.bf16.mxu0 0
    %742 = vmatpush1.bf16.msra.mxu0 %v523
    %743 = vmatprep.subr.bf16.mxu0 0
    %744 = vmatpush1.bf16.msra.mxu0 %v526
    %745 = vmatprep.subr.bf16.mxu0 0
    %746 = vmatpush1.bf16.msra.mxu0 %v529
    %747 = vmatprep.subr.bf16.mxu0 0
    %748 = vmatpush1.bf16.msra.mxu0 %v532
    %749 = vmatprep.subr.bf16.mxu0 0
    %750 = vmatpush1.bf16.msra.mxu0 %v535
    %751 = vmatprep.subr.bf16.mxu0 0
    %752 = vmatpush1.bf16.msra.mxu0 %v538
    %753 = vmatprep.mubr.bf16.mxu0 %v136
    %754 = vmatmul.mubr.bf16.gmra.mrb[0].mxu0 %v135
    %v755 = vpop.f32.mrb[0].mxu0
    %v756 = vadd.f32 %v247, %v755
    %v757 = vpop.f32.mrb[0].mxu0
    %v758 = vpop.f32.mrb[0].mxu0
    %v759 = vadd.f32 %v247, %v758
    %v760 = vpop.f32.mrb[0].mxu0
    %761 = vdwg.mxu0
    %762 = vmatprep.subr.bf16.mxu0 0
    %763 = vmatpush1.bf16.msra.mxu0 %v541
    %764 = vmatprep.subr.bf16.mxu0 0
    %765 = vmatpush1.bf16.msra.mxu0 %v544
    %766 = vmatprep.subr.bf16.mxu0 0
    %767 = vmatpush1.bf16.msra.mxu0 %v547
    %768 = vmatprep.subr.bf16.mxu0 0
    %769 = vmatpush1.bf16.msra.mxu0 %v550
    %770 = vmatprep.subr.bf16.mxu0 0
    %771 = vmatpush1.bf16.msra.mxu0 %v553
    %772 = vmatprep.subr.bf16.mxu0 0
    %773 = vmatpush1.bf16.msra.mxu0 %v556
    %774 = vmatprep.subr.bf16.mxu0 0
    %775 = vmatpush1.bf16.msra.mxu0 %v559
    %776 = vmatprep.subr.bf16.mxu0 0
    %777 = vmatpush1.bf16.msra.mxu0 %v562
    %778 = vmatprep.subr.bf16.mxu0 0
    %779 = vmatpush1.bf16.msra.mxu0 0
    %780 = vmatprep.subr.bf16.mxu0 0
    %781 = vmatpush1.bf16.msra.mxu0 0
    %782 = vmatprep.subr.bf16.mxu0 0
    %783 = vmatpush1.bf16.msra.mxu0 0
    %784 = vmatprep.subr.bf16.mxu0 0
    %785 = vmatpush1.bf16.msra.mxu0 0
    %786 = vmatprep.subr.bf16.mxu0 0
    %787 = vmatpush1.bf16.msra.mxu0 0
    %788 = vmatprep.subr.bf16.mxu0 0
    %789 = vmatpush1.bf16.msra.mxu0 0
    %790 = vmatprep.subr.bf16.mxu0 0
    %791 = vmatpush1.bf16.msra.mxu0 0
    %792 = vmatprep.subr.bf16.mxu0 0
    %793 = vmatpush1.bf16.msra.mxu0 0
    %794 = vmatprep.mubr.bf16.mxu0 0
    %795 = vmatmul.mubr.bf16.gmra.mrb[0].mxu0 %v137
    %v796 = vpop.f32.mrb[0].mxu0
    %v797 = vadd.f32 %v756, %v796
    %v798 = vpop.f32.mrb[0].mxu0
    %v799 = vpop.f32.mrb[0].mxu0
    %v800 = vadd.f32 %v759, %v799
    %v801 = vpop.f32.mrb[0].mxu0
    %802 = vdwg.mxu0
    %v803 = vmax.f32 %v713, 0.0
    %v804 = vmax.f32 %v715, 0.0
    %v805 = vmax.f32 %v797, 0.0
    %v806 = vmax.f32 %v717, 0.0
    %v807 = vmax.f32 %v719, 0.0
    %v808 = vmax.f32 %v800, 0.0
    %v815 = vrot.slane %v803, 7
    %v816 = vrot.slane %v804, 7
    %v817 = vrot.slane %v805, 7
    %v818 = vrot.slane %v806, 7
    %v819 = vsel %vm121, %v815, %v818
    %v820 = vrot.slane %v807, 7
    %v821 = vsel %vm121, %v816, %v820
    %v822 = vrot.slane %v808, 7
    %v823 = vsel %vm121, %v817, %v822
    %v830 = vsel %vm121, 0.0, %v815
    %v831 = vsel %vm121, 0.0, %v816
    %v832 = vsel %vm121, 0.0, %v817
    %v833 = vrot.slane %v803, 1
    %v834 = vrot.slane %v806, 1
    %v835 = vsel %vm128, %v833, %v834
    %v836 = vrot.slane %v804, 1
    %v837 = vrot.slane %v807, 1
    %v838 = vsel %vm128, %v836, %v837
    %v839 = vrot.slane %v805, 1
    %v840 = vrot.slane %v808, 1
    %v841 = vsel %vm128, %v839, %v840
    %v848 = vsel %vm121, %v834, 0.0
    %v849 = vsel %vm121, %v837, 0.0
    %v850 = vsel %vm121, %v840, 0.0
    %v851 = vpack.c.bf16 %v819, %v830
    %v852 = vpack.c.bf16 %v821, %v831
    %v853 = vpack.c.bf16 %v823, %v832
    %v854 = vpack.c.bf16 %v806, %v803
    %v855 = vpack.c.bf16 %v807, %v804
    %v856 = vpack.c.bf16 %v808, %v805
    %v857 = vpack.c.bf16 %v848, %v835
    %v858 = vpack.c.bf16 %v849, %v838
    %v859 = vpack.c.bf16 %v850, %v841
    %v860 = vld [vmem:[#allocation4] sm:$0xff]
    %v861 = vld [vmem:[#allocation4 + $0x8] sm:$0xff]
    %v862 = vld [vmem:[#allocation4 + $0x10] sm:$0xff]
    %v863 = vld [vmem:[#allocation4 + $0x18] sm:$0xff]
    %v864 = vld [vmem:[#allocation4 + $0x20] sm:$0xff]
    %v865 = vld [vmem:[#allocation4 + $0x28] sm:$0xff]
    %v866 = vld [vmem:[#allocation4 + $0x30] sm:$0xff]
    %v867 = vld [vmem:[#allocation4 + $0x38] sm:$0xff]
    %v868 = vld [vmem:[#allocation4 + $0x40] sm:$0xff]
    %v869 = vld [vmem:[#allocation4 + $0x48] sm:$0xff]
    %v870 = vld [vmem:[#allocation4 + $0x50] sm:$0xff]
    %v871 = vld [vmem:[#allocation4 + $0x58] sm:$0xff]
    %v872 = vld [vmem:[#allocation4 + $0x60] sm:$0xff]
    %v873 = vld [vmem:[#allocation4 + $0x68] sm:$0xff]
    %v874 = vld [vmem:[#allocation4 + $0x70] sm:$0xff]
    %v875 = vld [vmem:[#allocation4 + $0x78] sm:$0xff]
    %v876 = vld [vmem:[#allocation4 + $0x80] sm:$0xff]
    %v877 = vld [vmem:[#allocation4 + $0x88] sm:$0xff]
    %v878 = vld [vmem:[#allocation4 + $0x90] sm:$0xff]
    %v879 = vld [vmem:[#allocation4 + $0x98] sm:$0xff]
    %v880 = vld [vmem:[#allocation4 + $0xa0] sm:$0xff]
    %v881 = vld [vmem:[#allocation4 + $0xa8] sm:$0xff]
    %v882 = vld [vmem:[#allocation4 + $0xb0] sm:$0xff]
    %v883 = vld [vmem:[#allocation4 + $0xb8] sm:$0xff]
    %v884 = vld [vmem:[#allocation4 + $0xc0] sm:$0xff]
    %v885 = vld [vmem:[#allocation4 + $0xc8] sm:$0xff]
    %v886 = vld [vmem:[#allocation4 + $0xd0] sm:$0xff]
    %v887 = vld [vmem:[#allocation4 + $0xd8] sm:$0xff]
    %v888 = vld [vmem:[#allocation4 + $0xe0] sm:$0xff]
    %v889 = vld [vmem:[#allocation4 + $0xe8] sm:$0xff]
    %v890 = vld [vmem:[#allocation4 + $0xf0] sm:$0xff]
    %v891 = vld [vmem:[#allocation4 + $0xf8] sm:$0xff]
    %v892 = vld [vmem:[#allocation4 + $0x100] sm:$0xff]
    %v893 = vld [vmem:[#allocation4 + $0x108] sm:$0xff]
    %v894 = vld [vmem:[#allocation4 + $0x110] sm:$0xff]
    %v895 = vld [vmem:[#allocation4 + $0x118] sm:$0xff]
    %v896 = vld [vmem:[#allocation4 + $0x120] sm:$0xff]
    %v897 = vld [vmem:[#allocation4 + $0x128] sm:$0xff]
    %v898 = vld [vmem:[#allocation4 + $0x130] sm:$0xff]
    %v899 = vld [vmem:[#allocation4 + $0x138] sm:$0xff]
    %v900 = vld [vmem:[#allocation4 + $0x140] sm:$0xff]
    %v901 = vld [vmem:[#allocation4 + $0x148] sm:$0xff]
    %v902 = vld [vmem:[#allocation4 + $0x150] sm:$0xff]
    %v903 = vld [vmem:[#allocation4 + $0x158] sm:$0xff]
    %v904 = vld [vmem:[#allocation4 + $0x160] sm:$0xff]
    %v905 = vld [vmem:[#allocation4 + $0x168] sm:$0xff]
    %v906 = vld [vmem:[#allocation4 + $0x170] sm:$0xff]
    %v907 = vld [vmem:[#allocation4 + $0x178] sm:$0xff]
    %v908 = vld [vmem:[#allocation4 + $0x180] sm:$0xff]
    %v909 = vld [vmem:[#allocation4 + $0x188] sm:$0xff]
    %v910 = vld [vmem:[#allocation4 + $0x190] sm:$0xff]
    %v911 = vld [vmem:[#allocation4 + $0x198] sm:$0xff]
    %v912 = vld [vmem:[#allocation4 + $0x1a0] sm:$0xff]
    %v913 = vld [vmem:[#allocation4 + $0x1a8] sm:$0xff]
    %v914 = vld [vmem:[#allocation4 + $0x1b0] sm:$0xff]
    %v915 = vld [vmem:[#allocation4 + $0x1b8] sm:$0xff]
    %v916 = vld [vmem:[#allocation4 + $0x1c0] sm:$0xff]
    %v917 = vld [vmem:[#allocation4 + $0x1c8] sm:$0xff]
    %v918 = vld [vmem:[#allocation4 + $0x1d0] sm:$0xff]
    %v919 = vld [vmem:[#allocation4 + $0x1d8] sm:$0xff]
    %v920 = vld [vmem:[#allocation4 + $0x1e0] sm:$0xff]
    %v921 = vld [vmem:[#allocation4 + $0x1e8] sm:$0xff]
    %v922 = vld [vmem:[#allocation4 + $0x1f0] sm:$0xff]
    %v923 = vld [vmem:[#allocation4 + $0x1f8] sm:$0xff]
    %v924 = vld [vmem:[#allocation4 + $0x200] sm:$0xff]
    %v925 = vld [vmem:[#allocation4 + $0x208] sm:$0xff]
    %v926 = vld [vmem:[#allocation4 + $0x210] sm:$0xff]
    %v927 = vld [vmem:[#allocation4 + $0x218] sm:$0xff]
    %v928 = vld [vmem:[#allocation4 + $0x220] sm:$0xff]
    %v929 = vld [vmem:[#allocation4 + $0x228] sm:$0xff]
    %v930 = vld [vmem:[#allocation4 + $0x230] sm:$0xff]
    %v931 = vld [vmem:[#allocation4 + $0x238] sm:$0xff]
    %v932 = vld [vmem:[#allocation4 + $0x240] sm:$0xff]
    %v933 = vld [vmem:[#allocation4 + $0x248] sm:$0xff]
    %v934 = vld [vmem:[#allocation4 + $0x250] sm:$0xff]
    %v935 = vld [vmem:[#allocation4 + $0x258] sm:$0xff]
    %v936 = vld [vmem:[#allocation4 + $0x260] sm:$0xff]
    %v937 = vld [vmem:[#allocation4 + $0x268] sm:$0xff]
    %v938 = vld [vmem:[#allocation4 + $0x270] sm:$0xff]
    %v939 = vld [vmem:[#allocation4 + $0x278] sm:$0xff]
    %v940 = vld [vmem:[#allocation4 + $0x280] sm:$0xff]
    %v941 = vld [vmem:[#allocation4 + $0x288] sm:$0xff]
    %v942 = vld [vmem:[#allocation4 + $0x290] sm:$0xff]
    %v943 = vld [vmem:[#allocation4 + $0x298] sm:$0xff]
    %v944 = vld [vmem:[#allocation4 + $0x2a0] sm:$0xff]
    %v945 = vld [vmem:[#allocation4 + $0x2a8] sm:$0xff]
    %v946 = vld [vmem:[#allocation4 + $0x2b0] sm:$0xff]
    %v947 = vld [vmem:[#allocation4 + $0x2b8] sm:$0xff]
    %v948 = vld [vmem:[#allocation4 + $0x2c0] sm:$0xff]
    %v949 = vld [vmem:[#allocation4 + $0x2c8] sm:$0xff]
    %v950 = vld [vmem:[#allocation4 + $0x2d0] sm:$0xff]
    %v951 = vld [vmem:[#allocation4 + $0x2d8] sm:$0xff]
    %v952 = vld [vmem:[#allocation4 + $0x2e0] sm:$0xff]
    %v953 = vld [vmem:[#allocation4 + $0x2e8] sm:$0xff]
    %v954 = vld [vmem:[#allocation4 + $0x2f0] sm:$0xff]
    %v955 = vld [vmem:[#allocation4 + $0x2f8] sm:$0xff]
    %v956 = vld [vmem:[#allocation4 + $0x300] sm:$0xff]
    %v957 = vld [vmem:[#allocation4 + $0x308] sm:$0xff]
    %v958 = vld [vmem:[#allocation4 + $0x310] sm:$0xff]
    %v959 = vld [vmem:[#allocation4 + $0x318] sm:$0xff]
    %v960 = vld [vmem:[#allocation4 + $0x320] sm:$0xff]
    %v961 = vld [vmem:[#allocation4 + $0x328] sm:$0xff]
    %v962 = vld [vmem:[#allocation4 + $0x330] sm:$0xff]
    %v963 = vld [vmem:[#allocation4 + $0x338] sm:$0xff]
    %v964 = vld [vmem:[#allocation4 + $0x340] sm:$0xff]
    %v965 = vld [vmem:[#allocation4 + $0x348] sm:$0xff]
    %v966 = vld [vmem:[#allocation4 + $0x350] sm:$0xff]
    %v967 = vld [vmem:[#allocation4 + $0x358] sm:$0xff]
    %v968 = vld [vmem:[#allocation4 + $0x360] sm:$0xff]
    %v969 = vld [vmem:[#allocation4 + $0x368] sm:$0xff]
    %v970 = vld [vmem:[#allocation4 + $0x370] sm:$0xff]
    %v971 = vld [vmem:[#allocation4 + $0x378] sm:$0xff]
    %v972 = vld [vmem:[#allocation4 + $0x380] sm:$0xff]
    %v973 = vld [vmem:[#allocation4 + $0x388] sm:$0xff]
    %v974 = vld [vmem:[#allocation4 + $0x390] sm:$0xff]
    %v975 = vld [vmem:[#allocation4 + $0x398] sm:$0xff]
    %v976 = vld [vmem:[#allocation4 + $0x3a0] sm:$0xff]
    %v977 = vld [vmem:[#allocation4 + $0x3a8] sm:$0xff]
    %v978 = vld [vmem:[#allocation4 + $0x3b0] sm:$0xff]
    %v979 = vld [vmem:[#allocation4 + $0x3b8] sm:$0xff]
    %v980 = vld [vmem:[#allocation4 + $0x3c0] sm:$0xff]
    %v981 = vld [vmem:[#allocation4 + $0x3c8] sm:$0xff]
    %v982 = vld [vmem:[#allocation4 + $0x3d0] sm:$0xff]
    %v983 = vld [vmem:[#allocation4 + $0x3d8] sm:$0xff]
    %v984 = vld [vmem:[#allocation4 + $0x3e0] sm:$0xff]
    %v985 = vld [vmem:[#allocation4 + $0x3e8] sm:$0xff]
    %v986 = vld [vmem:[#allocation4 + $0x3f0] sm:$0xff]
    %v987 = vld [vmem:[#allocation4 + $0x3f8] sm:$0xff]
    %v988 = vld [vmem:[#allocation4 + $0x400] sm:$0xff]
    %v989 = vld [vmem:[#allocation4 + $0x408] sm:$0xff]
    %v990 = vld [vmem:[#allocation4 + $0x410] sm:$0xff]
    %v991 = vld [vmem:[#allocation4 + $0x418] sm:$0xff]
    %v992 = vld [vmem:[#allocation4 + $0x420] sm:$0xff]
    %v993 = vld [vmem:[#allocation4 + $0x428] sm:$0xff]
    %v994 = vld [vmem:[#allocation4 + $0x430] sm:$0xff]
    %v995 = vld [vmem:[#allocation4 + $0x438] sm:$0xff]
    %v996 = vld [vmem:[#allocation4 + $0x440] sm:$0xff]
    %v997 = vld [vmem:[#allocation4 + $0x448] sm:$0xff]
    %v998 = vld [vmem:[#allocation4 + $0x450] sm:$0xff]
    %v999 = vld [vmem:[#allocation4 + $0x458] sm:$0xff]
    %v1000 = vld [vmem:[#allocation4 + $0x460] sm:$0xff]
    %v1001 = vld [vmem:[#allocation4 + $0x468] sm:$0xff]
    %v1002 = vld [vmem:[#allocation4 + $0x470] sm:$0xff]
    %v1003 = vld [vmem:[#allocation4 + $0x478] sm:$0xff]
    %v1004 = vld [vmem:[%s5] sm:$0x3]
    %v1006 = vlaneseq
    %v1007 = vshrl.u32 %v1006, 7
    %v1008 = vsub.s32 0, %v1007
    %v1009 = vrot.slane %v1004, %v1008
    %v1010 = vlaneseq
    %v1011 = vshrl.u32 %v1010, 7
    %v1012 = vsub.s32 1, %v1011
    %v1013 = vrot.slane %v1004, %v1012
    %v1160 = vunpack.c.l.b16 %v860
    %v1161 = vunpack.c.h.b16 %v860
    %v1162 = vunpack.c.l.b16 %v861
    %v1163 = vunpack.c.h.b16 %v861
    %v1164 = vunpack.c.l.b16 %v862
    %v1165 = vunpack.c.h.b16 %v862
    %v1166 = vunpack.c.l.b16 %v863
    %v1167 = vunpack.c.h.b16 %v863
    %v1168 = vunpack.c.l.b16 %v864
    %v1169 = vunpack.c.h.b16 %v864
    %v1170 = vunpack.c.l.b16 %v865
    %v1171 = vunpack.c.h.b16 %v865
    %v1172 = vunpack.c.l.b16 %v866
    %v1173 = vunpack.c.h.b16 %v866
    %v1174 = vunpack.c.l.b16 %v867
    %v1175 = vunpack.c.h.b16 %v867
    %v1176 = vunpack.c.l.b16 %v868
    %v1177 = vunpack.c.h.b16 %v868
    %v1178 = vunpack.c.l.b16 %v869
    %v1179 = vunpack.c.h.b16 %v869
    %v1180 = vunpack.c.l.b16 %v870
    %v1181 = vunpack.c.h.b16 %v870
    %v1182 = vunpack.c.l.b16 %v871
    %v1183 = vunpack.c.h.b16 %v871
    %v1184 = vunpack.c.l.b16 %v872
    %v1185 = vunpack.c.h.b16 %v872
    %v1186 = vunpack.c.l.b16 %v873
    %v1187 = vunpack.c.h.b16 %v873
    %v1188 = vunpack.c.l.b16 %v874
    %v1189 = vunpack.c.h.b16 %v874
    %v1190 = vunpack.c.l.b16 %v875
    %v1191 = vunpack.c.h.b16 %v875
    %v1192 = vunpack.c.l.b16 %v876
    %v1193 = vunpack.c.h.b16 %v876
    %v1194 = vunpack.c.l.b16 %v877
    %v1195 = vunpack.c.h.b16 %v877
    %v1196 = vunpack.c.l.b16 %v878
    %v1197 = vunpack.c.h.b16 %v878
    %v1198 = vunpack.c.l.b16 %v879
    %v1199 = vunpack.c.h.b16 %v879
    %v1200 = vunpack.c.l.b16 %v880
    %v1201 = vunpack.c.h.b16 %v880
    %v1202 = vunpack.c.l.b16 %v881
    %v1203 = vunpack.c.h.b16 %v881
    %v1204 = vunpack.c.l.b16 %v882
    %v1205 = vunpack.c.h.b16 %v882
    %v1206 = vunpack.c.l.b16 %v883
    %v1207 = vunpack.c.h.b16 %v883
    %v1208 = vunpack.c.l.b16 %v884
    %v1209 = vunpack.c.h.b16 %v884
    %v1210 = vunpack.c.l.b16 %v885
    %v1211 = vunpack.c.h.b16 %v885
    %v1212 = vunpack.c.l.b16 %v886
    %v1213 = vunpack.c.h.b16 %v886
    %v1214 = vunpack.c.l.b16 %v887
    %v1215 = vunpack.c.h.b16 %v887
    %v1216 = vunpack.c.l.b16 %v888
    %v1217 = vunpack.c.h.b16 %v888
    %v1218 = vunpack.c.l.b16 %v889
    %v1219 = vunpack.c.h.b16 %v889
    %v1220 = vunpack.c.l.b16 %v890
    %v1221 = vunpack.c.h.b16 %v890
    %v1222 = vunpack.c.l.b16 %v891
    %v1223 = vunpack.c.h.b16 %v891
    %v1224 = vunpack.c.l.b16 %v892
    %v1225 = vunpack.c.h.b16 %v892
    %v1226 = vunpack.c.l.b16 %v893
    %v1227 = vunpack.c.h.b16 %v893
    %v1228 = vunpack.c.l.b16 %v894
    %v1229 = vunpack.c.h.b16 %v894
    %v1230 = vunpack.c.l.b16 %v895
    %v1231 = vunpack.c.h.b16 %v895
    %v1232 = vunpack.c.l.b16 %v896
    %v1233 = vunpack.c.h.b16 %v896
    %v1234 = vunpack.c.l.b16 %v897
    %v1235 = vunpack.c.h.b16 %v897
    %v1236 = vunpack.c.l.b16 %v898
    %v1237 = vunpack.c.h.b16 %v898
    %v1238 = vunpack.c.l.b16 %v899
    %v1239 = vunpack.c.h.b16 %v899
    %v1240 = vunpack.c.l.b16 %v900
    %v1241 = vunpack.c.h.b16 %v900
    %v1242 = vunpack.c.l.b16 %v901
    %v1243 = vunpack.c.h.b16 %v901
    %v1244 = vunpack.c.l.b16 %v902
    %v1245 = vunpack.c.h.b16 %v902
    %v1246 = vunpack.c.l.b16 %v903
    %v1247 = vunpack.c.h.b16 %v903
    %v1248 = vunpack.c.l.b16 %v904
    %v1249 = vunpack.c.h.b16 %v904
    %v1250 = vunpack.c.l.b16 %v905
    %v1251 = vunpack.c.h.b16 %v905
    %v1252 = vunpack.c.l.b16 %v906
    %v1253 = vunpack.c.h.b16 %v906
    %v1254 = vunpack.c.l.b16 %v907
    %v1255 = vunpack.c.h.b16 %v907
    %v1256 = vunpack.c.l.b16 %v908
    %v1257 = vunpack.c.h.b16 %v908
    %v1258 = vunpack.c.l.b16 %v909
    %v1259 = vunpack.c.h.b16 %v909
    %v1260 = vunpack.c.l.b16 %v910
    %v1261 = vunpack.c.h.b16 %v910
    %v1262 = vunpack.c.l.b16 %v911
    %v1263 = vunpack.c.h.b16 %v911
    %v1264 = vunpack.c.l.b16 %v912
    %v1265 = vunpack.c.h.b16 %v912
    %v1266 = vunpack.c.l.b16 %v913
    %v1267 = vunpack.c.h.b16 %v913
    %v1268 = vunpack.c.l.b16 %v914
    %v1269 = vunpack.c.h.b16 %v914
    %v1270 = vunpack.c.l.b16 %v915
    %v1271 = vunpack.c.h.b16 %v915
    %v1272 = vunpack.c.l.b16 %v916
    %v1273 = vunpack.c.h.b16 %v916
    %v1274 = vunpack.c.l.b16 %v917
    %v1275 = vunpack.c.h.b16 %v917
    %v1276 = vunpack.c.l.b16 %v918
    %v1277 = vunpack.c.h.b16 %v918
    %v1278 = vunpack.c.l.b16 %v919
    %v1279 = vunpack.c.h.b16 %v919
    %v1280 = vunpack.c.l.b16 %v920
    %v1281 = vunpack.c.h.b16 %v920
    %v1282 = vunpack.c.l.b16 %v921
    %v1283 = vunpack.c.h.b16 %v921
    %v1284 = vunpack.c.l.b16 %v922
    %v1285 = vunpack.c.h.b16 %v922
    %v1286 = vunpack.c.l.b16 %v923
    %v1287 = vunpack.c.h.b16 %v923
    %v1288 = vunpack.c.l.b16 %v924
    %v1289 = vunpack.c.h.b16 %v924
    %v1290 = vunpack.c.l.b16 %v925
    %v1291 = vunpack.c.h.b16 %v925
    %v1292 = vunpack.c.l.b16 %v926
    %v1293 = vunpack.c.h.b16 %v926
    %v1294 = vunpack.c.l.b16 %v927
    %v1295 = vunpack.c.h.b16 %v927
    %v1296 = vunpack.c.l.b16 %v928
    %v1297 = vunpack.c.h.b16 %v928
    %v1298 = vunpack.c.l.b16 %v929
    %v1299 = vunpack.c.h.b16 %v929
    %v1300 = vunpack.c.l.b16 %v930
    %v1301 = vunpack.c.h.b16 %v930
    %v1302 = vunpack.c.l.b16 %v931
    %v1303 = vunpack.c.h.b16 %v931
    %v1304 = vunpack.c.l.b16 %v932
    %v1305 = vunpack.c.h.b16 %v932
    %v1306 = vunpack.c.l.b16 %v933
    %v1307 = vunpack.c.h.b16 %v933
    %v1308 = vunpack.c.l.b16 %v934
    %v1309 = vunpack.c.h.b16 %v934
    %v1310 = vunpack.c.l.b16 %v935
    %v1311 = vunpack.c.h.b16 %v935
    %v1312 = vunpack.c.l.b16 %v936
    %v1313 = vunpack.c.h.b16 %v936
    %v1314 = vunpack.c.l.b16 %v937
    %v1315 = vunpack.c.h.b16 %v937
    %v1316 = vunpack.c.l.b16 %v938
    %v1317 = vunpack.c.h.b16 %v938
    %v1318 = vunpack.c.l.b16 %v939
    %v1319 = vunpack.c.h.b16 %v939
    %v1320 = vunpack.c.l.b16 %v940
    %v1321 = vunpack.c.h.b16 %v940
    %v1322 = vunpack.c.l.b16 %v941
    %v1323 = vunpack.c.h.b16 %v941
    %v1324 = vunpack.c.l.b16 %v942
    %v1325 = vunpack.c.h.b16 %v942
    %v1326 = vunpack.c.l.b16 %v943
    %v1327 = vunpack.c.h.b16 %v943
    %v1328 = vunpack.c.l.b16 %v944
    %v1329 = vunpack.c.h.b16 %v944
    %v1330 = vunpack.c.l.b16 %v945
    %v1331 = vunpack.c.h.b16 %v945
    %v1332 = vunpack.c.l.b16 %v946
    %v1333 = vunpack.c.h.b16 %v946
    %v1334 = vunpack.c.l.b16 %v947
    %v1335 = vunpack.c.h.b16 %v947
    %v1336 = vunpack.c.l.b16 %v948
    %v1337 = vunpack.c.h.b16 %v948
    %v1338 = vunpack.c.l.b16 %v949
    %v1339 = vunpack.c.h.b16 %v949
    %v1340 = vunpack.c.l.b16 %v950
    %v1341 = vunpack.c.h.b16 %v950
    %v1342 = vunpack.c.l.b16 %v951
    %v1343 = vunpack.c.h.b16 %v951
    %v1344 = vunpack.c.l.b16 %v952
    %v1345 = vunpack.c.h.b16 %v952
    %v1346 = vunpack.c.l.b16 %v953
    %v1347 = vunpack.c.h.b16 %v953
    %v1348 = vunpack.c.l.b16 %v954
    %v1349 = vunpack.c.h.b16 %v954
    %v1350 = vunpack.c.l.b16 %v955
    %v1351 = vunpack.c.h.b16 %v955
    %v1352 = vunpack.c.l.b16 %v956
    %v1353 = vunpack.c.h.b16 %v956
    %v1354 = vunpack.c.l.b16 %v957
    %v1355 = vunpack.c.h.b16 %v957
    %v1356 = vunpack.c.l.b16 %v958
    %v1357 = vunpack.c.h.b16 %v958
    %v1358 = vunpack.c.l.b16 %v959
    %v1359 = vunpack.c.h.b16 %v959
    %v1360 = vunpack.c.l.b16 %v960
    %v1361 = vunpack.c.h.b16 %v960
    %v1362 = vunpack.c.l.b16 %v961
    %v1363 = vunpack.c.h.b16 %v961
    %v1364 = vunpack.c.l.b16 %v962
    %v1365 = vunpack.c.h.b16 %v962
    %v1366 = vunpack.c.l.b16 %v963
    %v1367 = vunpack.c.h.b16 %v963
    %v1368 = vunpack.c.l.b16 %v964
    %v1369 = vunpack.c.h.b16 %v964
    %v1370 = vunpack.c.l.b16 %v965
    %v1371 = vunpack.c.h.b16 %v965
    %v1372 = vunpack.c.l.b16 %v966
    %v1373 = vunpack.c.h.b16 %v966
    %v1374 = vunpack.c.l.b16 %v967
    %v1375 = vunpack.c.h.b16 %v967
    %v1376 = vunpack.c.l.b16 %v968
    %v1377 = vunpack.c.h.b16 %v968
    %v1378 = vunpack.c.l.b16 %v969
    %v1379 = vunpack.c.h.b16 %v969
    %v1380 = vunpack.c.l.b16 %v970
    %v1381 = vunpack.c.h.b16 %v970
    %v1382 = vunpack.c.l.b16 %v971
    %v1383 = vunpack.c.h.b16 %v971
    %v1384 = vunpack.c.l.b16 %v972
    %v1385 = vunpack.c.h.b16 %v972
    %v1386 = vunpack.c.l.b16 %v973
    %v1387 = vunpack.c.h.b16 %v973
    %v1388 = vunpack.c.l.b16 %v974
    %v1389 = vunpack.c.h.b16 %v974
    %v1390 = vunpack.c.l.b16 %v975
    %v1391 = vunpack.c.h.b16 %v975
    %v1392 = vunpack.c.l.b16 %v976
    %v1393 = vunpack.c.h.b16 %v976
    %v1394 = vunpack.c.l.b16 %v977
    %v1395 = vunpack.c.h.b16 %v977
    %v1396 = vunpack.c.l.b16 %v978
    %v1397 = vunpack.c.h.b16 %v978
    %v1398 = vunpack.c.l.b16 %v979
    %v1399 = vunpack.c.h.b16 %v979
    %v1400 = vunpack.c.l.b16 %v980
    %v1401 = vunpack.c.h.b16 %v980
    %v1402 = vunpack.c.l.b16 %v981
    %v1403 = vunpack.c.h.b16 %v981
    %v1404 = vunpack.c.l.b16 %v982
    %v1405 = vunpack.c.h.b16 %v982
    %v1406 = vunpack.c.l.b16 %v983
    %v1407 = vunpack.c.h.b16 %v983
    %v1408 = vunpack.c.l.b16 %v984
    %v1409 = vunpack.c.h.b16 %v984
    %v1410 = vunpack.c.l.b16 %v985
    %v1411 = vunpack.c.h.b16 %v985
    %v1412 = vunpack.c.l.b16 %v986
    %v1413 = vunpack.c.h.b16 %v986
    %v1414 = vunpack.c.l.b16 %v987
    %v1415 = vunpack.c.h.b16 %v987
    %v1416 = vunpack.c.l.b16 %v988
    %v1417 = vunpack.c.h.b16 %v988
    %v1418 = vunpack.c.l.b16 %v989
    %v1419 = vunpack.c.h.b16 %v989
    %v1420 = vunpack.c.l.b16 %v990
    %v1421 = vunpack.c.h.b16 %v990
    %v1422 = vunpack.c.l.b16 %v991
    %v1423 = vunpack.c.h.b16 %v991
    %v1424 = vunpack.c.l.b16 %v992
    %v1425 = vunpack.c.h.b16 %v992
    %v1426 = vunpack.c.l.b16 %v993
    %v1427 = vunpack.c.h.b16 %v993
    %v1428 = vunpack.c.l.b16 %v994
    %v1429 = vunpack.c.h.b16 %v994
    %v1430 = vunpack.c.l.b16 %v995
    %v1431 = vunpack.c.h.b16 %v995
    %v1432 = vunpack.c.l.b16 %v996
    %v1433 = vunpack.c.h.b16 %v996
    %v1434 = vunpack.c.l.b16 %v997
    %v1435 = vunpack.c.h.b16 %v997
    %v1436 = vunpack.c.l.b16 %v998
    %v1437 = vunpack.c.h.b16 %v998
    %v1438 = vunpack.c.l.b16 %v999
    %v1439 = vunpack.c.h.b16 %v999
    %v1440 = vunpack.c.l.b16 %v1000
    %v1441 = vunpack.c.h.b16 %v1000
    %v1442 = vunpack.c.l.b16 %v1001
    %v1443 = vunpack.c.h.b16 %v1001
    %v1444 = vunpack.c.l.b16 %v1002
    %v1445 = vunpack.c.h.b16 %v1002
    %v1446 = vunpack.c.l.b16 %v1003
    %v1447 = vunpack.c.h.b16 %v1003
    %v1448 = vpack.c.b16 %v1162, %v1160
    %v1449 = vpack.c.b16 %v1163, %v1161
    %v1450 = vpack.c.b16 %v1166, %v1164
    %v1451 = vpack.c.b16 %v1167, %v1165
    %v1452 = vpack.c.b16 %v1170, %v1168
    %v1453 = vpack.c.b16 %v1171, %v1169
    %v1454 = vpack.c.b16 %v1174, %v1172
    %v1455 = vpack.c.b16 %v1175, %v1173
    %v1456 = vpack.c.b16 %v1178, %v1176
    %v1457 = vpack.c.b16 %v1179, %v1177
    %v1458 = vpack.c.b16 %v1182, %v1180
    %v1459 = vpack.c.b16 %v1183, %v1181
    %v1460 = vpack.c.b16 %v1186, %v1184
    %v1461 = vpack.c.b16 %v1187, %v1185
    %v1462 = vpack.c.b16 %v1190, %v1188
    %v1463 = vpack.c.b16 %v1191, %v1189
    %v1464 = vpack.c.b16 %v1194, %v1192
    %v1465 = vpack.c.b16 %v1195, %v1193
    %v1466 = vpack.c.b16 %v1198, %v1196
    %v1467 = vpack.c.b16 %v1199, %v1197
    %v1468 = vpack.c.b16 %v1202, %v1200
    %v1469 = vpack.c.b16 %v1203, %v1201
    %v1470 = vpack.c.b16 %v1206, %v1204
    %v1471 = vpack.c.b16 %v1207, %v1205
    %v1472 = vpack.c.b16 %v1210, %v1208
    %v1473 = vpack.c.b16 %v1211, %v1209
    %v1474 = vpack.c.b16 %v1214, %v1212
    %v1475 = vpack.c.b16 %v1215, %v1213
    %v1476 = vpack.c.b16 %v1218, %v1216
    %v1477 = vpack.c.b16 %v1219, %v1217
    %v1478 = vpack.c.b16 %v1222, %v1220
    %v1479 = vpack.c.b16 %v1223, %v1221
    %v1480 = vpack.c.b16 %v1226, %v1224
    %v1481 = vpack.c.b16 %v1227, %v1225
    %v1482 = vpack.c.b16 %v1230, %v1228
    %v1483 = vpack.c.b16 %v1231, %v1229
    %v1484 = vpack.c.b16 %v1234, %v1232
    %v1485 = vpack.c.b16 %v1235, %v1233
    %v1486 = vpack.c.b16 %v1238, %v1236
    %v1487 = vpack.c.b16 %v1239, %v1237
    %v1488 = vpack.c.b16 %v1242, %v1240
    %v1489 = vpack.c.b16 %v1243, %v1241
    %v1490 = vpack.c.b16 %v1246, %v1244
    %v1491 = vpack.c.b16 %v1247, %v1245
    %v1492 = vpack.c.b16 %v1250, %v1248
    %v1493 = vpack.c.b16 %v1251, %v1249
    %v1494 = vpack.c.b16 %v1254, %v1252
    %v1495 = vpack.c.b16 %v1255, %v1253
    %v1496 = vpack.c.b16 %v1258, %v1256
    %v1497 = vpack.c.b16 %v1259, %v1257
    %v1498 = vpack.c.b16 %v1262, %v1260
    %v1499 = vpack.c.b16 %v1263, %v1261
    %v1500 = vpack.c.b16 %v1266, %v1264
    %v1501 = vpack.c.b16 %v1267, %v1265
    %v1502 = vpack.c.b16 %v1270, %v1268
    %v1503 = vpack.c.b16 %v1271, %v1269
    %v1504 = vpack.c.b16 %v1274, %v1272
    %v1505 = vpack.c.b16 %v1275, %v1273
    %v1506 = vpack.c.b16 %v1278, %v1276
    %v1507 = vpack.c.b16 %v1279, %v1277
    %v1508 = vpack.c.b16 %v1282, %v1280
    %v1509 = vpack.c.b16 %v1283, %v1281
    %v1510 = vpack.c.b16 %v1286, %v1284
    %v1511 = vpack.c.b16 %v1287, %v1285
    %v1512 = vpack.c.b16 %v1290, %v1288
    %v1513 = vpack.c.b16 %v1291, %v1289
    %v1514 = vpack.c.b16 %v1294, %v1292
    %v1515 = vpack.c.b16 %v1295, %v1293
    %v1516 = vpack.c.b16 %v1298, %v1296
    %v1517 = vpack.c.b16 %v1299, %v1297
    %v1518 = vpack.c.b16 %v1302, %v1300
    %v1519 = vpack.c.b16 %v1303, %v1301
    %v1520 = vpack.c.b16 %v1306, %v1304
    %v1521 = vpack.c.b16 %v1307, %v1305
    %v1522 = vpack.c.b16 %v1310, %v1308
    %v1523 = vpack.c.b16 %v1311, %v1309
    %v1524 = vpack.c.b16 %v1314, %v1312
    %v1525 = vpack.c.b16 %v1315, %v1313
    %v1526 = vpack.c.b16 %v1318, %v1316
    %v1527 = vpack.c.b16 %v1319, %v1317
    %v1528 = vpack.c.b16 %v1322, %v1320
    %v1529 = vpack.c.b16 %v1323, %v1321
    %v1530 = vpack.c.b16 %v1326, %v1324
    %v1531 = vpack.c.b16 %v1327, %v1325
    %v1532 = vpack.c.b16 %v1330, %v1328
    %v1533 = vpack.c.b16 %v1331, %v1329
    %v1534 = vpack.c.b16 %v1334, %v1332
    %v1535 = vpack.c.b16 %v1335, %v1333
    %v1536 = vpack.c.b16 %v1338, %v1336
    %v1537 = vpack.c.b16 %v1339, %v1337
    %v1538 = vpack.c.b16 %v1342, %v1340
    %v1539 = vpack.c.b16 %v1343, %v1341
    %v1540 = vpack.c.b16 %v1346, %v1344
    %v1541 = vpack.c.b16 %v1347, %v1345
    %v1542 = vpack.c.b16 %v1350, %v1348
    %v1543 = vpack.c.b16 %v1351, %v1349
    %v1544 = vpack.c.b16 %v1354, %v1352
    %v1545 = vpack.c.b16 %v1355, %v1353
    %v1546 = vpack.c.b16 %v1358, %v1356
    %v1547 = vpack.c.b16 %v1359, %v1357
    %v1548 = vpack.c.b16 %v1362, %v1360
    %v1549 = vpack.c.b16 %v1363, %v1361
    %v1550 = vpack.c.b16 %v1366, %v1364
    %v1551 = vpack.c.b16 %v1367, %v1365
    %v1552 = vpack.c.b16 %v1370, %v1368
    %v1553 = vpack.c.b16 %v1371, %v1369
    %v1554 = vpack.c.b16 %v1374, %v1372
    %v1555 = vpack.c.b16 %v1375, %v1373
    %v1556 = vpack.c.b16 %v1378, %v1376
    %v1557 = vpack.c.b16 %v1379, %v1377
    %v1558 = vpack.c.b16 %v1382, %v1380
    %v1559 = vpack.c.b16 %v1383, %v1381
    %v1560 = vpack.c.b16 %v1386, %v1384
    %v1561 = vpack.c.b16 %v1387, %v1385
    %v1562 = vpack.c.b16 %v1390, %v1388
    %v1563 = vpack.c.b16 %v1391, %v1389
    %v1564 = vpack.c.b16 %v1394, %v1392
    %v1565 = vpack.c.b16 %v1395, %v1393
    %v1566 = vpack.c.b16 %v1398, %v1396
    %v1567 = vpack.c.b16 %v1399, %v1397
    %v1568 = vpack.c.b16 %v1402, %v1400
    %v1569 = vpack.c.b16 %v1403, %v1401
    %v1570 = vpack.c.b16 %v1406, %v1404
    %v1571 = vpack.c.b16 %v1407, %v1405
    %v1572 = vpack.c.b16 %v1410, %v1408
    %v1573 = vpack.c.b16 %v1411, %v1409
    %v1574 = vpack.c.b16 %v1414, %v1412
    %v1575 = vpack.c.b16 %v1415, %v1413
    %v1576 = vpack.c.b16 %v1418, %v1416
    %v1577 = vpack.c.b16 %v1419, %v1417
    %v1578 = vpack.c.b16 %v1422, %v1420
    %v1579 = vpack.c.b16 %v1423, %v1421
    %v1580 = vpack.c.b16 %v1426, %v1424
    %v1581 = vpack.c.b16 %v1427, %v1425
    %v1582 = vpack.c.b16 %v1430, %v1428
    %v1583 = vpack.c.b16 %v1431, %v1429
    %v1584 = vpack.c.b16 %v1434, %v1432
    %v1585 = vpack.c.b16 %v1435, %v1433
    %v1586 = vpack.c.b16 %v1438, %v1436
    %v1587 = vpack.c.b16 %v1439, %v1437
    %v1588 = vpack.c.b16 %v1442, %v1440
    %v1589 = vpack.c.b16 %v1443, %v1441
    %v1590 = vpack.c.b16 %v1446, %v1444
    %v1591 = vpack.c.b16 %v1447, %v1445
    %1736 = vmatprep.subr.bf16.mxu0 %v1449
    %1737 = vmatpush1.bf16.msra.mxu0 %v1448
    %1738 = vmatprep.subr.bf16.mxu0 %v1451
    %1739 = vmatpush1.bf16.msra.mxu0 %v1450
    %1740 = vmatprep.subr.bf16.mxu0 %v1453
    %1741 = vmatpush1.bf16.msra.mxu0 %v1452
    %1742 = vmatprep.subr.bf16.mxu0 %v1455
    %1743 = vmatpush1.bf16.msra.mxu0 %v1454
    %1744 = vmatprep.subr.bf16.mxu0 %v1457
    %1745 = vmatpush1.bf16.msra.mxu0 %v1456
    %1746 = vmatprep.subr.bf16.mxu0 %v1459
    %1747 = vmatpush1.bf16.msra.mxu0 %v1458
    %1748 = vmatprep.subr.bf16.mxu0 %v1461
    %1749 = vmatpush1.bf16.msra.mxu0 %v1460
    %1750 = vmatprep.subr.bf16.mxu0 %v1463
    %1751 = vmatpush1.bf16.msra.mxu0 %v1462
    %1752 = vmatprep.subr.bf16.mxu0 %v1465
    %1753 = vmatpush1.bf16.msra.mxu0 %v1464
    %1754 = vmatprep.subr.bf16.mxu0 %v1467
    %1755 = vmatpush1.bf16.msra.mxu0 %v1466
    %1756 = vmatprep.subr.bf16.mxu0 %v1469
    %1757 = vmatpush1.bf16.msra.mxu0 %v1468
    %1758 = vmatprep.subr.bf16.mxu0 %v1471
    %1759 = vmatpush1.bf16.msra.mxu0 %v1470
    %1760 = vmatprep.subr.bf16.mxu0 %v1473
    %1761 = vmatpush1.bf16.msra.mxu0 %v1472
    %1762 = vmatprep.subr.bf16.mxu0 %v1475
    %1763 = vmatpush1.bf16.msra.mxu0 %v1474
    %1764 = vmatprep.subr.bf16.mxu0 %v1477
    %1765 = vmatpush1.bf16.msra.mxu0 %v1476
    %1766 = vmatprep.subr.bf16.mxu0 %v1479
    %1767 = vmatpush1.bf16.msra.mxu0 %v1478
    %1768 = vmatprep.mubr.bf16.mxu0 %v852
    %1769 = vmatmul.mubr.bf16.gmra.mrb[0].mxu0 %v851
    %v1770 = vpop.f32.mrb[0].mxu0
    %v1771 = vadd.f32 %v1009, %v1770
    %v1772 = vpop.f32.mrb[0].mxu0
    %v1773 = vadd.f32 %v1013, %v1772
    %v1774 = vpop.f32.mrb[0].mxu0
    %v1775 = vadd.f32 %v1009, %v1774
    %v1776 = vpop.f32.mrb[0].mxu0
    %v1777 = vadd.f32 %v1013, %v1776
    %1778 = vdwg.mxu0
    %1779 = vmatprep.subr.bf16.mxu0 %v1481
    %1780 = vmatpush1.bf16.msra.mxu0 %v1480
    %1781 = vmatprep.subr.bf16.mxu0 %v1483
    %1782 = vmatpush1.bf16.msra.mxu0 %v1482
    %1783 = vmatprep.subr.bf16.mxu0 %v1485
    %1784 = vmatpush1.bf16.msra.mxu0 %v1484
    %1785 = vmatprep.subr.bf16.mxu0 %v1487
    %1786 = vmatpush1.bf16.msra.mxu0 %v1486
    %1787 = vmatprep.subr.bf16.mxu0 %v1489
    %1788 = vmatpush1.bf16.msra.mxu0 %v1488
    %1789 = vmatprep.subr.bf16.mxu0 %v1491
    %1790 = vmatpush1.bf16.msra.mxu0 %v1490
    %1791 = vmatprep.subr.bf16.mxu0 %v1493
    %1792 = vmatpush1.bf16.msra.mxu0 %v1492
    %1793 = vmatprep.subr.bf16.mxu0 %v1495
    %1794 = vmatpush1.bf16.msra.mxu0 %v1494
    %1795 = vmatprep.subr.bf16.mxu0 %v1497
    %1796 = vmatpush1.bf16.msra.mxu0 %v1496
    %1797 = vmatprep.subr.bf16.mxu0 %v1499
    %1798 = vmatpush1.bf16.msra.mxu0 %v1498
    %1799 = vmatprep.subr.bf16.mxu0 %v1501
    %1800 = vmatpush1.bf16.msra.mxu0 %v1500
    %1801 = vmatprep.subr.bf16.mxu0 %v1503
    %1802 = vmatpush1.bf16.msra.mxu0 %v1502
    %1803 = vmatprep.subr.bf16.mxu0 %v1505
    %1804 = vmatpush1.bf16.msra.mxu0 %v1504
    %1805 = vmatprep.subr.bf16.mxu0 %v1507
    %1806 = vmatpush1.bf16.msra.mxu0 %v1506
    %1807 = vmatprep.subr.bf16.mxu0 %v1509
    %1808 = vmatpush1.bf16.msra.mxu0 %v1508
    %1809 = vmatprep.subr.bf16.mxu0 %v1511
    %1810 = vmatpush1.bf16.msra.mxu0 %v1510
    %1811 = vmatprep.mubr.bf16.mxu0 %v854
    %1812 = vmatmul.mubr.bf16.gmra.mrb[0].mxu0 %v853
    %v1813 = vpop.f32.mrb[0].mxu0
    %v1814 = vadd.f32 %v1771, %v1813
    %v1815 = vpop.f32.mrb[0].mxu0
    %v1816 = vadd.f32 %v1773, %v1815
    %v1817 = vpop.f32.mrb[0].mxu0
    %v1818 = vadd.f32 %v1775, %v1817
    %v1819 = vpop.f32.mrb[0].mxu0
    %v1820 = vadd.f32 %v1777, %v1819
    %1821 = vdwg.mxu0
    %1822 = vmatprep.subr.bf16.mxu0 %v1513
    %1823 = vmatpush1.bf16.msra.mxu0 %v1512
    %1824 = vmatprep.subr.bf16.mxu0 %v1515
    %1825 = vmatpush1.bf16.msra.mxu0 %v1514
    %1826 = vmatprep.subr.bf16.mxu0 %v1517
    %1827 = vmatpush1.bf16.msra.mxu0 %v1516
    %1828 = vmatprep.subr.bf16.mxu0 %v1519
    %1829 = vmatpush1.bf16.msra.mxu0 %v1518
    %1830 = vmatprep.subr.bf16.mxu0 %v1521
    %1831 = vmatpush1.bf16.msra.mxu0 %v1520
    %1832 = vmatprep.subr.bf16.mxu0 %v1523
    %1833 = vmatpush1.bf16.msra.mxu0 %v1522
    %1834 = vmatprep.subr.bf16.mxu0 %v1525
    %1835 = vmatpush1.bf16.msra.mxu0 %v1524
    %1836 = vmatprep.subr.bf16.mxu0 %v1527
    %1837 = vmatpush1.bf16.msra.mxu0 %v1526
    %1838 = vmatprep.subr.bf16.mxu0 %v1529
    %1839 = vmatpush1.bf16.msra.mxu0 %v1528
    %1840 = vmatprep.subr.bf16.mxu0 %v1531
    %1841 = vmatpush1.bf16.msra.mxu0 %v1530
    %1842 = vmatprep.subr.bf16.mxu0 %v1533
    %1843 = vmatpush1.bf16.msra.mxu0 %v1532
    %1844 = vmatprep.subr.bf16.mxu0 %v1535
    %1845 = vmatpush1.bf16.msra.mxu0 %v1534
    %1846 = vmatprep.subr.bf16.mxu0 %v1537
    %1847 = vmatpush1.bf16.msra.mxu0 %v1536
    %1848 = vmatprep.subr.bf16.mxu0 %v1539
    %1849 = vmatpush1.bf16.msra.mxu0 %v1538
    %1850 = vmatprep.subr.bf16.mxu0 %v1541
    %1851 = vmatpush1.bf16.msra.mxu0 %v1540
    %1852 = vmatprep.subr.bf16.mxu0 %v1543
    %1853 = vmatpush1.bf16.msra.mxu0 %v1542
    %1854 = vmatprep.mubr.bf16.mxu0 %v856
    %1855 = vmatmul.mubr.bf16.gmra.mrb[0].mxu0 %v855
    %v1856 = vpop.f32.mrb[0].mxu0
    %v1857 = vadd.f32 %v1814, %v1856
    %v1858 = vpop.f32.mrb[0].mxu0
    %v1859 = vadd.f32 %v1816, %v1858
    %v1860 = vpop.f32.mrb[0].mxu0
    %v1861 = vadd.f32 %v1818, %v1860
    %v1862 = vpop.f32.mrb[0].mxu0
    %v1863 = vadd.f32 %v1820, %v1862
    %1864 = vdwg.mxu0
    %1865 = vmatprep.subr.bf16.mxu0 %v1545
    %1866 = vmatpush1.bf16.msra.mxu0 %v1544
    %1867 = vmatprep.subr.bf16.mxu0 %v1547
    %1868 = vmatpush1.bf16.msra.mxu0 %v1546
    %1869 = vmatprep.subr.bf16.mxu0 %v1549
    %1870 = vmatpush1.bf16.msra.mxu0 %v1548
    %1871 = vmatprep.subr.bf16.mxu0 %v1551
    %1872 = vmatpush1.bf16.msra.mxu0 %v1550
    %1873 = vmatprep.subr.bf16.mxu0 %v1553
    %1874 = vmatpush1.bf16.msra.mxu0 %v1552
    %1875 = vmatprep.subr.bf16.mxu0 %v1555
    %1876 = vmatpush1.bf16.msra.mxu0 %v1554
    %1877 = vmatprep.subr.bf16.mxu0 %v1557
    %1878 = vmatpush1.bf16.msra.mxu0 %v1556
    %1879 = vmatprep.subr.bf16.mxu0 %v1559
    %1880 = vmatpush1.bf16.msra.mxu0 %v1558
    %1881 = vmatprep.subr.bf16.mxu0 %v1561
    %1882 = vmatpush1.bf16.msra.mxu0 %v1560
    %1883 = vmatprep.subr.bf16.mxu0 %v1563
    %1884 = vmatpush1.bf16.msra.mxu0 %v1562
    %1885 = vmatprep.subr.bf16.mxu0 %v1565
    %1886 = vmatpush1.bf16.msra.mxu0 %v1564
    %1887 = vmatprep.subr.bf16.mxu0 %v1567
    %1888 = vmatpush1.bf16.msra.mxu0 %v1566
    %1889 = vmatprep.subr.bf16.mxu0 %v1569
    %1890 = vmatpush1.bf16.msra.mxu0 %v1568
    %1891 = vmatprep.subr.bf16.mxu0 %v1571
    %1892 = vmatpush1.bf16.msra.mxu0 %v1570
    %1893 = vmatprep.subr.bf16.mxu0 %v1573
    %1894 = vmatpush1.bf16.msra.mxu0 %v1572
    %1895 = vmatprep.subr.bf16.mxu0 %v1575
    %1896 = vmatpush1.bf16.msra.mxu0 %v1574
    %1897 = vmatprep.mubr.bf16.mxu0 %v858
    %1898 = vmatmul.mubr.bf16.gmra.mrb[0].mxu0 %v857
    %v1899 = vpop.f32.mrb[0].mxu0
    %v1900 = vadd.f32 %v1857, %v1899
    %v1901 = vpop.f32.mrb[0].mxu0
    %v1902 = vadd.f32 %v1859, %v1901
    %v1903 = vpop.f32.mrb[0].mxu0
    %v1904 = vadd.f32 %v1861, %v1903
    %v1905 = vpop.f32.mrb[0].mxu0
    %v1906 = vadd.f32 %v1863, %v1905
    %1907 = vdwg.mxu0
    %1908 = vmatprep.subr.bf16.mxu0 %v1577
    %1909 = vmatpush1.bf16.msra.mxu0 %v1576
    %1910 = vmatprep.subr.bf16.mxu0 %v1579
    %1911 = vmatpush1.bf16.msra.mxu0 %v1578
    %1912 = vmatprep.subr.bf16.mxu0 %v1581
    %1913 = vmatpush1.bf16.msra.mxu0 %v1580
    %1914 = vmatprep.subr.bf16.mxu0 %v1583
    %1915 = vmatpush1.bf16.msra.mxu0 %v1582
    %1916 = vmatprep.subr.bf16.mxu0 %v1585
    %1917 = vmatpush1.bf16.msra.mxu0 %v1584
    %1918 = vmatprep.subr.bf16.mxu0 %v1587
    %1919 = vmatpush1.bf16.msra.mxu0 %v1586
    %1920 = vmatprep.subr.bf16.mxu0 %v1589
    %1921 = vmatpush1.bf16.msra.mxu0 %v1588
    %1922 = vmatprep.subr.bf16.mxu0 %v1591
    %1923 = vmatpush1.bf16.msra.mxu0 %v1590
    %1924 = vmatprep.subr.bf16.mxu0 0
    %1925 = vmatpush1.bf16.msra.mxu0 0
    %1926 = vmatprep.subr.bf16.mxu0 0
    %1927 = vmatpush1.bf16.msra.mxu0 0
    %1928 = vmatprep.subr.bf16.mxu0 0
    %1929 = vmatpush1.bf16.msra.mxu0 0
    %1930 = vmatprep.subr.bf16.mxu0 0
    %1931 = vmatpush1.bf16.msra.mxu0 0
    %1932 = vmatprep.subr.bf16.mxu0 0
    %1933 = vmatpush1.bf16.msra.mxu0 0
    %1934 = vmatprep.subr.bf16.mxu0 0
    %1935 = vmatpush1.bf16.msra.mxu0 0
    %1936 = vmatprep.subr.bf16.mxu0 0
    %1937 = vmatpush1.bf16.msra.mxu0 0
    %1938 = vmatprep.subr.bf16.mxu0 0
    %1939 = vmatpush1.bf16.msra.mxu0 0
    %1940 = vmatprep.mubr.bf16.mxu0 0
    %1941 = vmatmul.mubr.bf16.gmra.mrb[0].mxu0 %v859
    %v1942 = vpop.f32.mrb[0].mxu0
    %v1943 = vadd.f32 %v1900, %v1942
    %v1944 = vpop.f32.mrb[0].mxu0
    %v1945 = vadd.f32 %v1902, %v1944
    %v1946 = vpop.f32.mrb[0].mxu0
    %v1947 = vadd.f32 %v1904, %v1946
    %v1948 = vpop.f32.mrb[0].mxu0
    %v1949 = vadd.f32 %v1906, %v1948
    %1950 = vdwg.mxu0
    %v1951 = vmax.f32 %v1943, 0.0
    %v1952 = vmax.f32 %v1945, 0.0
    %v1953 = vmax.f32 %v1947, 0.0
    %v1954 = vmax.f32 %v1949, 0.0
    %v1959 = vrot.slane %v1951, 7
    %v1960 = vrot.slane %v1952, 7
    %v1961 = vrot.slane %v1953, 7
    %v1962 = vsel %vm121, %v1959, %v1961
    %v1963 = vrot.slane %v1954, 7
    %v1964 = vsel %vm121, %v1960, %v1963
    %v1969 = vsel %vm121, 0.0, %v1959
    %v1970 = vsel %vm121, 0.0, %v1960
    %v1971 = vrot.slane %v1951, 1
    %v1972 = vrot.slane %v1953, 1
    %v1973 = vsel %vm128, %v1971, %v1972
    %v1974 = vrot.slane %v1952, 1
    %v1975 = vrot.slane %v1954, 1
    %v1976 = vsel %vm128, %v1974, %v1975
    %v1981 = vsel %vm121, %v1972, 0.0
    %v1982 = vsel %vm121, %v1975, 0.0
    %v1983 = vpack.c.bf16 %v1962, %v1969
    %v1984 = vpack.c.bf16 %v1964, %v1970
    %v1985 = vpack.c.bf16 %v1953, %v1951
    %v1986 = vpack.c.bf16 %v1954, %v1952
    %v1987 = vpack.c.bf16 %v1981, %v1973
    %v1988 = vpack.c.bf16 %v1982, %v1976
    %v1989 = vld [vmem:[%s6] sm:$0xff]
    %v1990 = vld [vmem:[%s6 + $0x8] sm:$0xff]
    %v1991 = vld [vmem:[%s6 + $0x10] sm:$0xff]
    %v1992 = vld [vmem:[%s6 + $0x18] sm:$0xff]
    %v1993 = vld [vmem:[%s6 + $0x20] sm:$0xff]
    %v1994 = vld [vmem:[%s6 + $0x28] sm:$0xff]
    %v1995 = vld [vmem:[%s6 + $0x30] sm:$0xff]
    %v1996 = vld [vmem:[%s6 + $0x38] sm:$0xff]
    %v1997 = vld [vmem:[%s6 + $0x40] sm:$0xff]
    %v1998 = vld [vmem:[%s6 + $0x48] sm:$0xff]
    %v1999 = vld [vmem:[%s6 + $0x50] sm:$0xff]
    %v2000 = vld [vmem:[%s6 + $0x58] sm:$0xff]
    %v2001 = vld [vmem:[%s6 + $0x60] sm:$0xff]
    %v2002 = vld [vmem:[%s6 + $0x68] sm:$0xff]
    %v2003 = vld [vmem:[%s6 + $0x70] sm:$0xff]
    %v2004 = vld [vmem:[%s6 + $0x78] sm:$0xff]
    %v2005 = vld [vmem:[%s6 + $0x80] sm:$0xff]
    %v2006 = vld [vmem:[%s6 + $0x88] sm:$0xff]
    %v2007 = vld [vmem:[%s6 + $0x90] sm:$0xff]
    %v2008 = vld [vmem:[%s6 + $0x98] sm:$0xff]
    %v2009 = vld [vmem:[%s6 + $0xa0] sm:$0xff]
    %v2010 = vld [vmem:[%s6 + $0xa8] sm:$0xff]
    %v2011 = vld [vmem:[%s6 + $0xb0] sm:$0xff]
    %v2012 = vld [vmem:[%s6 + $0xb8] sm:$0xff]
    %v2013 = vld [vmem:[%s6 + $0xc0] sm:$0xff]
    %v2014 = vld [vmem:[%s6 + $0xc8] sm:$0xff]
    %v2015 = vld [vmem:[%s6 + $0xd0] sm:$0xff]
    %v2016 = vld [vmem:[%s6 + $0xd8] sm:$0xff]
    %v2017 = vld [vmem:[%s6 + $0xe0] sm:$0xff]
    %v2018 = vld [vmem:[%s6 + $0xe8] sm:$0xff]
    %v2019 = vld [vmem:[%s6 + $0xf0] sm:$0xff]
    %v2020 = vld [vmem:[%s6 + $0xf8] sm:$0xff]
    %v2021 = vld [vmem:[%s6 + $0x100] sm:$0xff]
    %v2022 = vld [vmem:[%s6 + $0x108] sm:$0xff]
    %v2023 = vld [vmem:[%s6 + $0x110] sm:$0xff]
    %v2024 = vld [vmem:[%s6 + $0x118] sm:$0xff]
    %v2025 = vld [vmem:[%s6 + $0x120] sm:$0xff]
    %v2026 = vld [vmem:[%s6 + $0x128] sm:$0xff]
    %v2027 = vld [vmem:[%s6 + $0x130] sm:$0xff]
    %v2028 = vld [vmem:[%s6 + $0x138] sm:$0xff]
    %v2029 = vld [vmem:[%s6 + $0x140] sm:$0xff]
    %v2030 = vld [vmem:[%s6 + $0x148] sm:$0xff]
    %v2031 = vld [vmem:[%s6 + $0x150] sm:$0xff]
    %v2032 = vld [vmem:[%s6 + $0x158] sm:$0xff]
    %v2033 = vld [vmem:[%s6 + $0x160] sm:$0xff]
    %v2034 = vld [vmem:[%s6 + $0x168] sm:$0xff]
    %v2035 = vld [vmem:[%s6 + $0x170] sm:$0xff]
    %v2036 = vld [vmem:[%s6 + $0x178] sm:$0xff]
    %v2037 = vld [vmem:[%s6 + $0x180] sm:$0xff]
    %v2038 = vld [vmem:[%s6 + $0x188] sm:$0xff]
    %v2039 = vld [vmem:[%s6 + $0x190] sm:$0xff]
    %v2040 = vld [vmem:[%s6 + $0x198] sm:$0xff]
    %v2041 = vld [vmem:[%s6 + $0x1a0] sm:$0xff]
    %v2042 = vld [vmem:[%s6 + $0x1a8] sm:$0xff]
    %v2043 = vld [vmem:[%s6 + $0x1b0] sm:$0xff]
    %v2044 = vld [vmem:[%s6 + $0x1b8] sm:$0xff]
    %v2045 = vld [vmem:[%s6 + $0x1c0] sm:$0xff]
    %v2046 = vld [vmem:[%s6 + $0x1c8] sm:$0xff]
    %v2047 = vld [vmem:[%s6 + $0x1d0] sm:$0xff]
    %v2048 = vld [vmem:[%s6 + $0x1d8] sm:$0xff]
    %v2049 = vld [vmem:[%s6 + $0x1e0] sm:$0xff]
    %v2050 = vld [vmem:[%s6 + $0x1e8] sm:$0xff]
    %v2051 = vld [vmem:[%s6 + $0x1f0] sm:$0xff]
    %v2052 = vld [vmem:[%s6 + $0x1f8] sm:$0xff]
    %v2053 = vld [vmem:[%s6 + $0x200] sm:$0xff]
    %v2054 = vld [vmem:[%s6 + $0x208] sm:$0xff]
    %v2055 = vld [vmem:[%s6 + $0x210] sm:$0xff]
    %v2056 = vld [vmem:[%s6 + $0x218] sm:$0xff]
    %v2057 = vld [vmem:[%s6 + $0x220] sm:$0xff]
    %v2058 = vld [vmem:[%s6 + $0x228] sm:$0xff]
    %v2059 = vld [vmem:[%s6 + $0x230] sm:$0xff]
    %v2060 = vld [vmem:[%s6 + $0x238] sm:$0xff]
    %v2061 = vld [vmem:[%s6 + $0x240] sm:$0xff]
    %v2062 = vld [vmem:[%s6 + $0x248] sm:$0xff]
    %v2063 = vld [vmem:[%s6 + $0x250] sm:$0xff]
    %v2064 = vld [vmem:[%s6 + $0x258] sm:$0xff]
    %v2065 = vld [vmem:[%s6 + $0x260] sm:$0xff]
    %v2066 = vld [vmem:[%s6 + $0x268] sm:$0xff]
    %v2067 = vld [vmem:[%s6 + $0x270] sm:$0xff]
    %v2068 = vld [vmem:[%s6 + $0x278] sm:$0xff]
    %v2069 = vld [vmem:[%s6 + $0x280] sm:$0xff]
    %v2070 = vld [vmem:[%s6 + $0x288] sm:$0xff]
    %v2071 = vld [vmem:[%s6 + $0x290] sm:$0xff]
    %v2072 = vld [vmem:[%s6 + $0x298] sm:$0xff]
    %v2073 = vld [vmem:[%s6 + $0x2a0] sm:$0xff]
    %v2074 = vld [vmem:[%s6 + $0x2a8] sm:$0xff]
    %v2075 = vld [vmem:[%s6 + $0x2b0] sm:$0xff]
    %v2076 = vld [vmem:[%s6 + $0x2b8] sm:$0xff]
    %v2077 = vld [vmem:[%s6 + $0x2c0] sm:$0xff]
    %v2078 = vld [vmem:[%s6 + $0x2c8] sm:$0xff]
    %v2079 = vld [vmem:[%s6 + $0x2d0] sm:$0xff]
    %v2080 = vld [vmem:[%s6 + $0x2d8] sm:$0xff]
    %v2081 = vld [vmem:[%s6 + $0x2e0] sm:$0xff]
    %v2082 = vld [vmem:[%s6 + $0x2e8] sm:$0xff]
    %v2083 = vld [vmem:[%s6 + $0x2f0] sm:$0xff]
    %v2084 = vld [vmem:[%s6 + $0x2f8] sm:$0xff]
    %v2085 = vld [vmem:[#allocation6] sm:$0x3]
    %v2087 = vlaneseq
    %v2088 = vshrl.u32 %v2087, 7
    %v2089 = vsub.s32 0, %v2088
    %v2090 = vrot.slane %v2085, %v2089
    %v2091 = vlaneseq
    %v2092 = vshrl.u32 %v2091, 7
    %v2093 = vsub.s32 1, %v2092
    %v2094 = vrot.slane %v2085, %v2093
    %v2193 = vunpack.c.l.b16 %v1989
    %v2194 = vunpack.c.h.b16 %v1989
    %v2195 = vunpack.c.l.b16 %v1990
    %v2196 = vunpack.c.h.b16 %v1990
    %v2197 = vunpack.c.l.b16 %v1991
    %v2198 = vunpack.c.h.b16 %v1991
    %v2199 = vunpack.c.l.b16 %v1992
    %v2200 = vunpack.c.h.b16 %v1992
    %v2201 = vunpack.c.l.b16 %v1993
    %v2202 = vunpack.c.h.b16 %v1993
    %v2203 = vunpack.c.l.b16 %v1994
    %v2204 = vunpack.c.h.b16 %v1994
    %v2205 = vunpack.c.l.b16 %v1995
    %v2206 = vunpack.c.h.b16 %v1995
    %v2207 = vunpack.c.l.b16 %v1996
    %v2208 = vunpack.c.h.b16 %v1996
    %v2209 = vunpack.c.l.b16 %v1997
    %v2210 = vunpack.c.h.b16 %v1997
    %v2211 = vunpack.c.l.b16 %v1998
    %v2212 = vunpack.c.h.b16 %v1998
    %v2213 = vunpack.c.l.b16 %v1999
    %v2214 = vunpack.c.h.b16 %v1999
    %v2215 = vunpack.c.l.b16 %v2000
    %v2216 = vunpack.c.h.b16 %v2000
    %v2217 = vunpack.c.l.b16 %v2001
    %v2218 = vunpack.c.h.b16 %v2001
    %v2219 = vunpack.c.l.b16 %v2002
    %v2220 = vunpack.c.h.b16 %v2002
    %v2221 = vunpack.c.l.b16 %v2003
    %v2222 = vunpack.c.h.b16 %v2003
    %v2223 = vunpack.c.l.b16 %v2004
    %v2224 = vunpack.c.h.b16 %v2004
    %v2225 = vunpack.c.l.b16 %v2005
    %v2226 = vunpack.c.h.b16 %v2005
    %v2227 = vunpack.c.l.b16 %v2006
    %v2228 = vunpack.c.h.b16 %v2006
    %v2229 = vunpack.c.l.b16 %v2007
    %v2230 = vunpack.c.h.b16 %v2007
    %v2231 = vunpack.c.l.b16 %v2008
    %v2232 = vunpack.c.h.b16 %v2008
    %v2233 = vunpack.c.l.b16 %v2009
    %v2234 = vunpack.c.h.b16 %v2009
    %v2235 = vunpack.c.l.b16 %v2010
    %v2236 = vunpack.c.h.b16 %v2010
    %v2237 = vunpack.c.l.b16 %v2011
    %v2238 = vunpack.c.h.b16 %v2011
    %v2239 = vunpack.c.l.b16 %v2012
    %v2240 = vunpack.c.h.b16 %v2012
    %v2241 = vunpack.c.l.b16 %v2013
    %v2242 = vunpack.c.h.b16 %v2013
    %v2243 = vunpack.c.l.b16 %v2014
    %v2244 = vunpack.c.h.b16 %v2014
    %v2245 = vunpack.c.l.b16 %v2015
    %v2246 = vunpack.c.h.b16 %v2015
    %v2247 = vunpack.c.l.b16 %v2016
    %v2248 = vunpack.c.h.b16 %v2016
    %v2249 = vunpack.c.l.b16 %v2017
    %v2250 = vunpack.c.h.b16 %v2017
    %v2251 = vunpack.c.l.b16 %v2018
    %v2252 = vunpack.c.h.b16 %v2018
    %v2253 = vunpack.c.l.b16 %v2019
    %v2254 = vunpack.c.h.b16 %v2019
    %v2255 = vunpack.c.l.b16 %v2020
    %v2256 = vunpack.c.h.b16 %v2020
    %v2257 = vunpack.c.l.b16 %v2021
    %v2258 = vunpack.c.h.b16 %v2021
    %v2259 = vunpack.c.l.b16 %v2022
    %v2260 = vunpack.c.h.b16 %v2022
    %v2261 = vunpack.c.l.b16 %v2023
    %v2262 = vunpack.c.h.b16 %v2023
    %v2263 = vunpack.c.l.b16 %v2024
    %v2264 = vunpack.c.h.b16 %v2024
    %v2265 = vunpack.c.l.b16 %v2025
    %v2266 = vunpack.c.h.b16 %v2025
    %v2267 = vunpack.c.l.b16 %v2026
    %v2268 = vunpack.c.h.b16 %v2026
    %v2269 = vunpack.c.l.b16 %v2027
    %v2270 = vunpack.c.h.b16 %v2027
    %v2271 = vunpack.c.l.b16 %v2028
    %v2272 = vunpack.c.h.b16 %v2028
    %v2273 = vunpack.c.l.b16 %v2029
    %v2274 = vunpack.c.h.b16 %v2029
    %v2275 = vunpack.c.l.b16 %v2030
    %v2276 = vunpack.c.h.b16 %v2030
    %v2277 = vunpack.c.l.b16 %v2031
    %v2278 = vunpack.c.h.b16 %v2031
    %v2279 = vunpack.c.l.b16 %v2032
    %v2280 = vunpack.c.h.b16 %v2032
    %v2281 = vunpack.c.l.b16 %v2033
    %v2282 = vunpack.c.h.b16 %v2033
    %v2283 = vunpack.c.l.b16 %v2034
    %v2284 = vunpack.c.h.b16 %v2034
    %v2285 = vunpack.c.l.b16 %v2035
    %v2286 = vunpack.c.h.b16 %v2035
    %v2287 = vunpack.c.l.b16 %v2036
    %v2288 = vunpack.c.h.b16 %v2036
    %v2289 = vunpack.c.l.b16 %v2037
    %v2290 = vunpack.c.h.b16 %v2037
    %v2291 = vunpack.c.l.b16 %v2038
    %v2292 = vunpack.c.h.b16 %v2038
    %v2293 = vunpack.c.l.b16 %v2039
    %v2294 = vunpack.c.h.b16 %v2039
    %v2295 = vunpack.c.l.b16 %v2040
    %v2296 = vunpack.c.h.b16 %v2040
    %v2297 = vunpack.c.l.b16 %v2041
    %v2298 = vunpack.c.h.b16 %v2041
    %v2299 = vunpack.c.l.b16 %v2042
    %v2300 = vunpack.c.h.b16 %v2042
    %v2301 = vunpack.c.l.b16 %v2043
    %v2302 = vunpack.c.h.b16 %v2043
    %v2303 = vunpack.c.l.b16 %v2044
    %v2304 = vunpack.c.h.b16 %v2044
    %v2305 = vunpack.c.l.b16 %v2045
    %v2306 = vunpack.c.h.b16 %v2045
    %v2307 = vunpack.c.l.b16 %v2046
    %v2308 = vunpack.c.h.b16 %v2046
    %v2309 = vunpack.c.l.b16 %v2047
    %v2310 = vunpack.c.h.b16 %v2047
    %v2311 = vunpack.c.l.b16 %v2048
    %v2312 = vunpack.c.h.b16 %v2048
    %v2313 = vunpack.c.l.b16 %v2049
    %v2314 = vunpack.c.h.b16 %v2049
    %v2315 = vunpack.c.l.b16 %v2050
    %v2316 = vunpack.c.h.b16 %v2050
    %v2317 = vunpack.c.l.b16 %v2051
    %v2318 = vunpack.c.h.b16 %v2051
    %v2319 = vunpack.c.l.b16 %v2052
    %v2320 = vunpack.c.h.b16 %v2052
    %v2321 = vunpack.c.l.b16 %v2053
    %v2322 = vunpack.c.h.b16 %v2053
    %v2323 = vunpack.c.l.b16 %v2054
    %v2324 = vunpack.c.h.b16 %v2054
    %v2325 = vunpack.c.l.b16 %v2055
    %v2326 = vunpack.c.h.b16 %v2055
    %v2327 = vunpack.c.l.b16 %v2056
    %v2328 = vunpack.c.h.b16 %v2056
    %v2329 = vunpack.c.l.b16 %v2057
    %v2330 = vunpack.c.h.b16 %v2057
    %v2331 = vunpack.c.l.b16 %v2058
    %v2332 = vunpack.c.h.b16 %v2058
    %v2333 = vunpack.c.l.b16 %v2059
    %v2334 = vunpack.c.h.b16 %v2059
    %v2335 = vunpack.c.l.b16 %v2060
    %v2336 = vunpack.c.h.b16 %v2060
    %v2337 = vunpack.c.l.b16 %v2061
    %v2338 = vunpack.c.h.b16 %v2061
    %v2339 = vunpack.c.l.b16 %v2062
    %v2340 = vunpack.c.h.b16 %v2062
    %v2341 = vunpack.c.l.b16 %v2063
    %v2342 = vunpack.c.h.b16 %v2063
    %v2343 = vunpack.c.l.b16 %v2064
    %v2344 = vunpack.c.h.b16 %v2064
    %v2345 = vunpack.c.l.b16 %v2065
    %v2346 = vunpack.c.h.b16 %v2065
    %v2347 = vunpack.c.l.b16 %v2066
    %v2348 = vunpack.c.h.b16 %v2066
    %v2349 = vunpack.c.l.b16 %v2067
    %v2350 = vunpack.c.h.b16 %v2067
    %v2351 = vunpack.c.l.b16 %v2068
    %v2352 = vunpack.c.h.b16 %v2068
    %v2353 = vunpack.c.l.b16 %v2069
    %v2354 = vunpack.c.h.b16 %v2069
    %v2355 = vunpack.c.l.b16 %v2070
    %v2356 = vunpack.c.h.b16 %v2070
    %v2357 = vunpack.c.l.b16 %v2071
    %v2358 = vunpack.c.h.b16 %v2071
    %v2359 = vunpack.c.l.b16 %v2072
    %v2360 = vunpack.c.h.b16 %v2072
    %v2361 = vunpack.c.l.b16 %v2073
    %v2362 = vunpack.c.h.b16 %v2073
    %v2363 = vunpack.c.l.b16 %v2074
    %v2364 = vunpack.c.h.b16 %v2074
    %v2365 = vunpack.c.l.b16 %v2075
    %v2366 = vunpack.c.h.b16 %v2075
    %v2367 = vunpack.c.l.b16 %v2076
    %v2368 = vunpack.c.h.b16 %v2076
    %v2369 = vunpack.c.l.b16 %v2077
    %v2370 = vunpack.c.h.b16 %v2077
    %v2371 = vunpack.c.l.b16 %v2078
    %v2372 = vunpack.c.h.b16 %v2078
    %v2373 = vunpack.c.l.b16 %v2079
    %v2374 = vunpack.c.h.b16 %v2079
    %v2375 = vunpack.c.l.b16 %v2080
    %v2376 = vunpack.c.h.b16 %v2080
    %v2377 = vunpack.c.l.b16 %v2081
    %v2378 = vunpack.c.h.b16 %v2081
    %v2379 = vunpack.c.l.b16 %v2082
    %v2380 = vunpack.c.h.b16 %v2082
    %v2381 = vunpack.c.l.b16 %v2083
    %v2382 = vunpack.c.h.b16 %v2083
    %v2383 = vunpack.c.l.b16 %v2084
    %v2384 = vunpack.c.h.b16 %v2084
    %v2385 = vpack.c.b16 %v2195, %v2193
    %v2386 = vpack.c.b16 %v2196, %v2194
    %v2387 = vpack.c.b16 %v2199, %v2197
    %v2388 = vpack.c.b16 %v2200, %v2198
    %v2389 = vpack.c.b16 %v2203, %v2201
    %v2390 = vpack.c.b16 %v2204, %v2202
    %v2391 = vpack.c.b16 %v2207, %v2205
    %v2392 = vpack.c.b16 %v2208, %v2206
    %v2393 = vpack.c.b16 %v2211, %v2209
    %v2394 = vpack.c.b16 %v2212, %v2210
    %v2395 = vpack.c.b16 %v2215, %v2213
    %v2396 = vpack.c.b16 %v2216, %v2214
    %v2397 = vpack.c.b16 %v2219, %v2217
    %v2398 = vpack.c.b16 %v2220, %v2218
    %v2399 = vpack.c.b16 %v2223, %v2221
    %v2400 = vpack.c.b16 %v2224, %v2222
    %v2401 = vpack.c.b16 %v2227, %v2225
    %v2402 = vpack.c.b16 %v2228, %v2226
    %v2403 = vpack.c.b16 %v2231, %v2229
    %v2404 = vpack.c.b16 %v2232, %v2230
    %v2405 = vpack.c.b16 %v2235, %v2233
    %v2406 = vpack.c.b16 %v2236, %v2234
    %v2407 = vpack.c.b16 %v2239, %v2237
    %v2408 = vpack.c.b16 %v2240, %v2238
    %v2409 = vpack.c.b16 %v2243, %v2241
    %v2410 = vpack.c.b16 %v2244, %v2242
    %v2411 = vpack.c.b16 %v2247, %v2245
    %v2412 = vpack.c.b16 %v2248, %v2246
    %v2413 = vpack.c.b16 %v2251, %v2249
    %v2414 = vpack.c.b16 %v2252, %v2250
    %v2415 = vpack.c.b16 %v2255, %v2253
    %v2416 = vpack.c.b16 %v2256, %v2254
    %v2417 = vpack.c.b16 %v2259, %v2257
    %v2418 = vpack.c.b16 %v2260, %v2258
    %v2419 = vpack.c.b16 %v2263, %v2261
    %v2420 = vpack.c.b16 %v2264, %v2262
    %v2421 = vpack.c.b16 %v2267, %v2265
    %v2422 = vpack.c.b16 %v2268, %v2266
    %v2423 = vpack.c.b16 %v2271, %v2269
    %v2424 = vpack.c.b16 %v2272, %v2270
    %v2425 = vpack.c.b16 %v2275, %v2273
    %v2426 = vpack.c.b16 %v2276, %v2274
    %v2427 = vpack.c.b16 %v2279, %v2277
    %v2428 = vpack.c.b16 %v2280, %v2278
    %v2429 = vpack.c.b16 %v2283, %v2281
    %v2430 = vpack.c.b16 %v2284, %v2282
    %v2431 = vpack.c.b16 %v2287, %v2285
    %v2432 = vpack.c.b16 %v2288, %v2286
    %v2433 = vpack.c.b16 %v2291, %v2289
    %v2434 = vpack.c.b16 %v2292, %v2290
    %v2435 = vpack.c.b16 %v2295, %v2293
    %v2436 = vpack.c.b16 %v2296, %v2294
    %v2437 = vpack.c.b16 %v2299, %v2297
    %v2438 = vpack.c.b16 %v2300, %v2298
    %v2439 = vpack.c.b16 %v2303, %v2301
    %v2440 = vpack.c.b16 %v2304, %v2302
    %v2441 = vpack.c.b16 %v2307, %v2305
    %v2442 = vpack.c.b16 %v2308, %v2306
    %v2443 = vpack.c.b16 %v2311, %v2309
    %v2444 = vpack.c.b16 %v2312, %v2310
    %v2445 = vpack.c.b16 %v2315, %v2313
    %v2446 = vpack.c.b16 %v2316, %v2314
    %v2447 = vpack.c.b16 %v2319, %v2317
    %v2448 = vpack.c.b16 %v2320, %v2318
    %v2449 = vpack.c.b16 %v2323, %v2321
    %v2450 = vpack.c.b16 %v2324, %v2322
    %v2451 = vpack.c.b16 %v2327, %v2325
    %v2452 = vpack.c.b16 %v2328, %v2326
    %v2453 = vpack.c.b16 %v2331, %v2329
    %v2454 = vpack.c.b16 %v2332, %v2330
    %v2455 = vpack.c.b16 %v2335, %v2333
    %v2456 = vpack.c.b16 %v2336, %v2334
    %v2457 = vpack.c.b16 %v2339, %v2337
    %v2458 = vpack.c.b16 %v2340, %v2338
    %v2459 = vpack.c.b16 %v2343, %v2341
    %v2460 = vpack.c.b16 %v2344, %v2342
    %v2461 = vpack.c.b16 %v2347, %v2345
    %v2462 = vpack.c.b16 %v2348, %v2346
    %v2463 = vpack.c.b16 %v2351, %v2349
    %v2464 = vpack.c.b16 %v2352, %v2350
    %v2465 = vpack.c.b16 %v2355, %v2353
    %v2466 = vpack.c.b16 %v2356, %v2354
    %v2467 = vpack.c.b16 %v2359, %v2357
    %v2468 = vpack.c.b16 %v2360, %v2358
    %v2469 = vpack.c.b16 %v2363, %v2361
    %v2470 = vpack.c.b16 %v2364, %v2362
    %v2471 = vpack.c.b16 %v2367, %v2365
    %v2472 = vpack.c.b16 %v2368, %v2366
    %v2473 = vpack.c.b16 %v2371, %v2369
    %v2474 = vpack.c.b16 %v2372, %v2370
    %v2475 = vpack.c.b16 %v2375, %v2373
    %v2476 = vpack.c.b16 %v2376, %v2374
    %v2477 = vpack.c.b16 %v2379, %v2377
    %v2478 = vpack.c.b16 %v2380, %v2378
    %v2479 = vpack.c.b16 %v2383, %v2381
    %v2480 = vpack.c.b16 %v2384, %v2382
    %2577 = vmatprep.subr.bf16.mxu0 %v2386
    %2578 = vmatpush1.bf16.msra.mxu0 %v2385
    %2579 = vmatprep.subr.bf16.mxu0 %v2388
    %2580 = vmatpush1.bf16.msra.mxu0 %v2387
    %2581 = vmatprep.subr.bf16.mxu0 %v2390
    %2582 = vmatpush1.bf16.msra.mxu0 %v2389
    %2583 = vmatprep.subr.bf16.mxu0 %v2392
    %2584 = vmatpush1.bf16.msra.mxu0 %v2391
    %2585 = vmatprep.subr.bf16.mxu0 %v2394
    %2586 = vmatpush1.bf16.msra.mxu0 %v2393
    %2587 = vmatprep.subr.bf16.mxu0 %v2396
    %2588 = vmatpush1.bf16.msra.mxu0 %v2395
    %2589 = vmatprep.subr.bf16.mxu0 %v2398
    %2590 = vmatpush1.bf16.msra.mxu0 %v2397
    %2591 = vmatprep.subr.bf16.mxu0 %v2400
    %2592 = vmatpush1.bf16.msra.mxu0 %v2399
    %2593 = vmatprep.subr.bf16.mxu0 %v2402
    %2594 = vmatpush1.bf16.msra.mxu0 %v2401
    %2595 = vmatprep.subr.bf16.mxu0 %v2404
    %2596 = vmatpush1.bf16.msra.mxu0 %v2403
    %2597 = vmatprep.subr.bf16.mxu0 %v2406
    %2598 = vmatpush1.bf16.msra.mxu0 %v2405
    %2599 = vmatprep.subr.bf16.mxu0 %v2408
    %2600 = vmatpush1.bf16.msra.mxu0 %v2407
    %2601 = vmatprep.subr.bf16.mxu0 %v2410
    %2602 = vmatpush1.bf16.msra.mxu0 %v2409
    %2603 = vmatprep.subr.bf16.mxu0 %v2412
    %2604 = vmatpush1.bf16.msra.mxu0 %v2411
    %2605 = vmatprep.subr.bf16.mxu0 %v2414
    %2606 = vmatpush1.bf16.msra.mxu0 %v2413
    %2607 = vmatprep.subr.bf16.mxu0 %v2416
    %2608 = vmatpush1.bf16.msra.mxu0 %v2415
    %2609 = vmatprep.mubr.bf16.mxu0 %v1984
    %2610 = vmatmul.mubr.bf16.gmra.mrb[0].mxu0 %v1983
    %v2611 = vpop.f32.mrb[0].mxu0
    %v2612 = vadd.f32 %v2090, %v2611
    %v2613 = vpop.f32.mrb[0].mxu0
    %v2614 = vadd.f32 %v2094, %v2613
    %v2615 = vpop.f32.mrb[0].mxu0
    %v2616 = vadd.f32 %v2090, %v2615
    %v2617 = vpop.f32.mrb[0].mxu0
    %v2618 = vadd.f32 %v2094, %v2617
    %2619 = vdwg.mxu0
    %2620 = vmatprep.subr.bf16.mxu0 %v2418
    %2621 = vmatpush1.bf16.msra.mxu0 %v2417
    %2622 = vmatprep.subr.bf16.mxu0 %v2420
    %2623 = vmatpush1.bf16.msra.mxu0 %v2419
    %2624 = vmatprep.subr.bf16.mxu0 %v2422
    %2625 = vmatpush1.bf16.msra.mxu0 %v2421
    %2626 = vmatprep.subr.bf16.mxu0 %v2424
    %2627 = vmatpush1.bf16.msra.mxu0 %v2423
    %2628 = vmatprep.subr.bf16.mxu0 %v2426
    %2629 = vmatpush1.bf16.msra.mxu0 %v2425
    %2630 = vmatprep.subr.bf16.mxu0 %v2428
    %2631 = vmatpush1.bf16.msra.mxu0 %v2427
    %2632 = vmatprep.subr.bf16.mxu0 %v2430
    %2633 = vmatpush1.bf16.msra.mxu0 %v2429
    %2634 = vmatprep.subr.bf16.mxu0 %v2432
    %2635 = vmatpush1.bf16.msra.mxu0 %v2431
    %2636 = vmatprep.subr.bf16.mxu0 %v2434
    %2637 = vmatpush1.bf16.msra.mxu0 %v2433
    %2638 = vmatprep.subr.bf16.mxu0 %v2436
    %2639 = vmatpush1.bf16.msra.mxu0 %v2435
    %2640 = vmatprep.subr.bf16.mxu0 %v2438
    %2641 = vmatpush1.bf16.msra.mxu0 %v2437
    %2642 = vmatprep.subr.bf16.mxu0 %v2440
    %2643 = vmatpush1.bf16.msra.mxu0 %v2439
    %2644 = vmatprep.subr.bf16.mxu0 %v2442
    %2645 = vmatpush1.bf16.msra.mxu0 %v2441
    %2646 = vmatprep.subr.bf16.mxu0 %v2444
    %2647 = vmatpush1.bf16.msra.mxu0 %v2443
    %2648 = vmatprep.subr.bf16.mxu0 %v2446
    %2649 = vmatpush1.bf16.msra.mxu0 %v2445
    %2650 = vmatprep.subr.bf16.mxu0 %v2448
    %2651 = vmatpush1.bf16.msra.mxu0 %v2447
    %2652 = vmatprep.mubr.bf16.mxu0 %v1986
    %2653 = vmatmul.mubr.bf16.gmra.mrb[0].mxu0 %v1985
    %v2654 = vpop.f32.mrb[0].mxu0
    %v2655 = vadd.f32 %v2612, %v2654
    %v2656 = vpop.f32.mrb[0].mxu0
    %v2657 = vadd.f32 %v2614, %v2656
    %v2658 = vpop.f32.mrb[0].mxu0
    %v2659 = vadd.f32 %v2616, %v2658
    %v2660 = vpop.f32.mrb[0].mxu0
    %v2661 = vadd.f32 %v2618, %v2660
    %2662 = vdwg.mxu0
    %2663 = vmatprep.subr.bf16.mxu0 %v2450
    %2664 = vmatpush1.bf16.msra.mxu0 %v2449
    %2665 = vmatprep.subr.bf16.mxu0 %v2452
    %2666 = vmatpush1.bf16.msra.mxu0 %v2451
    %2667 = vmatprep.subr.bf16.mxu0 %v2454
    %2668 = vmatpush1.bf16.msra.mxu0 %v2453
    %2669 = vmatprep.subr.bf16.mxu0 %v2456
    %2670 = vmatpush1.bf16.msra.mxu0 %v2455
    %2671 = vmatprep.subr.bf16.mxu0 %v2458
    %2672 = vmatpush1.bf16.msra.mxu0 %v2457
    %2673 = vmatprep.subr.bf16.mxu0 %v2460
    %2674 = vmatpush1.bf16.msra.mxu0 %v2459
    %2675 = vmatprep.subr.bf16.mxu0 %v2462
    %2676 = vmatpush1.bf16.msra.mxu0 %v2461
    %2677 = vmatprep.subr.bf16.mxu0 %v2464
    %2678 = vmatpush1.bf16.msra.mxu0 %v2463
    %2679 = vmatprep.subr.bf16.mxu0 %v2466
    %2680 = vmatpush1.bf16.msra.mxu0 %v2465
    %2681 = vmatprep.subr.bf16.mxu0 %v2468
    %2682 = vmatpush1.bf16.msra.mxu0 %v2467
    %2683 = vmatprep.subr.bf16.mxu0 %v2470
    %2684 = vmatpush1.bf16.msra.mxu0 %v2469
    %2685 = vmatprep.subr.bf16.mxu0 %v2472
    %2686 = vmatpush1.bf16.msra.mxu0 %v2471
    %2687 = vmatprep.subr.bf16.mxu0 %v2474
    %2688 = vmatpush1.bf16.msra.mxu0 %v2473
    %2689 = vmatprep.subr.bf16.mxu0 %v2476
    %2690 = vmatpush1.bf16.msra.mxu0 %v2475
    %2691 = vmatprep.subr.bf16.mxu0 %v2478
    %2692 = vmatpush1.bf16.msra.mxu0 %v2477
    %2693 = vmatprep.subr.bf16.mxu0 %v2480
    %2694 = vmatpush1.bf16.msra.mxu0 %v2479
    %2695 = vmatprep.mubr.bf16.mxu0 %v1988
    %2696 = vmatmul.mubr.bf16.gmra.mrb[0].mxu0 %v1987
    %v2697 = vpop.f32.mrb[0].mxu0
    %v2698 = vadd.f32 %v2655, %v2697
    %v2699 = vpop.f32.mrb[0].mxu0
    %v2700 = vadd.f32 %v2657, %v2699
    %v2701 = vpop.f32.mrb[0].mxu0
    %v2702 = vadd.f32 %v2659, %v2701
    %v2703 = vpop.f32.mrb[0].mxu0
    %v2704 = vadd.f32 %v2661, %v2703
    %2705 = vdwg.mxu0
    %v2706 = vmax.f32 %v2698, 0.0
    %v2707 = vmax.f32 %v2700, 0.0
    %v2708 = vmax.f32 %v2702, 0.0
    %v2709 = vmax.f32 %v2704, 0.0
    %v2714 = vrot.slane %v2706, 7
    %v2715 = vrot.slane %v2707, 7
    %v2716 = vrot.slane %v2708, 7
    %v2717 = vsel %vm121, %v2714, %v2716
    %v2718 = vrot.slane %v2709, 7
    %v2719 = vsel %vm121, %v2715, %v2718
    %v2724 = vsel %vm121, 0.0, %v2714
    %v2725 = vsel %vm121, 0.0, %v2715
    %v2726 = vrot.slane %v2706, 1
    %v2727 = vrot.slane %v2708, 1
    %v2728 = vsel %vm128, %v2726, %v2727
    %v2729 = vrot.slane %v2707, 1
    %v2730 = vrot.slane %v2709, 1
    %v2731 = vsel %vm128, %v2729, %v2730
    %v2736 = vsel %vm121, %v2727, 0.0
    %v2737 = vsel %vm121, %v2730, 0.0
    %v2738 = vpack.c.bf16 %v2717, %v2724
    %v2739 = vpack.c.bf16 %v2719, %v2725
    %v2740 = vpack.c.bf16 %v2708, %v2706
    %v2741 = vpack.c.bf16 %v2709, %v2707
    %v2742 = vpack.c.bf16 %v2736, %v2728
    %v2743 = vpack.c.bf16 %v2737, %v2731
    %v2744 = vld [vmem:[#allocation7] sm:$0xf]
    %v2745 = vld [vmem:[#allocation7 + $0x4] sm:$0xf]
    %v2746 = vld [vmem:[#allocation7 + $0x8] sm:$0xf]
    %v2747 = vld [vmem:[#allocation7 + $0xc] sm:$0xf]
    %v2748 = vld [vmem:[#allocation7 + $0x10] sm:$0xf]
    %v2749 = vld [vmem:[#allocation7 + $0x14] sm:$0xf]
    %v2750 = vld [vmem:[#allocation7 + $0x18] sm:$0xf]
    %v2751 = vld [vmem:[#allocation7 + $0x1c] sm:$0xf]
    %v2752 = vld [vmem:[#allocation7 + $0x20] sm:$0xf]
    %v2753 = vld [vmem:[#allocation7 + $0x24] sm:$0xf]
    %v2754 = vld [vmem:[#allocation7 + $0x28] sm:$0xf]
    %v2755 = vld [vmem:[#allocation7 + $0x2c] sm:$0xf]
    %v2756 = vld [vmem:[#allocation7 + $0x30] sm:$0xf]
    %v2757 = vld [vmem:[#allocation7 + $0x34] sm:$0xf]
    %v2758 = vld [vmem:[#allocation7 + $0x38] sm:$0xf]
    %v2759 = vld [vmem:[#allocation7 + $0x3c] sm:$0xf]
    %v2760 = vld [vmem:[#allocation7 + $0x40] sm:$0xf]
    %v2761 = vld [vmem:[#allocation7 + $0x44] sm:$0xf]
    %v2762 = vld [vmem:[#allocation7 + $0x48] sm:$0xf]
    %v2763 = vld [vmem:[#allocation7 + $0x4c] sm:$0xf]
    %v2764 = vld [vmem:[#allocation7 + $0x50] sm:$0xf]
    %v2765 = vld [vmem:[#allocation7 + $0x54] sm:$0xf]
    %v2766 = vld [vmem:[#allocation7 + $0x58] sm:$0xf]
    %v2767 = vld [vmem:[#allocation7 + $0x5c] sm:$0xf]
    %v2768 = vld [vmem:[#allocation7 + $0x60] sm:$0xf]
    %v2769 = vld [vmem:[#allocation7 + $0x64] sm:$0xf]
    %v2770 = vld [vmem:[#allocation7 + $0x68] sm:$0xf]
    %v2771 = vld [vmem:[#allocation7 + $0x6c] sm:$0xf]
    %v2772 = vld [vmem:[#allocation7 + $0x70] sm:$0xf]
    %v2773 = vld [vmem:[#allocation7 + $0x74] sm:$0xf]
    %v2774 = vld [vmem:[#allocation7 + $0x78] sm:$0xf]
    %v2775 = vld [vmem:[#allocation7 + $0x7c] sm:$0xf]
    %v2776 = vld [vmem:[#allocation7 + $0x80] sm:$0xf]
    %v2777 = vld [vmem:[#allocation7 + $0x84] sm:$0xf]
    %v2778 = vld [vmem:[#allocation7 + $0x88] sm:$0xf]
    %v2779 = vld [vmem:[#allocation7 + $0x8c] sm:$0xf]
    %v2780 = vld [vmem:[#allocation7 + $0x90] sm:$0xf]
    %v2781 = vld [vmem:[#allocation7 + $0x94] sm:$0xf]
    %v2782 = vld [vmem:[#allocation7 + $0x98] sm:$0xf]
    %v2783 = vld [vmem:[#allocation7 + $0x9c] sm:$0xf]
    %v2784 = vld [vmem:[#allocation7 + $0xa0] sm:$0xf]
    %v2785 = vld [vmem:[#allocation7 + $0xa4] sm:$0xf]
    %v2786 = vld [vmem:[#allocation7 + $0xa8] sm:$0xf]
    %v2787 = vld [vmem:[#allocation7 + $0xac] sm:$0xf]
    %v2788 = vld [vmem:[#allocation7 + $0xb0] sm:$0xf]
    %v2789 = vld [vmem:[#allocation7 + $0xb4] sm:$0xf]
    %v2790 = vld [vmem:[#allocation7 + $0xb8] sm:$0xf]
    %v2791 = vld [vmem:[#allocation7 + $0xbc] sm:$0xf]
    %v2792 = vld [vmem:[#allocation7 + $0xc0] sm:$0xf]
    %v2793 = vld [vmem:[#allocation7 + $0xc4] sm:$0xf]
    %v2794 = vld [vmem:[#allocation7 + $0xc8] sm:$0xf]
    %v2795 = vld [vmem:[#allocation7 + $0xcc] sm:$0xf]
    %v2796 = vld [vmem:[#allocation7 + $0xd0] sm:$0xf]
    %v2797 = vld [vmem:[#allocation7 + $0xd4] sm:$0xf]
    %v2798 = vld [vmem:[#allocation7 + $0xd8] sm:$0xf]
    %v2799 = vld [vmem:[#allocation7 + $0xdc] sm:$0xf]
    %v2800 = vld [vmem:[#allocation7 + $0xe0] sm:$0xf]
    %v2801 = vld [vmem:[#allocation7 + $0xe4] sm:$0xf]
    %v2802 = vld [vmem:[#allocation7 + $0xe8] sm:$0xf]
    %v2803 = vld [vmem:[#allocation7 + $0xec] sm:$0xf]
    %v2804 = vld [vmem:[#allocation7 + $0xf0] sm:$0xf]
    %v2805 = vld [vmem:[#allocation7 + $0xf4] sm:$0xf]
    %v2806 = vld [vmem:[#allocation7 + $0xf8] sm:$0xf]
    %v2807 = vld [vmem:[#allocation7 + $0xfc] sm:$0xf]
    %v2808 = vld [vmem:[#allocation7 + $0x100] sm:$0xf]
    %v2809 = vld [vmem:[#allocation7 + $0x104] sm:$0xf]
    %v2810 = vld [vmem:[#allocation7 + $0x108] sm:$0xf]
    %v2811 = vld [vmem:[#allocation7 + $0x10c] sm:$0xf]
    %v2812 = vld [vmem:[#allocation7 + $0x110] sm:$0xf]
    %v2813 = vld [vmem:[#allocation7 + $0x114] sm:$0xf]
    %v2814 = vld [vmem:[#allocation7 + $0x118] sm:$0xf]
    %v2815 = vld [vmem:[#allocation7 + $0x11c] sm:$0xf]
    %v2816 = vld [vmem:[#allocation7 + $0x120] sm:$0xf]
    %v2817 = vld [vmem:[#allocation7 + $0x124] sm:$0xf]
    %v2818 = vld [vmem:[#allocation7 + $0x128] sm:$0xf]
    %v2819 = vld [vmem:[#allocation7 + $0x12c] sm:$0xf]
    %v2820 = vld [vmem:[#allocation7 + $0x130] sm:$0xf]
    %v2821 = vld [vmem:[#allocation7 + $0x134] sm:$0xf]
    %v2822 = vld [vmem:[#allocation7 + $0x138] sm:$0xf]
    %v2823 = vld [vmem:[#allocation7 + $0x13c] sm:$0xf]
    %v2824 = vld [vmem:[#allocation7 + $0x140] sm:$0xf]
    %v2825 = vld [vmem:[#allocation7 + $0x144] sm:$0xf]
    %v2826 = vld [vmem:[#allocation7 + $0x148] sm:$0xf]
    %v2827 = vld [vmem:[#allocation7 + $0x14c] sm:$0xf]
    %v2828 = vld [vmem:[#allocation7 + $0x150] sm:$0xf]
    %v2829 = vld [vmem:[#allocation7 + $0x154] sm:$0xf]
    %v2830 = vld [vmem:[#allocation7 + $0x158] sm:$0xf]
    %v2831 = vld [vmem:[#allocation7 + $0x15c] sm:$0xf]
    %v2832 = vld [vmem:[#allocation7 + $0x160] sm:$0xf]
    %v2833 = vld [vmem:[#allocation7 + $0x164] sm:$0xf]
    %v2834 = vld [vmem:[#allocation7 + $0x168] sm:$0xf]
    %v2835 = vld [vmem:[#allocation7 + $0x16c] sm:$0xf]
    %v2836 = vld [vmem:[#allocation7 + $0x170] sm:$0xf]
    %v2837 = vld [vmem:[#allocation7 + $0x174] sm:$0xf]
    %v2838 = vld [vmem:[#allocation7 + $0x178] sm:$0xf]
    %v2839 = vld [vmem:[#allocation7 + $0x17c] sm:$0xf]
    %v2840 = vld [vmem:[%s9] sm:$0x1]
    %v2842 = vlaneseq
    %v2843 = vshrl.u32 %v2842, 7
    %v2844 = vsub.s32 0, %v2843
    %v2845 = vrot.slane %v2840, %v2844
    %v2943 = vunpack.c.l.b16 %v2744
    %v2944 = vunpack.c.l.b16 %v2745
    %v2945 = vunpack.c.l.b16 %v2746
    %v2946 = vunpack.c.l.b16 %v2747
    %v2947 = vunpack.c.l.b16 %v2748
    %v2948 = vunpack.c.l.b16 %v2749
    %v2949 = vunpack.c.l.b16 %v2750
    %v2950 = vunpack.c.l.b16 %v2751
    %v2951 = vunpack.c.l.b16 %v2752
    %v2952 = vunpack.c.l.b16 %v2753
    %v2953 = vunpack.c.l.b16 %v2754
    %v2954 = vunpack.c.l.b16 %v2755
    %v2955 = vunpack.c.l.b16 %v2756
    %v2956 = vunpack.c.l.b16 %v2757
    %v2957 = vunpack.c.l.b16 %v2758
    %v2958 = vunpack.c.l.b16 %v2759
    %v2959 = vunpack.c.l.b16 %v2760
    %v2960 = vunpack.c.l.b16 %v2761
    %v2961 = vunpack.c.l.b16 %v2762
    %v2962 = vunpack.c.l.b16 %v2763
    %v2963 = vunpack.c.l.b16 %v2764
    %v2964 = vunpack.c.l.b16 %v2765
    %v2965 = vunpack.c.l.b16 %v2766
    %v2966 = vunpack.c.l.b16 %v2767
    %v2967 = vunpack.c.l.b16 %v2768
    %v2968 = vunpack.c.l.b16 %v2769
    %v2969 = vunpack.c.l.b16 %v2770
    %v2970 = vunpack.c.l.b16 %v2771
    %v2971 = vunpack.c.l.b16 %v2772
    %v2972 = vunpack.c.l.b16 %v2773
    %v2973 = vunpack.c.l.b16 %v2774
    %v2974 = vunpack.c.l.b16 %v2775
    %v2975 = vunpack.c.l.b16 %v2776
    %v2976 = vunpack.c.l.b16 %v2777
    %v2977 = vunpack.c.l.b16 %v2778
    %v2978 = vunpack.c.l.b16 %v2779
    %v2979 = vunpack.c.l.b16 %v2780
    %v2980 = vunpack.c.l.b16 %v2781
    %v2981 = vunpack.c.l.b16 %v2782
    %v2982 = vunpack.c.l.b16 %v2783
    %v2983 = vunpack.c.l.b16 %v2784
    %v2984 = vunpack.c.l.b16 %v2785
    %v2985 = vunpack.c.l.b16 %v2786
    %v2986 = vunpack.c.l.b16 %v2787
    %v2987 = vunpack.c.l.b16 %v2788
    %v2988 = vunpack.c.l.b16 %v2789
    %v2989 = vunpack.c.l.b16 %v2790
    %v2990 = vunpack.c.l.b16 %v2791
    %v2991 = vunpack.c.l.b16 %v2792
    %v2992 = vunpack.c.l.b16 %v2793
    %v2993 = vunpack.c.l.b16 %v2794
    %v2994 = vunpack.c.l.b16 %v2795
    %v2995 = vunpack.c.l.b16 %v2796
    %v2996 = vunpack.c.l.b16 %v2797
    %v2997 = vunpack.c.l.b16 %v2798
    %v2998 = vunpack.c.l.b16 %v2799
    %v2999 = vunpack.c.l.b16 %v2800
    %v3000 = vunpack.c.l.b16 %v2801
    %v3001 = vunpack.c.l.b16 %v2802
    %v3002 = vunpack.c.l.b16 %v2803
    %v3003 = vunpack.c.l.b16 %v2804
    %v3004 = vunpack.c.l.b16 %v2805
    %v3005 = vunpack.c.l.b16 %v2806
    %v3006 = vunpack.c.l.b16 %v2807
    %v3007 = vunpack.c.l.b16 %v2808
    %v3008 = vunpack.c.l.b16 %v2809
    %v3009 = vunpack.c.l.b16 %v2810
    %v3010 = vunpack.c.l.b16 %v2811
    %v3011 = vunpack.c.l.b16 %v2812
    %v3012 = vunpack.c.l.b16 %v2813
    %v3013 = vunpack.c.l.b16 %v2814
    %v3014 = vunpack.c.l.b16 %v2815
    %v3015 = vunpack.c.l.b16 %v2816
    %v3016 = vunpack.c.l.b16 %v2817
    %v3017 = vunpack.c.l.b16 %v2818
    %v3018 = vunpack.c.l.b16 %v2819
    %v3019 = vunpack.c.l.b16 %v2820
    %v3020 = vunpack.c.l.b16 %v2821
    %v3021 = vunpack.c.l.b16 %v2822
    %v3022 = vunpack.c.l.b16 %v2823
    %v3023 = vunpack.c.l.b16 %v2824
    %v3024 = vunpack.c.l.b16 %v2825
    %v3025 = vunpack.c.l.b16 %v2826
    %v3026 = vunpack.c.l.b16 %v2827
    %v3027 = vunpack.c.l.b16 %v2828
    %v3028 = vunpack.c.l.b16 %v2829
    %v3029 = vunpack.c.l.b16 %v2830
    %v3030 = vunpack.c.l.b16 %v2831
    %v3031 = vunpack.c.l.b16 %v2832
    %v3032 = vunpack.c.l.b16 %v2833
    %v3033 = vunpack.c.l.b16 %v2834
    %v3034 = vunpack.c.l.b16 %v2835
    %v3035 = vunpack.c.l.b16 %v2836
    %v3036 = vunpack.c.l.b16 %v2837
    %v3037 = vunpack.c.l.b16 %v2838
    %v3038 = vunpack.c.l.b16 %v2839
    %v3039 = vpack.c.b16 %v2944, %v2943
    %v3040 = vpack.c.b16 %v2946, %v2945
    %v3041 = vpack.c.b16 %v2948, %v2947
    %v3042 = vpack.c.b16 %v2950, %v2949
    %v3043 = vpack.c.b16 %v2952, %v2951
    %v3044 = vpack.c.b16 %v2954, %v2953
    %v3045 = vpack.c.b16 %v2956, %v2955
    %v3046 = vpack.c.b16 %v2958, %v2957
    %v3047 = vpack.c.b16 %v2960, %v2959
    %v3048 = vpack.c.b16 %v2962, %v2961
    %v3049 = vpack.c.b16 %v2964, %v2963
    %v3050 = vpack.c.b16 %v2966, %v2965
    %v3051 = vpack.c.b16 %v2968, %v2967
    %v3052 = vpack.c.b16 %v2970, %v2969
    %v3053 = vpack.c.b16 %v2972, %v2971
    %v3054 = vpack.c.b16 %v2974, %v2973
    %v3055 = vpack.c.b16 %v2976, %v2975
    %v3056 = vpack.c.b16 %v2978, %v2977
    %v3057 = vpack.c.b16 %v2980, %v2979
    %v3058 = vpack.c.b16 %v2982, %v2981
    %v3059 = vpack.c.b16 %v2984, %v2983
    %v3060 = vpack.c.b16 %v2986, %v2985
    %v3061 = vpack.c.b16 %v2988, %v2987
    %v3062 = vpack.c.b16 %v2990, %v2989
    %v3063 = vpack.c.b16 %v2992, %v2991
    %v3064 = vpack.c.b16 %v2994, %v2993
    %v3065 = vpack.c.b16 %v2996, %v2995
    %v3066 = vpack.c.b16 %v2998, %v2997
    %v3067 = vpack.c.b16 %v3000, %v2999
    %v3068 = vpack.c.b16 %v3002, %v3001
    %v3069 = vpack.c.b16 %v3004, %v3003
    %v3070 = vpack.c.b16 %v3006, %v3005
    %v3071 = vpack.c.b16 %v3008, %v3007
    %v3072 = vpack.c.b16 %v3010, %v3009
    %v3073 = vpack.c.b16 %v3012, %v3011
    %v3074 = vpack.c.b16 %v3014, %v3013
    %v3075 = vpack.c.b16 %v3016, %v3015
    %v3076 = vpack.c.b16 %v3018, %v3017
    %v3077 = vpack.c.b16 %v3020, %v3019
    %v3078 = vpack.c.b16 %v3022, %v3021
    %v3079 = vpack.c.b16 %v3024, %v3023
    %v3080 = vpack.c.b16 %v3026, %v3025
    %v3081 = vpack.c.b16 %v3028, %v3027
    %v3082 = vpack.c.b16 %v3030, %v3029
    %v3083 = vpack.c.b16 %v3032, %v3031
    %v3084 = vpack.c.b16 %v3034, %v3033
    %v3085 = vpack.c.b16 %v3036, %v3035
    %v3086 = vpack.c.b16 %v3038, %v3037
    %3135 = vmatprep.subr.bf16.mxu0 0
    %3136 = vmatpush1.bf16.msra.mxu0 %v3039
    %3137 = vmatprep.subr.bf16.mxu0 0
    %3138 = vmatpush1.bf16.msra.mxu0 %v3040
    %3139 = vmatprep.subr.bf16.mxu0 0
    %3140 = vmatpush1.bf16.msra.mxu0 %v3041
    %3141 = vmatprep.subr.bf16.mxu0 0
    %3142 = vmatpush1.bf16.msra.mxu0 %v3042
    %3143 = vmatprep.subr.bf16.mxu0 0
    %3144 = vmatpush1.bf16.msra.mxu0 %v3043
    %3145 = vmatprep.subr.bf16.mxu0 0
    %3146 = vmatpush1.bf16.msra.mxu0 %v3044
    %3147 = vmatprep.subr.bf16.mxu0 0
    %3148 = vmatpush1.bf16.msra.mxu0 %v3045
    %3149 = vmatprep.subr.bf16.mxu0 0
    %3150 = vmatpush1.bf16.msra.mxu0 %v3046
    %3151 = vmatprep.subr.bf16.mxu0 0
    %3152 = vmatpush1.bf16.msra.mxu0 %v3047
    %3153 = vmatprep.subr.bf16.mxu0 0
    %3154 = vmatpush1.bf16.msra.mxu0 %v3048
    %3155 = vmatprep.subr.bf16.mxu0 0
    %3156 = vmatpush1.bf16.msra.mxu0 %v3049
    %3157 = vmatprep.subr.bf16.mxu0 0
    %3158 = vmatpush1.bf16.msra.mxu0 %v3050
    %3159 = vmatprep.subr.bf16.mxu0 0
    %3160 = vmatpush1.bf16.msra.mxu0 %v3051
    %3161 = vmatprep.subr.bf16.mxu0 0
    %3162 = vmatpush1.bf16.msra.mxu0 %v3052
    %3163 = vmatprep.subr.bf16.mxu0 0
    %3164 = vmatpush1.bf16.msra.mxu0 %v3053
    %3165 = vmatprep.subr.bf16.mxu0 0
    %3166 = vmatpush1.bf16.msra.mxu0 %v3054
    %3167 = vmatprep.mubr.bf16.mxu0 %v2739
    %3168 = vmatmul.mubr.bf16.gmra.mrb[0].mxu0 %v2738
    %v3169 = vpop.f32.mrb[0].mxu0
    %v3170 = vadd.f32 %v2845, %v3169
    %v3171 = vpop.f32.mrb[0].mxu0
    %v3172 = vpop.f32.mrb[0].mxu0
    %v3173 = vadd.f32 %v2845, %v3172
    %v3174 = vpop.f32.mrb[0].mxu0
    %3175 = vdwg.mxu0
    %3176 = vmatprep.subr.bf16.mxu0 0
    %3177 = vmatpush1.bf16.msra.mxu0 %v3055
    %3178 = vmatprep.subr.bf16.mxu0 0
    %3179 = vmatpush1.bf16.msra.mxu0 %v3056
    %3180 = vmatprep.subr.bf16.mxu0 0
    %3181 = vmatpush1.bf16.msra.mxu0 %v3057
    %3182 = vmatprep.subr.bf16.mxu0 0
    %3183 = vmatpush1.bf16.msra.mxu0 %v3058
    %3184 = vmatprep.subr.bf16.mxu0 0
    %3185 = vmatpush1.bf16.msra.mxu0 %v3059
    %3186 = vmatprep.subr.bf16.mxu0 0
    %3187 = vmatpush1.bf16.msra.mxu0 %v3060
    %3188 = vmatprep.subr.bf16.mxu0 0
    %3189 = vmatpush1.bf16.msra.mxu0 %v3061
    %3190 = vmatprep.subr.bf16.mxu0 0
    %3191 = vmatpush1.bf16.msra.mxu0 %v3062
    %3192 = vmatprep.subr.bf16.mxu0 0
    %3193 = vmatpush1.bf16.msra.mxu0 %v3063
    %3194 = vmatprep.subr.bf16.mxu0 0
    %3195 = vmatpush1.bf16.msra.mxu0 %v3064
    %3196 = vmatprep.subr.bf16.mxu0 0
    %3197 = vmatpush1.bf16.msra.mxu0 %v3065
    %3198 = vmatprep.subr.bf16.mxu0 0
    %3199 = vmatpush1.bf16.msra.mxu0 %v3066
    %3200 = vmatprep.subr.bf16.mxu0 0
    %3201 = vmatpush1.bf16.msra.mxu0 %v3067
    %3202 = vmatprep.subr.bf16.mxu0 0
    %3203 = vmatpush1.bf16.msra.mxu0 %v3068
    %3204 = vmatprep.subr.bf16.mxu0 0
    %3205 = vmatpush1.bf16.msra.mxu0 %v3069
    %3206 = vmatprep.subr.bf16.mxu0 0
    %3207 = vmatpush1.bf16.msra.mxu0 %v3070
    %3208 = vmatprep.mubr.bf16.mxu0 %v2741
    %3209 = vmatmul.mubr.bf16.gmra.mrb[0].mxu0 %v2740
    %v3210 = vpop.f32.mrb[0].mxu0
    %v3211 = vadd.f32 %v3170, %v3210
    %v3212 = vpop.f32.mrb[0].mxu0
    %v3213 = vpop.f32.mrb[0].mxu0
    %v3214 = vadd.f32 %v3173, %v3213
    %v3215 = vpop.f32.mrb[0].mxu0
    %3216 = vdwg.mxu0
    %3217 = vmatprep.subr.bf16.mxu0 0
    %3218 = vmatpush1.bf16.msra.mxu0 %v3071
    %3219 = vmatprep.subr.bf16.mxu0 0
    %3220 = vmatpush1.bf16.msra.mxu0 %v3072
    %3221 = vmatprep.subr.bf16.mxu0 0
    %3222 = vmatpush1.bf16.msra.mxu0 %v3073
    %3223 = vmatprep.subr.bf16.mxu0 0
    %3224 = vmatpush1.bf16.msra.mxu0 %v3074
    %3225 = vmatprep.subr.bf16.mxu0 0
    %3226 = vmatpush1.bf16.msra.mxu0 %v3075
    %3227 = vmatprep.subr.bf16.mxu0 0
    %3228 = vmatpush1.bf16.msra.mxu0 %v3076
    %3229 = vmatprep.subr.bf16.mxu0 0
    %3230 = vmatpush1.bf16.msra.mxu0 %v3077
    %3231 = vmatprep.subr.bf16.mxu0 0
    %3232 = vmatpush1.bf16.msra.mxu0 %v3078
    %3233 = vmatprep.subr.bf16.mxu0 0
    %3234 = vmatpush1.bf16.msra.mxu0 %v3079
    %3235 = vmatprep.subr.bf16.mxu0 0
    %3236 = vmatpush1.bf16.msra.mxu0 %v3080
    %3237 = vmatprep.subr.bf16.mxu0 0
    %3238 = vmatpush1.bf16.msra.mxu0 %v3081
    %3239 = vmatprep.subr.bf16.mxu0 0
    %3240 = vmatpush1.bf16.msra.mxu0 %v3082
    %3241 = vmatprep.subr.bf16.mxu0 0
    %3242 = vmatpush1.bf16.msra.mxu0 %v3083
    %3243 = vmatprep.subr.bf16.mxu0 0
    %3244 = vmatpush1.bf16.msra.mxu0 %v3084
    %3245 = vmatprep.subr.bf16.mxu0 0
    %3246 = vmatpush1.bf16.msra.mxu0 %v3085
    %3247 = vmatprep.subr.bf16.mxu0 0
    %3248 = vmatpush1.bf16.msra.mxu0 %v3086
    %3249 = vmatprep.mubr.bf16.mxu0 %v2743
    %3250 = vmatmul.mubr.bf16.gmra.mrb[0].mxu0 %v2742
    %v3251 = vpop.f32.mrb[0].mxu0
    %v3252 = vadd.f32 %v3211, %v3251
    %v3253 = vpop.f32.mrb[0].mxu0
    %v3254 = vpop.f32.mrb[0].mxu0
    %v3255 = vadd.f32 %v3214, %v3254
    %v3256 = vpop.f32.mrb[0].mxu0
    %3257 = vdwg.mxu0
    %v3258 = vmax.f32 %v3252, 0.0
    %v3259 = vmax.f32 %v3255, 0.0
    %v3261 = vrot.slane %v3258, 1
    %v3263 = vrot.slane %v3258, 2
    %v3265 = vrot.slane %v3258, 3
    %v3267 = vrot.slane %v3258, 4
    %v3269 = vrot.slane %v3258, 5
    %v3271 = vrot.slane %v3258, 6
    %v3273 = vrot.slane %v3258, 7
    %v3276 = vrot.slane %v3259, 1
    %v3278 = vpack.c.bf16 %v3258, %v3258
    %v3279 = vpack.c.bf16 %v3261, %v3261
    %v3280 = vpack.c.bf16 %v3263, %v3263
    %v3281 = vpack.c.bf16 %v3265, %v3265
    %v3282 = vpack.c.bf16 %v3267, %v3267
    %v3283 = vpack.c.bf16 %v3269, %v3269
    %v3284 = vpack.c.bf16 %v3271, %v3271
    %v3285 = vpack.c.bf16 %v3273, %v3273
    %v3286 = vpack.c.bf16 %v3259, %v3259
    %v3287 = vpack.c.bf16 %v3276, %v3276
    %v3288 = vld [vmem:[%s10] sm:$0xf]
    %v3289 = vld [vmem:[%s10 + $0x4] sm:$0xf]
    %v3290 = vld [vmem:[%s10 + $0x8] sm:$0xf]
    %v3291 = vld [vmem:[%s10 + $0xc] sm:$0xf]
    %v3292 = vld [vmem:[%s10 + $0x10] sm:$0xf]
    %v3293 = vld [vmem:[%s10 + $0x14] sm:$0xf]
    %v3294 = vld [vmem:[%s10 + $0x18] sm:$0xf]
    %v3295 = vld [vmem:[%s10 + $0x1c] sm:$0xf]
    %v3296 = vld [vmem:[%s10 + $0x20] sm:$0xf]
    %v3297 = vld [vmem:[%s10 + $0x24] sm:$0xf]
    %v3298 = vld [vmem:[%s10 + $0x28] sm:$0xf]
    %v3299 = vld [vmem:[%s10 + $0x2c] sm:$0xf]
    %v3300 = vld [vmem:[%s10 + $0x30] sm:$0xf]
    %v3301 = vld [vmem:[%s10 + $0x34] sm:$0xf]
    %v3302 = vld [vmem:[%s10 + $0x38] sm:$0xf]
    %v3303 = vld [vmem:[%s10 + $0x3c] sm:$0xf]
    %v3304 = vld [vmem:[%s10 + $0x40] sm:$0xf]
    %v3305 = vld [vmem:[%s10 + $0x44] sm:$0xf]
    %v3306 = vld [vmem:[%s10 + $0x48] sm:$0xf]
    %v3307 = vld [vmem:[%s10 + $0x4c] sm:$0xf]
    %v3308 = vld [vmem:[%s10 + $0x50] sm:$0xf]
    %v3309 = vld [vmem:[%s10 + $0x54] sm:$0xf]
    %v3310 = vld [vmem:[%s10 + $0x58] sm:$0xf]
    %v3311 = vld [vmem:[%s10 + $0x5c] sm:$0xf]
    %v3312 = vld [vmem:[%s10 + $0x60] sm:$0xf]
    %v3313 = vld [vmem:[%s10 + $0x64] sm:$0xf]
    %v3314 = vld [vmem:[%s10 + $0x68] sm:$0xf]
    %v3315 = vld [vmem:[%s10 + $0x6c] sm:$0xf]
    %v3316 = vld [vmem:[%s10 + $0x70] sm:$0xf]
    %v3317 = vld [vmem:[%s10 + $0x74] sm:$0xf]
    %v3318 = vld [vmem:[%s10 + $0x78] sm:$0xf]
    %v3319 = vld [vmem:[%s10 + $0x7c] sm:$0xf]
    %v3320 = vld [vmem:[%s10 + $0x80] sm:$0xf]
    %v3321 = vld [vmem:[%s10 + $0x84] sm:$0xf]
    %v3322 = vld [vmem:[%s10 + $0x88] sm:$0xf]
    %v3323 = vld [vmem:[%s10 + $0x8c] sm:$0xf]
    %v3324 = vld [vmem:[%s10 + $0x90] sm:$0xf]
    %v3325 = vld [vmem:[%s10 + $0x94] sm:$0xf]
    %v3326 = vld [vmem:[%s10 + $0x98] sm:$0xf]
    %v3327 = vld [vmem:[%s10 + $0x9c] sm:$0xf]
    %v3328 = vld [vmem:[%s10 + $0xa0] sm:$0xf]
    %v3329 = vld [vmem:[%s10 + $0xa4] sm:$0xf]
    %v3330 = vld [vmem:[%s10 + $0xa8] sm:$0xf]
    %v3331 = vld [vmem:[%s10 + $0xac] sm:$0xf]
    %v3332 = vld [vmem:[%s10 + $0xb0] sm:$0xf]
    %v3333 = vld [vmem:[%s10 + $0xb4] sm:$0xf]
    %v3334 = vld [vmem:[%s10 + $0xb8] sm:$0xf]
    %v3335 = vld [vmem:[%s10 + $0xbc] sm:$0xf]
    %v3336 = vld [vmem:[%s10 + $0xc0] sm:$0xf]
    %v3337 = vld [vmem:[%s10 + $0xc4] sm:$0xf]
    %v3338 = vld [vmem:[%s10 + $0xc8] sm:$0xf]
    %v3339 = vld [vmem:[%s10 + $0xcc] sm:$0xf]
    %v3340 = vld [vmem:[%s10 + $0xd0] sm:$0xf]
    %v3341 = vld [vmem:[%s10 + $0xd4] sm:$0xf]
    %v3342 = vld [vmem:[%s10 + $0xd8] sm:$0xf]
    %v3343 = vld [vmem:[%s10 + $0xdc] sm:$0xf]
    %v3344 = vld [vmem:[%s10 + $0xe0] sm:$0xf]
    %v3345 = vld [vmem:[%s10 + $0xe4] sm:$0xf]
    %v3346 = vld [vmem:[%s10 + $0xe8] sm:$0xf]
    %v3347 = vld [vmem:[%s10 + $0xec] sm:$0xf]
    %v3348 = vld [vmem:[%s10 + $0xf0] sm:$0xf]
    %v3349 = vld [vmem:[%s10 + $0xf4] sm:$0xf]
    %v3350 = vld [vmem:[%s10 + $0xf8] sm:$0xf]
    %v3351 = vld [vmem:[%s10 + $0xfc] sm:$0xf]
    %v3352 = vld [vmem:[%s10 + $0x100] sm:$0xf]
    %v3353 = vld [vmem:[%s10 + $0x104] sm:$0xf]
    %v3354 = vld [vmem:[%s10 + $0x108] sm:$0xf]
    %v3355 = vld [vmem:[%s10 + $0x10c] sm:$0xf]
    %v3356 = vld [vmem:[%s10 + $0x110] sm:$0xf]
    %v3357 = vld [vmem:[%s10 + $0x114] sm:$0xf]
    %v3358 = vld [vmem:[%s10 + $0x118] sm:$0xf]
    %v3359 = vld [vmem:[%s10 + $0x11c] sm:$0xf]
    %v3360 = vld [vmem:[%s10 + $0x120] sm:$0xf]
    %v3361 = vld [vmem:[%s10 + $0x124] sm:$0xf]
    %v3362 = vld [vmem:[%s10 + $0x128] sm:$0xf]
    %v3363 = vld [vmem:[%s10 + $0x12c] sm:$0xf]
    %v3364 = vld [vmem:[%s10 + $0x130] sm:$0xf]
    %v3365 = vld [vmem:[%s10 + $0x134] sm:$0xf]
    %v3366 = vld [vmem:[%s10 + $0x138] sm:$0xf]
    %v3367 = vld [vmem:[%s10 + $0x13c] sm:$0xf]
    %v3368 = vld [vmem:[%s10 + $0x140] sm:$0xf]
    %v3369 = vld [vmem:[%s10 + $0x144] sm:$0xf]
    %v3370 = vld [vmem:[%s10 + $0x148] sm:$0xf]
    %v3371 = vld [vmem:[%s10 + $0x14c] sm:$0xf]
    %v3372 = vld [vmem:[%s10 + $0x150] sm:$0xf]
    %v3373 = vld [vmem:[%s10 + $0x154] sm:$0xf]
    %v3374 = vld [vmem:[%s10 + $0x158] sm:$0xf]
    %v3375 = vld [vmem:[%s10 + $0x15c] sm:$0xf]
    %v3376 = vld [vmem:[%s10 + $0x160] sm:$0xf]
    %v3377 = vld [vmem:[%s10 + $0x164] sm:$0xf]
    %v3378 = vld [vmem:[%s10 + $0x168] sm:$0xf]
    %v3379 = vld [vmem:[%s10 + $0x16c] sm:$0xf]
    %v3380 = vld [vmem:[%s10 + $0x170] sm:$0xf]
    %v3381 = vld [vmem:[%s10 + $0x174] sm:$0xf]
    %v3382 = vld [vmem:[%s10 + $0x178] sm:$0xf]
    %v3383 = vld [vmem:[%s10 + $0x17c] sm:$0xf]
    %v3384 = vld [vmem:[%s10 + $0x180] sm:$0xf]
    %v3385 = vld [vmem:[%s10 + $0x184] sm:$0xf]
    %v3386 = vld [vmem:[%s10 + $0x188] sm:$0xf]
    %v3387 = vld [vmem:[%s10 + $0x18c] sm:$0xf]
    %v3388 = vld [vmem:[%s10 + $0x190] sm:$0xf]
    %v3389 = vld [vmem:[%s10 + $0x194] sm:$0xf]
    %v3390 = vld [vmem:[%s10 + $0x198] sm:$0xf]
    %v3391 = vld [vmem:[%s10 + $0x19c] sm:$0xf]
    %v3392 = vld [vmem:[%s10 + $0x1a0] sm:$0xf]
    %v3393 = vld [vmem:[%s10 + $0x1a4] sm:$0xf]
    %v3394 = vld [vmem:[%s10 + $0x1a8] sm:$0xf]
    %v3395 = vld [vmem:[%s10 + $0x1ac] sm:$0xf]
    %v3396 = vld [vmem:[%s10 + $0x1b0] sm:$0xf]
    %v3397 = vld [vmem:[%s10 + $0x1b4] sm:$0xf]
    %v3398 = vld [vmem:[%s10 + $0x1b8] sm:$0xf]
    %v3399 = vld [vmem:[%s10 + $0x1bc] sm:$0xf]
    %v3400 = vld [vmem:[%s10 + $0x1c0] sm:$0xf]
    %v3401 = vld [vmem:[%s10 + $0x1c4] sm:$0xf]
    %v3402 = vld [vmem:[%s10 + $0x1c8] sm:$0xf]
    %v3403 = vld [vmem:[%s10 + $0x1cc] sm:$0xf]
    %v3404 = vld [vmem:[%s10 + $0x1d0] sm:$0xf]
    %v3405 = vld [vmem:[%s10 + $0x1d4] sm:$0xf]
    %v3406 = vld [vmem:[%s10 + $0x1d8] sm:$0xf]
    %v3407 = vld [vmem:[%s10 + $0x1dc] sm:$0xf]
    %v3408 = vld [vmem:[%s10 + $0x1e0] sm:$0xf]
    %v3409 = vld [vmem:[%s10 + $0x1e4] sm:$0xf]
    %v3410 = vld [vmem:[%s10 + $0x1e8] sm:$0xf]
    %v3411 = vld [vmem:[%s10 + $0x1ec] sm:$0xf]
    %v3412 = vld [vmem:[%s10 + $0x1f0] sm:$0xf]
    %v3413 = vld [vmem:[%s10 + $0x1f4] sm:$0xf]
    %v3414 = vld [vmem:[%s10 + $0x1f8] sm:$0xf]
    %v3415 = vld [vmem:[%s10 + $0x1fc] sm:$0xf]
    %v3416 = vld [vmem:[%s10 + $0x200] sm:$0xf]
    %v3417 = vld [vmem:[%s10 + $0x204] sm:$0xf]
    %v3418 = vld [vmem:[%s10 + $0x208] sm:$0xf]
    %v3419 = vld [vmem:[%s10 + $0x20c] sm:$0xf]
    %v3420 = vld [vmem:[%s10 + $0x210] sm:$0xf]
    %v3421 = vld [vmem:[%s10 + $0x214] sm:$0xf]
    %v3422 = vld [vmem:[%s10 + $0x218] sm:$0xf]
    %v3423 = vld [vmem:[%s10 + $0x21c] sm:$0xf]
    %v3424 = vld [vmem:[%s10 + $0x220] sm:$0xf]
    %v3425 = vld [vmem:[%s10 + $0x224] sm:$0xf]
    %v3426 = vld [vmem:[%s10 + $0x228] sm:$0xf]
    %v3427 = vld [vmem:[%s10 + $0x22c] sm:$0xf]
    %v3428 = vld [vmem:[%s10 + $0x230] sm:$0xf]
    %v3429 = vld [vmem:[%s10 + $0x234] sm:$0xf]
    %v3430 = vld [vmem:[%s10 + $0x238] sm:$0xf]
    %v3431 = vld [vmem:[%s10 + $0x23c] sm:$0xf]
    %v3432 = vld [vmem:[%s10 + $0x240] sm:$0xf]
    %v3433 = vld [vmem:[%s10 + $0x244] sm:$0xf]
    %v3434 = vld [vmem:[%s10 + $0x248] sm:$0xf]
    %v3435 = vld [vmem:[%s10 + $0x24c] sm:$0xf]
    %v3436 = vld [vmem:[%s10 + $0x250] sm:$0xf]
    %v3437 = vld [vmem:[%s10 + $0x254] sm:$0xf]
    %v3438 = vld [vmem:[%s10 + $0x258] sm:$0xf]
    %v3439 = vld [vmem:[%s10 + $0x25c] sm:$0xf]
    %v3440 = vld [vmem:[%s10 + $0x260] sm:$0xf]
    %v3441 = vld [vmem:[%s10 + $0x264] sm:$0xf]
    %v3442 = vld [vmem:[%s10 + $0x268] sm:$0xf]
    %v3443 = vld [vmem:[%s10 + $0x26c] sm:$0xf]
    %v3444 = vld [vmem:[%s10 + $0x270] sm:$0xf]
    %v3445 = vld [vmem:[%s10 + $0x274] sm:$0xf]
    %v3446 = vld [vmem:[%s10 + $0x278] sm:$0xf]
    %v3447 = vld [vmem:[%s10 + $0x27c] sm:$0xf]
    %v3448 = vld [vmem:[#allocation9] sm:$0x1]
    %v3609 = vunpack.c.l.b16 %v3288
    %v3610 = vunpack.c.l.b16 %v3289
    %v3611 = vunpack.c.l.b16 %v3290
    %v3612 = vunpack.c.l.b16 %v3291
    %v3613 = vunpack.c.l.b16 %v3292
    %v3614 = vunpack.c.l.b16 %v3293
    %v3615 = vunpack.c.l.b16 %v3294
    %v3616 = vunpack.c.l.b16 %v3295
    %v3617 = vunpack.c.l.b16 %v3296
    %v3618 = vunpack.c.l.b16 %v3297
    %v3619 = vunpack.c.l.b16 %v3298
    %v3620 = vunpack.c.l.b16 %v3299
    %v3621 = vunpack.c.l.b16 %v3300
    %v3622 = vunpack.c.l.b16 %v3301
    %v3623 = vunpack.c.l.b16 %v3302
    %v3624 = vunpack.c.l.b16 %v3303
    %v3625 = vunpack.c.l.b16 %v3304
    %v3626 = vunpack.c.l.b16 %v3305
    %v3627 = vunpack.c.l.b16 %v3306
    %v3628 = vunpack.c.l.b16 %v3307
    %v3629 = vunpack.c.l.b16 %v3308
    %v3630 = vunpack.c.l.b16 %v3309
    %v3631 = vunpack.c.l.b16 %v3310
    %v3632 = vunpack.c.l.b16 %v3311
    %v3633 = vunpack.c.l.b16 %v3312
    %v3634 = vunpack.c.l.b16 %v3313
    %v3635 = vunpack.c.l.b16 %v3314
    %v3636 = vunpack.c.l.b16 %v3315
    %v3637 = vunpack.c.l.b16 %v3316
    %v3638 = vunpack.c.l.b16 %v3317
    %v3639 = vunpack.c.l.b16 %v3318
    %v3640 = vunpack.c.l.b16 %v3319
    %v3641 = vunpack.c.l.b16 %v3320
    %v3642 = vunpack.c.l.b16 %v3321
    %v3643 = vunpack.c.l.b16 %v3322
    %v3644 = vunpack.c.l.b16 %v3323
    %v3645 = vunpack.c.l.b16 %v3324
    %v3646 = vunpack.c.l.b16 %v3325
    %v3647 = vunpack.c.l.b16 %v3326
    %v3648 = vunpack.c.l.b16 %v3327
    %v3649 = vunpack.c.l.b16 %v3328
    %v3650 = vunpack.c.l.b16 %v3329
    %v3651 = vunpack.c.l.b16 %v3330
    %v3652 = vunpack.c.l.b16 %v3331
    %v3653 = vunpack.c.l.b16 %v3332
    %v3654 = vunpack.c.l.b16 %v3333
    %v3655 = vunpack.c.l.b16 %v3334
    %v3656 = vunpack.c.l.b16 %v3335
    %v3657 = vunpack.c.l.b16 %v3336
    %v3658 = vunpack.c.l.b16 %v3337
    %v3659 = vunpack.c.l.b16 %v3338
    %v3660 = vunpack.c.l.b16 %v3339
    %v3661 = vunpack.c.l.b16 %v3340
    %v3662 = vunpack.c.l.b16 %v3341
    %v3663 = vunpack.c.l.b16 %v3342
    %v3664 = vunpack.c.l.b16 %v3343
    %v3665 = vunpack.c.l.b16 %v3344
    %v3666 = vunpack.c.l.b16 %v3345
    %v3667 = vunpack.c.l.b16 %v3346
    %v3668 = vunpack.c.l.b16 %v3347
    %v3669 = vunpack.c.l.b16 %v3348
    %v3670 = vunpack.c.l.b16 %v3349
    %v3671 = vunpack.c.l.b16 %v3350
    %v3672 = vunpack.c.l.b16 %v3351
    %v3673 = vunpack.c.l.b16 %v3352
    %v3674 = vunpack.c.l.b16 %v3353
    %v3675 = vunpack.c.l.b16 %v3354
    %v3676 = vunpack.c.l.b16 %v3355
    %v3677 = vunpack.c.l.b16 %v3356
    %v3678 = vunpack.c.l.b16 %v3357
    %v3679 = vunpack.c.l.b16 %v3358
    %v3680 = vunpack.c.l.b16 %v3359
    %v3681 = vunpack.c.l.b16 %v3360
    %v3682 = vunpack.c.l.b16 %v3361
    %v3683 = vunpack.c.l.b16 %v3362
    %v3684 = vunpack.c.l.b16 %v3363
    %v3685 = vunpack.c.l.b16 %v3364
    %v3686 = vunpack.c.l.b16 %v3365
    %v3687 = vunpack.c.l.b16 %v3366
    %v3688 = vunpack.c.l.b16 %v3367
    %v3689 = vunpack.c.l.b16 %v3368
    %v3690 = vunpack.c.l.b16 %v3369
    %v3691 = vunpack.c.l.b16 %v3370
    %v3692 = vunpack.c.l.b16 %v3371
    %v3693 = vunpack.c.l.b16 %v3372
    %v3694 = vunpack.c.l.b16 %v3373
    %v3695 = vunpack.c.l.b16 %v3374
    %v3696 = vunpack.c.l.b16 %v3375
    %v3697 = vunpack.c.l.b16 %v3376
    %v3698 = vunpack.c.l.b16 %v3377
    %v3699 = vunpack.c.l.b16 %v3378
    %v3700 = vunpack.c.l.b16 %v3379
    %v3701 = vunpack.c.l.b16 %v3380
    %v3702 = vunpack.c.l.b16 %v3381
    %v3703 = vunpack.c.l.b16 %v3382
    %v3704 = vunpack.c.l.b16 %v3383
    %v3705 = vunpack.c.l.b16 %v3384
    %v3706 = vunpack.c.l.b16 %v3385
    %v3707 = vunpack.c.l.b16 %v3386
    %v3708 = vunpack.c.l.b16 %v3387
    %v3709 = vunpack.c.l.b16 %v3388
    %v3710 = vunpack.c.l.b16 %v3389
    %v3711 = vunpack.c.l.b16 %v3390
    %v3712 = vunpack.c.l.b16 %v3391
    %v3713 = vunpack.c.l.b16 %v3392
    %v3714 = vunpack.c.l.b16 %v3393
    %v3715 = vunpack.c.l.b16 %v3394
    %v3716 = vunpack.c.l.b16 %v3395
    %v3717 = vunpack.c.l.b16 %v3396
    %v3718 = vunpack.c.l.b16 %v3397
    %v3719 = vunpack.c.l.b16 %v3398
    %v3720 = vunpack.c.l.b16 %v3399
    %v3721 = vunpack.c.l.b16 %v3400
    %v3722 = vunpack.c.l.b16 %v3401
    %v3723 = vunpack.c.l.b16 %v3402
    %v3724 = vunpack.c.l.b16 %v3403
    %v3725 = vunpack.c.l.b16 %v3404
    %v3726 = vunpack.c.l.b16 %v3405
    %v3727 = vunpack.c.l.b16 %v3406
    %v3728 = vunpack.c.l.b16 %v3407
    %v3729 = vunpack.c.l.b16 %v3408
    %v3730 = vunpack.c.l.b16 %v3409
    %v3731 = vunpack.c.l.b16 %v3410
    %v3732 = vunpack.c.l.b16 %v3411
    %v3733 = vunpack.c.l.b16 %v3412
    %v3734 = vunpack.c.l.b16 %v3413
    %v3735 = vunpack.c.l.b16 %v3414
    %v3736 = vunpack.c.l.b16 %v3415
    %v3737 = vunpack.c.l.b16 %v3416
    %v3738 = vunpack.c.l.b16 %v3417
    %v3739 = vunpack.c.l.b16 %v3418
    %v3740 = vunpack.c.l.b16 %v3419
    %v3741 = vunpack.c.l.b16 %v3420
    %v3742 = vunpack.c.l.b16 %v3421
    %v3743 = vunpack.c.l.b16 %v3422
    %v3744 = vunpack.c.l.b16 %v3423
    %v3745 = vunpack.c.l.b16 %v3424
    %v3746 = vunpack.c.l.b16 %v3425
    %v3747 = vunpack.c.l.b16 %v3426
    %v3748 = vunpack.c.l.b16 %v3427
    %v3749 = vunpack.c.l.b16 %v3428
    %v3750 = vunpack.c.l.b16 %v3429
    %v3751 = vunpack.c.l.b16 %v3430
    %v3752 = vunpack.c.l.b16 %v3431
    %v3753 = vunpack.c.l.b16 %v3432
    %v3754 = vunpack.c.l.b16 %v3433
    %v3755 = vunpack.c.l.b16 %v3434
    %v3756 = vunpack.c.l.b16 %v3435
    %v3757 = vunpack.c.l.b16 %v3436
    %v3758 = vunpack.c.l.b16 %v3437
    %v3759 = vunpack.c.l.b16 %v3438
    %v3760 = vunpack.c.l.b16 %v3439
    %v3761 = vunpack.c.l.b16 %v3440
    %v3762 = vunpack.c.l.b16 %v3441
    %v3763 = vunpack.c.l.b16 %v3442
    %v3764 = vunpack.c.l.b16 %v3443
    %v3765 = vunpack.c.l.b16 %v3444
    %v3766 = vunpack.c.l.b16 %v3445
    %v3767 = vunpack.c.l.b16 %v3446
    %v3768 = vunpack.c.l.b16 %v3447
    %v3769 = vpack.c.b16 %v3610, %v3609
    %v3770 = vpack.c.b16 %v3612, %v3611
    %v3771 = vpack.c.b16 %v3614, %v3613
    %v3772 = vpack.c.b16 %v3616, %v3615
    %v3773 = vpack.c.b16 %v3618, %v3617
    %v3774 = vpack.c.b16 %v3620, %v3619
    %v3775 = vpack.c.b16 %v3622, %v3621
    %v3776 = vpack.c.b16 %v3624, %v3623
    %v3777 = vpack.c.b16 %v3626, %v3625
    %v3778 = vpack.c.b16 %v3628, %v3627
    %v3779 = vpack.c.b16 %v3630, %v3629
    %v3780 = vpack.c.b16 %v3632, %v3631
    %v3781 = vpack.c.b16 %v3634, %v3633
    %v3782 = vpack.c.b16 %v3636, %v3635
    %v3783 = vpack.c.b16 %v3638, %v3637
    %v3784 = vpack.c.b16 %v3640, %v3639
    %v3785 = vpack.c.b16 %v3642, %v3641
    %v3786 = vpack.c.b16 %v3644, %v3643
    %v3787 = vpack.c.b16 %v3646, %v3645
    %v3788 = vpack.c.b16 %v3648, %v3647
    %v3789 = vpack.c.b16 %v3650, %v3649
    %v3790 = vpack.c.b16 %v3652, %v3651
    %v3791 = vpack.c.b16 %v3654, %v3653
    %v3792 = vpack.c.b16 %v3656, %v3655
    %v3793 = vpack.c.b16 %v3658, %v3657
    %v3794 = vpack.c.b16 %v3660, %v3659
    %v3795 = vpack.c.b16 %v3662, %v3661
    %v3796 = vpack.c.b16 %v3664, %v3663
    %v3797 = vpack.c.b16 %v3666, %v3665
    %v3798 = vpack.c.b16 %v3668, %v3667
    %v3799 = vpack.c.b16 %v3670, %v3669
    %v3800 = vpack.c.b16 %v3672, %v3671
    %v3801 = vpack.c.b16 %v3674, %v3673
    %v3802 = vpack.c.b16 %v3676, %v3675
    %v3803 = vpack.c.b16 %v3678, %v3677
    %v3804 = vpack.c.b16 %v3680, %v3679
    %v3805 = vpack.c.b16 %v3682, %v3681
    %v3806 = vpack.c.b16 %v3684, %v3683
    %v3807 = vpack.c.b16 %v3686, %v3685
    %v3808 = vpack.c.b16 %v3688, %v3687
    %v3809 = vpack.c.b16 %v3690, %v3689
    %v3810 = vpack.c.b16 %v3692, %v3691
    %v3811 = vpack.c.b16 %v3694, %v3693
    %v3812 = vpack.c.b16 %v3696, %v3695
    %v3813 = vpack.c.b16 %v3698, %v3697
    %v3814 = vpack.c.b16 %v3700, %v3699
    %v3815 = vpack.c.b16 %v3702, %v3701
    %v3816 = vpack.c.b16 %v3704, %v3703
    %v3817 = vpack.c.b16 %v3706, %v3705
    %v3818 = vpack.c.b16 %v3708, %v3707
    %v3819 = vpack.c.b16 %v3710, %v3709
    %v3820 = vpack.c.b16 %v3712, %v3711
    %v3821 = vpack.c.b16 %v3714, %v3713
    %v3822 = vpack.c.b16 %v3716, %v3715
    %v3823 = vpack.c.b16 %v3718, %v3717
    %v3824 = vpack.c.b16 %v3720, %v3719
    %v3825 = vpack.c.b16 %v3722, %v3721
    %v3826 = vpack.c.b16 %v3724, %v3723
    %v3827 = vpack.c.b16 %v3726, %v3725
    %v3828 = vpack.c.b16 %v3728, %v3727
    %v3829 = vpack.c.b16 %v3730, %v3729
    %v3830 = vpack.c.b16 %v3732, %v3731
    %v3831 = vpack.c.b16 %v3734, %v3733
    %v3832 = vpack.c.b16 %v3736, %v3735
    %v3833 = vpack.c.b16 %v3738, %v3737
    %v3834 = vpack.c.b16 %v3740, %v3739
    %v3835 = vpack.c.b16 %v3742, %v3741
    %v3836 = vpack.c.b16 %v3744, %v3743
    %v3837 = vpack.c.b16 %v3746, %v3745
    %v3838 = vpack.c.b16 %v3748, %v3747
    %v3839 = vpack.c.b16 %v3750, %v3749
    %v3840 = vpack.c.b16 %v3752, %v3751
    %v3841 = vpack.c.b16 %v3754, %v3753
    %v3842 = vpack.c.b16 %v3756, %v3755
    %v3843 = vpack.c.b16 %v3758, %v3757
    %v3844 = vpack.c.b16 %v3760, %v3759
    %v3845 = vpack.c.b16 %v3762, %v3761
    %v3846 = vpack.c.b16 %v3764, %v3763
    %v3847 = vpack.c.b16 %v3766, %v3765
    %v3848 = vpack.c.b16 %v3768, %v3767
    %3929 = vmatprep.subr.bf16.mxu0 0
    %3930 = vmatpush1.bf16.msra.mxu0 %v3769
    %3931 = vmatprep.subr.bf16.mxu0 0
    %3932 = vmatpush1.bf16.msra.mxu0 %v3770
    %3933 = vmatprep.subr.bf16.mxu0 0
    %3934 = vmatpush1.bf16.msra.mxu0 %v3771
    %3935 = vmatprep.subr.bf16.mxu0 0
    %3936 = vmatpush1.bf16.msra.mxu0 %v3772
    %3937 = vmatprep.subr.bf16.mxu0 0
    %3938 = vmatpush1.bf16.msra.mxu0 %v3773
    %3939 = vmatprep.subr.bf16.mxu0 0
    %3940 = vmatpush1.bf16.msra.mxu0 %v3774
    %3941 = vmatprep.subr.bf16.mxu0 0
    %3942 = vmatpush1.bf16.msra.mxu0 %v3775
    %3943 = vmatprep.subr.bf16.mxu0 0
    %3944 = vmatpush1.bf16.msra.mxu0 %v3776
    %3945 = vmatprep.subr.bf16.mxu0 0
    %3946 = vmatpush1.bf16.msra.mxu0 %v3777
    %3947 = vmatprep.subr.bf16.mxu0 0
    %3948 = vmatpush1.bf16.msra.mxu0 %v3778
    %3949 = vmatprep.subr.bf16.mxu0 0
    %3950 = vmatpush1.bf16.msra.mxu0 %v3779
    %3951 = vmatprep.subr.bf16.mxu0 0
    %3952 = vmatpush1.bf16.msra.mxu0 %v3780
    %3953 = vmatprep.subr.bf16.mxu0 0
    %3954 = vmatpush1.bf16.msra.mxu0 %v3781
    %3955 = vmatprep.subr.bf16.mxu0 0
    %3956 = vmatpush1.bf16.msra.mxu0 %v3782
    %3957 = vmatprep.subr.bf16.mxu0 0
    %3958 = vmatpush1.bf16.msra.mxu0 %v3783
    %3959 = vmatprep.subr.bf16.mxu0 0
    %3960 = vmatpush1.bf16.msra.mxu0 %v3784
    %3961 = vmatprep.mubr.bf16.mxu0 %v3279
    %3962 = vmatmul.mubr.bf16.gmra.mrb[0].mxu0 %v3278
    %v3963 = vpop.f32.mrb[0].mxu0
    %v3964 = vadd.f32 %v3448, %v3963
    %v3965 = vpop.f32.mrb[0].mxu0
    %v3966 = vpop.f32.mrb[0].mxu0
    %v3967 = vpop.f32.mrb[0].mxu0
    %3968 = vdwg.mxu0
    %3969 = vmatprep.subr.bf16.mxu0 0
    %3970 = vmatpush1.bf16.msra.mxu0 %v3785
    %3971 = vmatprep.subr.bf16.mxu0 0
    %3972 = vmatpush1.bf16.msra.mxu0 %v3786
    %3973 = vmatprep.subr.bf16.mxu0 0
    %3974 = vmatpush1.bf16.msra.mxu0 %v3787
    %3975 = vmatprep.subr.bf16.mxu0 0
    %3976 = vmatpush1.bf16.msra.mxu0 %v3788
    %3977 = vmatprep.subr.bf16.mxu0 0
    %3978 = vmatpush1.bf16.msra.mxu0 %v3789
    %3979 = vmatprep.subr.bf16.mxu0 0
    %3980 = vmatpush1.bf16.msra.mxu0 %v3790
    %3981 = vmatprep.subr.bf16.mxu0 0
    %3982 = vmatpush1.bf16.msra.mxu0 %v3791
    %3983 = vmatprep.subr.bf16.mxu0 0
    %3984 = vmatpush1.bf16.msra.mxu0 %v3792
    %3985 = vmatprep.subr.bf16.mxu0 0
    %3986 = vmatpush1.bf16.msra.mxu0 %v3793
    %3987 = vmatprep.subr.bf16.mxu0 0
    %3988 = vmatpush1.bf16.msra.mxu0 %v3794
    %3989 = vmatprep.subr.bf16.mxu0 0
    %3990 = vmatpush1.bf16.msra.mxu0 %v3795
    %3991 = vmatprep.subr.bf16.mxu0 0
    %3992 = vmatpush1.bf16.msra.mxu0 %v3796
    %3993 = vmatprep.subr.bf16.mxu0 0
    %3994 = vmatpush1.bf16.msra.mxu0 %v3797
    %3995 = vmatprep.subr.bf16.mxu0 0
    %3996 = vmatpush1.bf16.msra.mxu0 %v3798
    %3997 = vmatprep.subr.bf16.mxu0 0
    %3998 = vmatpush1.bf16.msra.mxu0 %v3799
    %3999 = vmatprep.subr.bf16.mxu0 0
    %4000 = vmatpush1.bf16.msra.mxu0 %v3800
    %4001 = vmatprep.mubr.bf16.mxu0 %v3281
    %4002 = vmatmul.mubr.bf16.gmra.mrb[0].mxu0 %v3280
    %v4003 = vpop.f32.mrb[0].mxu0
    %v4004 = vadd.f32 %v3964, %v4003
    %v4005 = vpop.f32.mrb[0].mxu0
    %v4006 = vpop.f32.mrb[0].mxu0
    %v4007 = vpop.f32.mrb[0].mxu0
    %4008 = vdwg.mxu0
    %4009 = vmatprep.subr.bf16.mxu0 0
    %4010 = vmatpush1.bf16.msra.mxu0 %v3801
    %4011 = vmatprep.subr.bf16.mxu0 0
    %4012 = vmatpush1.bf16.msra.mxu0 %v3802
    %4013 = vmatprep.subr.bf16.mxu0 0
    %4014 = vmatpush1.bf16.msra.mxu0 %v3803
    %4015 = vmatprep.subr.bf16.mxu0 0
    %4016 = vmatpush1.bf16.msra.mxu0 %v3804
    %4017 = vmatprep.subr.bf16.mxu0 0
    %4018 = vmatpush1.bf16.msra.mxu0 %v3805
    %4019 = vmatprep.subr.bf16.mxu0 0
    %4020 = vmatpush1.bf16.msra.mxu0 %v3806
    %4021 = vmatprep.subr.bf16.mxu0 0
    %4022 = vmatpush1.bf16.msra.mxu0 %v3807
    %4023 = vmatprep.subr.bf16.mxu0 0
    %4024 = vmatpush1.bf16.msra.mxu0 %v3808
    %4025 = vmatprep.subr.bf16.mxu0 0
    %4026 = vmatpush1.bf16.msra.mxu0 %v3809
    %4027 = vmatprep.subr.bf16.mxu0 0
    %4028 = vmatpush1.bf16.msra.mxu0 %v3810
    %4029 = vmatprep.subr.bf16.mxu0 0
    %4030 = vmatpush1.bf16.msra.mxu0 %v3811
    %4031 = vmatprep.subr.bf16.mxu0 0
    %4032 = vmatpush1.bf16.msra.mxu0 %v3812
    %4033 = vmatprep.subr.bf16.mxu0 0
    %4034 = vmatpush1.bf16.msra.mxu0 %v3813
    %4035 = vmatprep.subr.bf16.mxu0 0
    %4036 = vmatpush1.bf16.msra.mxu0 %v3814
    %4037 = vmatprep.subr.bf16.mxu0 0
    %4038 = vmatpush1.bf16.msra.mxu0 %v3815
    %4039 = vmatprep.subr.bf16.mxu0 0
    %4040 = vmatpush1.bf16.msra.mxu0 %v3816
    %4041 = vmatprep.mubr.bf16.mxu0 %v3283
    %4042 = vmatmul.mubr.bf16.gmra.mrb[0].mxu0 %v3282
    %v4043 = vpop.f32.mrb[0].mxu0
    %v4044 = vadd.f32 %v4004, %v4043
    %v4045 = vpop.f32.mrb[0].mxu0
    %v4046 = vpop.f32.mrb[0].mxu0
    %v4047 = vpop.f32.mrb[0].mxu0
    %4048 = vdwg.mxu0
    %4049 = vmatprep.subr.bf16.mxu0 0
    %4050 = vmatpush1.bf16.msra.mxu0 %v3817
    %4051 = vmatprep.subr.bf16.mxu0 0
    %4052 = vmatpush1.bf16.msra.mxu0 %v3818
    %4053 = vmatprep.subr.bf16.mxu0 0
    %4054 = vmatpush1.bf16.msra.mxu0 %v3819
    %4055 = vmatprep.subr.bf16.mxu0 0
    %4056 = vmatpush1.bf16.msra.mxu0 %v3820
    %4057 = vmatprep.subr.bf16.mxu0 0
    %4058 = vmatpush1.bf16.msra.mxu0 %v3821
    %4059 = vmatprep.subr.bf16.mxu0 0
    %4060 = vmatpush1.bf16.msra.mxu0 %v3822
    %4061 = vmatprep.subr.bf16.mxu0 0
    %4062 = vmatpush1.bf16.msra.mxu0 %v3823
    %4063 = vmatprep.subr.bf16.mxu0 0
    %4064 = vmatpush1.bf16.msra.mxu0 %v3824
    %4065 = vmatprep.subr.bf16.mxu0 0
    %4066 = vmatpush1.bf16.msra.mxu0 %v3825
    %4067 = vmatprep.subr.bf16.mxu0 0
    %4068 = vmatpush1.bf16.msra.mxu0 %v3826
    %4069 = vmatprep.subr.bf16.mxu0 0
    %4070 = vmatpush1.bf16.msra.mxu0 %v3827
    %4071 = vmatprep.subr.bf16.mxu0 0
    %4072 = vmatpush1.bf16.msra.mxu0 %v3828
    %4073 = vmatprep.subr.bf16.mxu0 0
    %4074 = vmatpush1.bf16.msra.mxu0 %v3829
    %4075 = vmatprep.subr.bf16.mxu0 0
    %4076 = vmatpush1.bf16.msra.mxu0 %v3830
    %4077 = vmatprep.subr.bf16.mxu0 0
    %4078 = vmatpush1.bf16.msra.mxu0 %v3831
    %4079 = vmatprep.subr.bf16.mxu0 0
    %4080 = vmatpush1.bf16.msra.mxu0 %v3832
    %4081 = vmatprep.mubr.bf16.mxu0 %v3285
    %4082 = vmatmul.mubr.bf16.gmra.mrb[0].mxu0 %v3284
    %v4083 = vpop.f32.mrb[0].mxu0
    %v4084 = vadd.f32 %v4044, %v4083
    %v4085 = vpop.f32.mrb[0].mxu0
    %v4086 = vpop.f32.mrb[0].mxu0
    %v4087 = vpop.f32.mrb[0].mxu0
    %4088 = vdwg.mxu0
    %4089 = vmatprep.subr.bf16.mxu0 0
    %4090 = vmatpush1.bf16.msra.mxu0 %v3833
    %4091 = vmatprep.subr.bf16.mxu0 0
    %4092 = vmatpush1.bf16.msra.mxu0 %v3834
    %4093 = vmatprep.subr.bf16.mxu0 0
    %4094 = vmatpush1.bf16.msra.mxu0 %v3835
    %4095 = vmatprep.subr.bf16.mxu0 0
    %4096 = vmatpush1.bf16.msra.mxu0 %v3836
    %4097 = vmatprep.subr.bf16.mxu0 0
    %4098 = vmatpush1.bf16.msra.mxu0 %v3837
    %4099 = vmatprep.subr.bf16.mxu0 0
    %4100 = vmatpush1.bf16.msra.mxu0 %v3838
    %4101 = vmatprep.subr.bf16.mxu0 0
    %4102 = vmatpush1.bf16.msra.mxu0 %v3839
    %4103 = vmatprep.subr.bf16.mxu0 0
    %4104 = vmatpush1.bf16.msra.mxu0 %v3840
    %4105 = vmatprep.subr.bf16.mxu0 0
    %4106 = vmatpush1.bf16.msra.mxu0 %v3841
    %4107 = vmatprep.subr.bf16.mxu0 0
    %4108 = vmatpush1.bf16.msra.mxu0 %v3842
    %4109 = vmatprep.subr.bf16.mxu0 0
    %4110 = vmatpush1.bf16.msra.mxu0 %v3843
    %4111 = vmatprep.subr.bf16.mxu0 0
    %4112 = vmatpush1.bf16.msra.mxu0 %v3844
    %4113 = vmatprep.subr.bf16.mxu0 0
    %4114 = vmatpush1.bf16.msra.mxu0 %v3845
    %4115 = vmatprep.subr.bf16.mxu0 0
    %4116 = vmatpush1.bf16.msra.mxu0 %v3846
    %4117 = vmatprep.subr.bf16.mxu0 0
    %4118 = vmatpush1.bf16.msra.mxu0 %v3847
    %4119 = vmatprep.subr.bf16.mxu0 0
    %4120 = vmatpush1.bf16.msra.mxu0 %v3848
    %4121 = vmatprep.mubr.bf16.mxu0 %v3287
    %4122 = vmatmul.mubr.bf16.gmra.mrb[0].mxu0 %v3286
    %v4123 = vpop.f32.mrb[0].mxu0
    %v4124 = vadd.f32 %v4084, %v4123
    %v4125 = vpop.f32.mrb[0].mxu0
    %v4126 = vpop.f32.mrb[0].mxu0
    %v4127 = vpop.f32.mrb[0].mxu0
    %4128 = vdwg.mxu0
    %v4129 = vld [vmem:[%s12] sm:$0xff]
    %v4130 = vld [vmem:[%s12 + $0x8] sm:$0xf]
    %vm4131 = vcmp.gt.f32.partialorder %v4129, 0.0
    %vm4132 = vcmp.gt.f32.partialorder %v4130, 0.0
    %v4133 = vlaneseq
    %v4134 = vshrl.u32 %v4133, 7
    %v4135 = vsub.s32 0, %v4134
    %v4136 = vrot.slane %v4124, %v4135
    %v4137 = vsel %vm4131, %v4136, -1e+30
    %v4138 = vsel %vm4132, %v4136, -1e+30
    %vm4139 = vcmask 97280
    %v4140 = vsel %vm4139, %v4137, -inf
    %4141 = vmax.xlane.f32.xlu0 %v4140
    %v4142 = vpop.xlane.xlu0 %4141
    %vm4143 = vcmask 93184
    %v4144 = vsel %vm4143, %v4138, -inf
    %4145 = vmax.xlane.f32.xlu0 %v4144
    %v4146 = vpop.xlane.xlu0 %4145
    %v4147 = vsub.f32 %v4137, %v4142
    %v4148 = vsub.f32 %v4138, %v4146
    %v4149 = vmul.f32 %v4147, 1.442695
    %v4150 = vpow.pop %v4149
    %v4151 = vmul.f32 %v4148, 1.442695
    %v4152 = vpow.pop %v4151
    %v4153 = vsel %vm4139, %v4150, 0.0
    %4154 = vadd.xlane.f32.xlu0 %v4153
    %v4155 = vpop.xlane.xlu0 %4154
    %v4156 = vsel %vm4143, %v4152, 0.0
    %4157 = vadd.xlane.f32.xlu0 %v4156
    %v4158 = vpop.xlane.xlu0 %4157
    %v4159 = vrcp.pop %v4155
    %v4160 = vrcp.pop %v4158
    %v4161 = vld [vmem:[%s14] sm:$0xff]
    %v4162 = vld [vmem:[%s14 + $0x8] sm:$0xf]
    %v4163 = vmul.f32 %v4150, %v4161
    %v4164 = vmul.f32 %v4152, %v4162
    %v4165 = vsel %vm4139, %v4163, 0.0
    %4166 = vadd.xlane.f32.xlu0 %v4165
    %v4167 = vpop.xlane.xlu0 %4166
    %v4168 = vsel %vm4143, %v4164, 0.0
    %4169 = vadd.xlane.f32.xlu0 %v4168
    %v4170 = vpop.xlane.xlu0 %4169
    %v4171 = vmul.f32 %v4167, %v4159
    %v4172 = vmul.f32 %v4170, %v4160
    %vm4173 = vcmask 7168
    %4174 = vst.msk [vmem:[%s16] sm:$0xff] %vm4173, %v4171
    %vm4175 = vcmask 3072
    %4176 = vst.msk [vmem:[%s16 + $0x8] sm:$0xf] %vm4175, %v4172
    %v4177 = vld [vmem:[%s13] sm:$0xff]
    %v4178 = vld [vmem:[%s13 + $0x8] sm:$0xf]
    %v4179 = vmul.f32 %v4150, %v4177
    %v4180 = vmul.f32 %v4152, %v4178
    %v4181 = vsel %vm4139, %v4179, 0.0
    %4182 = vadd.xlane.f32.xlu0 %v4181
    %v4183 = vpop.xlane.xlu0 %4182
    %v4184 = vsel %vm4143, %v4180, 0.0
    %4185 = vadd.xlane.f32.xlu0 %v4184
    %v4186 = vpop.xlane.xlu0 %4185
    %v4187 = vmul.f32 %v4183, %v4159
    %v4188 = vmul.f32 %v4186, %v4160
    %v4189 = vld [vmem:[%s1] sm:$0xff]
    %v4190 = vld [vmem:[%s1 + $0x8] sm:$0xf]
    %vm4191 = vcmp.le.f32.partialorder %v4187, %v4189
    %vm4192 = vcmp.le.f32.partialorder %v4188, %v4190
    %v4193 = vsel %vm4191, 1, 0
    %v4194 = vsel %vm4192, 1, 0
    %v4195 = vcvt.s32.f32 %v4193
    %v4196 = vcvt.s32.f32 %v4194
    %4198 = vset.pattern.permute.xlu0 0
    %4199 = vperm.xlu0 %4198, %v4195
    %v4200 = vpop.permute.xlu0 %4199
    %4203 = vset.pattern.permute.xlu0 0
    %4204 = vperm.xlu0 %4203, %v4196
    %v4205 = vpop.permute.xlu0 %4204
    %v4207 = vmul.f32 %v4129, %v4200
    %v4208 = vmul.f32 %v4130, %v4205
    %v4209 = vsel %vm4139, %v4207, 0.0
    %v4210 = vsel %vm4143, %v4208, 0.0
    %v4211 = vadd.f32 %v4209, %v4210
    %v4212 = vrot.slane %v4211, 4
    %v4213 = vadd.f32 %v4211, %v4212
    %v4214 = vrot.slane %v4213, 2
    %v4215 = vadd.f32 %v4213, %v4214
    %v4216 = vrot.slane %v4215, 1
    %v4217 = vadd.f32 %v4215, %v4216
    %v4218 = vmin.f32 %v4217, 3.0
    %v4219 = vcvt.f32.s32.to.zero.pseudo %v4218
    %vm4220 = vcmask 90112
    %4221 = vst.msk [vmem:[%s15] sm:$0x1] %vm4220, %v4219
    // Predicated region
    $region82: #{actor_forward.1} parent=1 // pred_check
      _
    $region83: #{actor_forward.1} parent=1 // pred_check_branch
      %4223 = sbr.rel (0) target = $region85
    $region84: #{actor_forward.1} parent=1 // pred_region
      _
    $region85: #{actor_forward.1} parent=1 // pred_fallthru
      _
    // Predicated region
    $region86: #{actor_forward.1} parent=1 // pred_check
      _
    $region87: #{actor_forward.1} parent=1 // pred_check_branch
      %4225 = sbr.rel (0) target = $region89
    $region88: #{actor_forward.1} parent=1 // pred_region
      _
    $region89: #{actor_forward.1} parent=1 // pred_fallthru
      _
    // Predicated region
    $region90: #{actor_forward.1} parent=1 // pred_check
      _
    $region91: #{actor_forward.1} parent=1 // pred_check_branch
      %4227 = sbr.rel (0) target = $region93
    $region92: #{actor_forward.1} parent=1 // pred_region
      _
    $region93: #{actor_forward.1} parent=1 // pred_fallthru
      _
    // Predicated region
    $region94: #{actor_forward.1} parent=1 // pred_check
      _
    $region95: #{actor_forward.1} parent=1 // pred_check_branch
      %4229 = sbr.rel (0) target = $region97
    $region96: #{actor_forward.1} parent=1 // pred_region
      _
    $region97: #{actor_forward.1} parent=1 // pred_fallthru
      _
    %4230 = vsyncpa [#allocation3], 1
    %4231 = vsyncpa [#allocation5], 1
    %4232 = vsyncpa [#allocation8], 1

</llo_original>
